<compile_context>
chip_gen: v6e
topology: v6e:2x2x1
jax: 0.10.0
libtpu: 0.0.40
codegen_flags: <defaults>
</compile_context>

<pallas_src>
import jax
import jax.numpy as jnp
from jax import lax
from jax.experimental import pallas as pl
from jax.experimental.pallas import tpu as pltpu


def _silu_bf16(h_f32):
    # Bias-added activation arrives in f32; do a single cast to bf16 and keep
    # SiLU (sigmoid -> EUP, multiply -> VPU) in bf16.  The bf16 result feeds
    # the next MXU matmul directly (no extra per-layer cast).
    hb = h_f32.astype(jnp.bfloat16)
    return hb * jax.nn.sigmoid(hb)


def mhp_kernel(x_ref,
               w0, b0, w1, b1, w2, b2, w3, b3, w4, b4, w5t, b5t,
               o_ref):
    # Layer 0: (TB, 11) f32 @ (11, 256) f32 -> f32.  K=11 is tiny, so f32 on
    # the MXU is essentially free and avoids any wrapper-side pad/cast of x.
    h = jnp.dot(x_ref[...], w0[...], preferred_element_type=jnp.float32)
    hb = _silu_bf16(h + b0[...])

    # Hidden layers 1..4: bf16 x bf16 on the MXU, f32 accumulate, f32 bias.
    for w, b in ((w1, b1), (w2, b2), (w3, b3), (w4, b4)):
        h = jnp.dot(hb, w[...], preferred_element_type=jnp.float32)
        hb = _silu_bf16(h + b[...])

    # Output layer, transposed so the result is lane-dense in the batch dim:
    # out_t[o, m] = sum_k w5t[o, k] * hb[m, k]  ->  (out_pad8, TB).
    out_t = lax.dot_general(
        w5t[...], hb,
        dimension_numbers=(((1,), (1,)), ((), ())),
        preferred_element_type=jnp.float32)
    o_ref[...] = (out_t + b5t[...]).astype(o_ref.dtype)


def _auto_batch_tile(batch, max_batch_tile):
    """Pick a batch tile: multiple of 256, <= max_batch_tile, and (when the
    batch is large enough) small enough to give >=2 grid steps (v7x cores)."""
    n256 = max(1, -(-batch // 256))
    if n256 >= 2:
        chunks = min(max(1, max_batch_tile // 256), max(1, n256 // 2))
    else:
        chunks = 1
    return 256 * chunks


def mhp_forward(x, weights, biases, *, max_batch_tile=2048):
    """x: (B, input_dim) f32; weights[i]: (in_i, out_i); biases[i]: (1, out_i)."""
    B, in_dim = x.shape
    out_dim = weights[-1].shape[1]
    out_pad = 8 * (-(-out_dim // 8))          # pad out_dim only to a sublane (8)

    tile = _auto_batch_tile(B, max_batch_tile)
    num_tiles = -(-B // tile)
    b_pad = num_tiles * tile

    # Only the (small) batch remainder is padded; no feature pad, no cast.
    xp = x if b_pad == B else jnp.pad(x, ((0, b_pad - B), (0, 0)))
    xp = xp.astype(jnp.float32)

    # Parameters: layer 0 stays f32 (K=11); hidden weights bf16; biases f32.
    # Final layer is pre-transposed and padded to (out_pad, hidden).
    params = [weights[0].astype(jnp.float32), biases[0].astype(jnp.float32)]
    for w, b in zip(weights[1:-1], biases[1:-1]):
        params.append(w.astype(jnp.bfloat16))
        params.append(b.astype(jnp.float32))
    w5t = jnp.pad(weights[-1].T,
                  ((0, out_pad - out_dim), (0, 0))).astype(jnp.bfloat16)
    b5t = jnp.pad(biases[-1].T,
                  ((0, out_pad - out_dim), (0, 0))).astype(jnp.float32)
    params += [w5t, b5t]

    x_spec = pl.BlockSpec((tile, in_dim), lambda i: (i, 0))
    param_specs = [pl.BlockSpec(p.shape, lambda i: (0, 0)) for p in params]
    out_spec = pl.BlockSpec((out_pad, tile), lambda i: (0, i))

    out_t = pl.pallas_call(
        mhp_kernel,
        out_shape=jax.ShapeDtypeStruct((out_pad, b_pad), jnp.float32),
        grid=(num_tiles,),
        in_specs=[x_spec] + param_specs,
        out_specs=out_spec,
        compiler_params=pltpu.CompilerParams(
            dimension_semantics=("parallel",)),
    )(xp, *params)

    # (out_pad, b_pad) -> (B, out_dim); for out_dim=1 the transpose is trivial.
    return out_t[:out_dim, :B].T


def init_mhp_params(key, input_dim=11, hidden_dim=256, output_dim=1,
                    num_hidden_layers=5, dtype=jnp.float32):
    """Deterministic synthetic init; weights stored as (in, out)."""
    dims = [(input_dim, hidden_dim)]
    dims += [(hidden_dim, hidden_dim)] * (num_hidden_layers - 1)
    dims += [(hidden_dim, output_dim)]
    weights, biases = [], []
    for (fan_in, fan_out) in dims:
        key, kw, kb = jax.random.split(key, 3)
        scale = 1.0 / jnp.sqrt(jnp.asarray(fan_in, dtype))
        w = jax.random.uniform(kw, (fan_in, fan_out), dtype,
                               minval=-scale, maxval=scale)
        b = jax.random.uniform(kb, (1, fan_out), dtype,
                               minval=-scale, maxval=scale)
        weights.append(w)
        biases.append(b)
    return weights, biases


def mhp_reference(x, weights, biases):
    h = x
    for i, (w, b) in enumerate(zip(weights, biases)):
        h = h @ w + b
        if i < len(weights) - 1:
            h = h * jax.nn.sigmoid(h)
    return h


if __name__ == "__main__":
    key = jax.random.PRNGKey(0)
    key, kx, kx2 = jax.random.split(key, 3)

    # Shapes consistent with the module: input_dim=11, hidden=256, out=1.
    B, INPUT_DIM, HIDDEN_DIM, OUTPUT_DIM, N_HIDDEN = 16, 11, 256, 1, 5

    weights, biases = init_mhp_params(
        key, input_dim=INPUT_DIM, hidden_dim=HIDDEN_DIM,
        output_dim=OUTPUT_DIM, num_hidden_layers=N_HIDDEN)

    # Test 1: small batch (padded up to one 256-row tile).
    x = jax.random.normal(kx, (B, INPUT_DIM), dtype=jnp.float32)
    out = jax.block_until_ready(mhp_forward(x, weights, biases))
    ref = mhp_reference(x, weights, biases)
    assert out.shape == (B, OUTPUT_DIM)
    # bf16 activations / bf16 MXU (f32 accumulate) vs pure-f32 reference.
    assert jnp.allclose(out, ref, atol=5e-2, rtol=5e-2), (
        "mismatch vs reference: max abs err "
        f"{float(jnp.max(jnp.abs(out - ref)))}")

    # Test 2: batch not a multiple of the tile -> padding + multiple grid steps.
    B2 = 600
    x2 = jax.random.normal(kx2, (B2, INPUT_DIM), dtype=jnp.float32)
    out2 = jax.block_until_ready(mhp_forward(x2, weights, biases))
    ref2 = mhp_reference(x2, weights, biases)
    assert out2.shape == (B2, OUTPUT_DIM)
    assert jnp.allclose(out2, ref2, atol=5e-2, rtol=5e-2), (
        "mismatch vs reference (B=600): max abs err "
        f"{float(jnp.max(jnp.abs(out2 - ref2)))}")

    print("KERNEL_OK")
</pallas_src>

<mosaic_0001>
module attributes {stable_mosaic.version = 11 : i64} {
  func.func @mhp_kernel(%arg0: i32, %arg1: memref<256x11xf32, #tpu.memory_space<vmem>>, %arg2: memref<11x256xf32, #tpu.memory_space<vmem>>, %arg3: memref<1x256xf32, #tpu.memory_space<vmem>>, %arg4: memref<256x256xbf16, #tpu.memory_space<vmem>>, %arg5: memref<1x256xf32, #tpu.memory_space<vmem>>, %arg6: memref<256x256xbf16, #tpu.memory_space<vmem>>, %arg7: memref<1x256xf32, #tpu.memory_space<vmem>>, %arg8: memref<256x256xbf16, #tpu.memory_space<vmem>>, %arg9: memref<1x256xf32, #tpu.memory_space<vmem>>, %arg10: memref<256x256xbf16, #tpu.memory_space<vmem>>, %arg11: memref<1x256xf32, #tpu.memory_space<vmem>>, %arg12: memref<8x256xbf16, #tpu.memory_space<vmem>>, %arg13: memref<8x1xf32, #tpu.memory_space<vmem>>, %arg14: memref<8x256xf32, #tpu.memory_space<vmem>>) attributes {dimension_semantics = [#tpu.dimension_semantics<parallel>], iteration_bounds = array<i64: 1>, scalar_prefetch = 0 : i64, scratch_operands = 0 : i64, tpu.core_type = #tpu.core_type<tc>, window_params = [{transform_indices = @transform_0, window_bounds = array<i64: 256, 11>}, {pipeline_mode = #tpu.pipeline_mode<synchronous>, transform_indices = @transform_1, window_bounds = array<i64: 11, 256>}, {pipeline_mode = #tpu.pipeline_mode<synchronous>, transform_indices = @transform_2, window_bounds = array<i64: 1, 256>}, {pipeline_mode = #tpu.pipeline_mode<synchronous>, transform_indices = @transform_3, window_bounds = array<i64: 256, 256>}, {pipeline_mode = #tpu.pipeline_mode<synchronous>, transform_indices = @transform_4, window_bounds = array<i64: 1, 256>}, {pipeline_mode = #tpu.pipeline_mode<synchronous>, transform_indices = @transform_5, window_bounds = array<i64: 256, 256>}, {pipeline_mode = #tpu.pipeline_mode<synchronous>, transform_indices = @transform_6, window_bounds = array<i64: 1, 256>}, {pipeline_mode = #tpu.pipeline_mode<synchronous>, transform_indices = @transform_7, window_bounds = array<i64: 256, 256>}, {pipeline_mode = #tpu.pipeline_mode<synchronous>, transform_indices = @transform_8, window_bounds = array<i64: 1, 256>}, {pipeline_mode = #tpu.pipeline_mode<synchronous>, transform_indices = @transform_9, window_bounds = array<i64: 256, 256>}, {pipeline_mode = #tpu.pipeline_mode<synchronous>, transform_indices = @transform_10, window_bounds = array<i64: 1, 256>}, {pipeline_mode = #tpu.pipeline_mode<synchronous>, transform_indices = @transform_11, window_bounds = array<i64: 8, 256>}, {pipeline_mode = #tpu.pipeline_mode<synchronous>, transform_indices = @transform_12, window_bounds = array<i64: 8, 1>}, {transform_indices = @transform_13, window_bounds = array<i64: 8, 256>}]} {
    %c0 = arith.constant 0 : index
    %c0_0 = arith.constant 0 : index
    %0 = vector.load %arg1[%c0, %c0_0] : memref<256x11xf32, #tpu.memory_space<vmem>>, vector<256x11xf32>
    %c0_1 = arith.constant 0 : index
    %c0_2 = arith.constant 0 : index
    %1 = vector.load %arg2[%c0_1, %c0_2] : memref<11x256xf32, #tpu.memory_space<vmem>>, vector<11x256xf32>
    %cst = arith.constant dense<0.000000e+00> : vector<256x256xf32>
    %2 = tpu.matmul %0, %1, %cst {dimension_numbers = #tpu.dot_dimension_numbers<[1], [0], [0], [1], [0, 0, 1, 1], [], []>} : vector<256x11xf32>, vector<11x256xf32>, vector<256x256xf32> -> vector<256x256xf32>
    %c0_3 = arith.constant 0 : index
    %c0_4 = arith.constant 0 : index
    %3 = vector.load %arg3[%c0_3, %c0_4] : memref<1x256xf32, #tpu.memory_space<vmem>>, vector<1x256xf32>
    %4 = vector.broadcast %3 : vector<1x256xf32> to vector<256x256xf32>
    %5 = arith.addf %2, %4 : vector<256x256xf32>
    %6 = arith.truncf %5 : vector<256x256xf32> to vector<256x256xbf16>
    %7 = arith.negf %6 : vector<256x256xbf16>
    %8 = math.exp %7 : vector<256x256xbf16>
    %cst_5 = arith.constant 1.000000e+00 : bf16
    %9 = vector.broadcast %cst_5 : bf16 to vector<256x256xbf16>
    %10 = arith.addf %9, %8 : vector<256x256xbf16>
    %11 = arith.divf %9, %10 : vector<256x256xbf16>
    %12 = arith.mulf %6, %11 : vector<256x256xbf16>
    %c0_6 = arith.constant 0 : index
    %c0_7 = arith.constant 0 : index
    %13 = vector.load %arg4[%c0_6, %c0_7] : memref<256x256xbf16, #tpu.memory_space<vmem>>, vector<256x256xbf16>
    %cst_8 = arith.constant dense<0.000000e+00> : vector<256x256xf32>
    %14 = tpu.matmul %12, %13, %cst_8 {dimension_numbers = #tpu.dot_dimension_numbers<[1], [0], [0], [1], [0, 0, 1, 1], [], []>} : vector<256x256xbf16>, vector<256x256xbf16>, vector<256x256xf32> -> vector<256x256xf32>
    %c0_9 = arith.constant 0 : index
    %c0_10 = arith.constant 0 : index
    %15 = vector.load %arg5[%c0_9, %c0_10] : memref<1x256xf32, #tpu.memory_space<vmem>>, vector<1x256xf32>
    %16 = vector.broadcast %15 : vector<1x256xf32> to vector<256x256xf32>
    %17 = arith.addf %14, %16 : vector<256x256xf32>
    %18 = arith.truncf %17 : vector<256x256xf32> to vector<256x256xbf16>
    %19 = arith.negf %18 : vector<256x256xbf16>
    %20 = math.exp %19 : vector<256x256xbf16>
    %cst_11 = arith.constant 1.000000e+00 : bf16
    %21 = vector.broadcast %cst_11 : bf16 to vector<256x256xbf16>
    %22 = arith.addf %21, %20 : vector<256x256xbf16>
    %23 = arith.divf %21, %22 : vector<256x256xbf16>
    %24 = arith.mulf %18, %23 : vector<256x256xbf16>
    %c0_12 = arith.constant 0 : index
    %c0_13 = arith.constant 0 : index
    %25 = vector.load %arg6[%c0_12, %c0_13] : memref<256x256xbf16, #tpu.memory_space<vmem>>, vector<256x256xbf16>
    %cst_14 = arith.constant dense<0.000000e+00> : vector<256x256xf32>
    %26 = tpu.matmul %24, %25, %cst_14 {dimension_numbers = #tpu.dot_dimension_numbers<[1], [0], [0], [1], [0, 0, 1, 1], [], []>} : vector<256x256xbf16>, vector<256x256xbf16>, vector<256x256xf32> -> vector<256x256xf32>
    %c0_15 = arith.constant 0 : index
    %c0_16 = arith.constant 0 : index
    %27 = vector.load %arg7[%c0_15, %c0_16] : memref<1x256xf32, #tpu.memory_space<vmem>>, vector<1x256xf32>
    %28 = vector.broadcast %27 : vector<1x256xf32> to vector<256x256xf32>
    %29 = arith.addf %26, %28 : vector<256x256xf32>
    %30 = arith.truncf %29 : vector<256x256xf32> to vector<256x256xbf16>
    %31 = arith.negf %30 : vector<256x256xbf16>
    %32 = math.exp %31 : vector<256x256xbf16>
    %cst_17 = arith.constant 1.000000e+00 : bf16
    %33 = vector.broadcast %cst_17 : bf16 to vector<256x256xbf16>
    %34 = arith.addf %33, %32 : vector<256x256xbf16>
    %35 = arith.divf %33, %34 : vector<256x256xbf16>
    %36 = arith.mulf %30, %35 : vector<256x256xbf16>
    %c0_18 = arith.constant 0 : index
    %c0_19 = arith.constant 0 : index
    %37 = vector.load %arg8[%c0_18, %c0_19] : memref<256x256xbf16, #tpu.memory_space<vmem>>, vector<256x256xbf16>
    %cst_20 = arith.constant dense<0.000000e+00> : vector<256x256xf32>
    %38 = tpu.matmul %36, %37, %cst_20 {dimension_numbers = #tpu.dot_dimension_numbers<[1], [0], [0], [1], [0, 0, 1, 1], [], []>} : vector<256x256xbf16>, vector<256x256xbf16>, vector<256x256xf32> -> vector<256x256xf32>
    %c0_21 = arith.constant 0 : index
    %c0_22 = arith.constant 0 : index
    %39 = vector.load %arg9[%c0_21, %c0_22] : memref<1x256xf32, #tpu.memory_space<vmem>>, vector<1x256xf32>
    %40 = vector.broadcast %39 : vector<1x256xf32> to vector<256x256xf32>
    %41 = arith.addf %38, %40 : vector<256x256xf32>
    %42 = arith.truncf %41 : vector<256x256xf32> to vector<256x256xbf16>
    %43 = arith.negf %42 : vector<256x256xbf16>
    %44 = math.exp %43 : vector<256x256xbf16>
    %cst_23 = arith.constant 1.000000e+00 : bf16
    %45 = vector.broadcast %cst_23 : bf16 to vector<256x256xbf16>
    %46 = arith.addf %45, %44 : vector<256x256xbf16>
    %47 = arith.divf %45, %46 : vector<256x256xbf16>
    %48 = arith.mulf %42, %47 : vector<256x256xbf16>
    %c0_24 = arith.constant 0 : index
    %c0_25 = arith.constant 0 : index
    %49 = vector.load %arg10[%c0_24, %c0_25] : memref<256x256xbf16, #tpu.memory_space<vmem>>, vector<256x256xbf16>
    %cst_26 = arith.constant dense<0.000000e+00> : vector<256x256xf32>
    %50 = tpu.matmul %48, %49, %cst_26 {dimension_numbers = #tpu.dot_dimension_numbers<[1], [0], [0], [1], [0, 0, 1, 1], [], []>} : vector<256x256xbf16>, vector<256x256xbf16>, vector<256x256xf32> -> vector<256x256xf32>
    %c0_27 = arith.constant 0 : index
    %c0_28 = arith.constant 0 : index
    %51 = vector.load %arg11[%c0_27, %c0_28] : memref<1x256xf32, #tpu.memory_space<vmem>>, vector<1x256xf32>
    %52 = vector.broadcast %51 : vector<1x256xf32> to vector<256x256xf32>
    %53 = arith.addf %50, %52 : vector<256x256xf32>
    %54 = arith.truncf %53 : vector<256x256xf32> to vector<256x256xbf16>
    %55 = arith.negf %54 : vector<256x256xbf16>
    %56 = math.exp %55 : vector<256x256xbf16>
    %cst_29 = arith.constant 1.000000e+00 : bf16
    %57 = vector.broadcast %cst_29 : bf16 to vector<256x256xbf16>
    %58 = arith.addf %57, %56 : vector<256x256xbf16>
    %59 = arith.divf %57, %58 : vector<256x256xbf16>
    %60 = arith.mulf %54, %59 : vector<256x256xbf16>
    %c0_30 = arith.constant 0 : index
    %c0_31 = arith.constant 0 : index
    %61 = vector.load %arg12[%c0_30, %c0_31] : memref<8x256xbf16, #tpu.memory_space<vmem>>, vector<8x256xbf16>
    %cst_32 = arith.constant dense<0.000000e+00> : vector<8x256xf32>
    %62 = tpu.matmul %61, %60, %cst_32 {dimension_numbers = #tpu.dot_dimension_numbers<[1], [1], [0], [0], [0, 0, 1, 0], [], []>} : vector<8x256xbf16>, vector<256x256xbf16>, vector<8x256xf32> -> vector<8x256xf32>
    %c0_33 = arith.constant 0 : index
    %c0_34 = arith.constant 0 : index
    %63 = vector.load %arg13[%c0_33, %c0_34] : memref<8x1xf32, #tpu.memory_space<vmem>>, vector<8x1xf32>
    %64 = vector.broadcast %63 : vector<8x1xf32> to vector<8x256xf32>
    %65 = arith.addf %62, %64 : vector<8x256xf32>
    %c0_35 = arith.constant 0 : index
    %c0_36 = arith.constant 0 : index
    %66 = vector.load %arg14[%c0_35, %c0_36] : memref<8x256xf32, #tpu.memory_space<vmem>>, vector<8x256xf32>
    tpu.vector_store %arg14[%c0_35, %c0_36], %65 {strides = array<i32>} : memref<8x256xf32, #tpu.memory_space<vmem>>, vector<8x256xf32>,
    return
  }
  func.func @transform_0(%arg0: i32) -> (i32, i32) {
    %c0_i32 = arith.constant 0 : i32
    %c0_i32_0 = arith.constant 0 : i32
    return %arg0, %c0_i32 : i32, i32
  }
  func.func @transform_1(%arg0: i32) -> (i32, i32) {
    %c0_i32 = arith.constant 0 : i32
    %c0_i32_0 = arith.constant 0 : i32
    %c0_i32_1 = arith.constant 0 : i32
    return %c0_i32, %c0_i32_0 : i32, i32
  }
  func.func @transform_2(%arg0: i32) -> (i32, i32) {
    %c0_i32 = arith.constant 0 : i32
    %c0_i32_0 = arith.constant 0 : i32
    %c0_i32_1 = arith.constant 0 : i32
    return %c0_i32, %c0_i32_0 : i32, i32
  }
  func.func @transform_3(%arg0: i32) -> (i32, i32) {
    %c0_i32 = arith.constant 0 : i32
    %c0_i32_0 = arith.constant 0 : i32
    %c0_i32_1 = arith.constant 0 : i32
    return %c0_i32, %c0_i32_0 : i32, i32
  }
  func.func @transform_4(%arg0: i32) -> (i32, i32) {
    %c0_i32 = arith.constant 0 : i32
    %c0_i32_0 = arith.constant 0 : i32
    %c0_i32_1 = arith.constant 0 : i32
    return %c0_i32, %c0_i32_0 : i32, i32
  }
  func.func @transform_5(%arg0: i32) -> (i32, i32) {
    %c0_i32 = arith.constant 0 : i32
    %c0_i32_0 = arith.constant 0 : i32
    %c0_i32_1 = arith.constant 0 : i32
    return %c0_i32, %c0_i32_0 : i32, i32
  }
  func.func @transform_6(%arg0: i32) -> (i32, i32) {
    %c0_i32 = arith.constant 0 : i32
    %c0_i32_0 = arith.constant 0 : i32
    %c0_i32_1 = arith.constant 0 : i32
    return %c0_i32, %c0_i32_0 : i32, i32
  }
  func.func @transform_7(%arg0: i32) -> (i32, i32) {
    %c0_i32 = arith.constant 0 : i32
    %c0_i32_0 = arith.constant 0 : i32
    %c0_i32_1 = arith.constant 0 : i32
    return %c0_i32, %c0_i32_0 : i32, i32
  }
  func.func @transform_8(%arg0: i32) -> (i32, i32) {
    %c0_i32 = arith.constant 0 : i32
    %c0_i32_0 = arith.constant 0 : i32
    %c0_i32_1 = arith.constant 0 : i32
    return %c0_i32, %c0_i32_0 : i32, i32
  }
  func.func @transform_9(%arg0: i32) -> (i32, i32) {
    %c0_i32 = arith.constant 0 : i32
    %c0_i32_0 = arith.constant 0 : i32
    %c0_i32_1 = arith.constant 0 : i32
    return %c0_i32, %c0_i32_0 : i32, i32
  }
  func.func @transform_10(%arg0: i32) -> (i32, i32) {
    %c0_i32 = arith.constant 0 : i32
    %c0_i32_0 = arith.constant 0 : i32
    %c0_i32_1 = arith.constant 0 : i32
    return %c0_i32, %c0_i32_0 : i32, i32
  }
  func.func @transform_11(%arg0: i32) -> (i32, i32) {
    %c0_i32 = arith.constant 0 : i32
    %c0_i32_0 = arith.constant 0 : i32
    %c0_i32_1 = arith.constant 0 : i32
    return %c0_i32, %c0_i32_0 : i32, i32
  }
  func.func @transform_12(%arg0: i32) -> (i32, i32) {
    %c0_i32 = arith.constant 0 : i32
    %c0_i32_0 = arith.constant 0 : i32
    %c0_i32_1 = arith.constant 0 : i32
    return %c0_i32, %c0_i32_0 : i32, i32
  }
  func.func @transform_13(%arg0: i32) -> (i32, i32) {
    %c0_i32 = arith.constant 0 : i32
    %c0_i32_0 = arith.constant 0 : i32
    return %c0_i32, %arg0 : i32, i32
  }
}

</mosaic_0001>

<llo_original>
// kernel: tpu_custom_call.1
$region0: #{tpu_custom_call.1}
  #allocation0 [shape = 'u32[]', space=smem, size = 0x4, offset = 0x4, fixed_abs, tag = 'smem constant byte address 0x4 - core index']
  #allocation1 [shape = 'u32[144,128]{1,0:T(1,128)}', space=vmem, size = 0x12000, scoped, tag = 'internal scratch']
  %s0 = inlined_call_operand.vmem [shape: f32[256,11], index: 0, kind: input, shape index: {}]
  %s1 = inlined_call_operand.vmem [shape: f32[11,256], index: 1, kind: input, shape index: {}]
  %s2 = inlined_call_operand.vmem [shape: f32[1,256], index: 2, kind: input, shape index: {}]
  %s3 = inlined_call_operand.vmem [shape: bf16[256,256], index: 3, kind: input, shape index: {}]
  %s4 = inlined_call_operand.vmem [shape: f32[1,256], index: 4, kind: input, shape index: {}]
  %s5 = inlined_call_operand.hbm [shape: bf16[256,256], index: 5, kind: input, shape index: {}]
  %s6 = inlined_call_operand.vmem [shape: f32[1,256], index: 6, kind: input, shape index: {}]
  %s7 = inlined_call_operand.hbm [shape: bf16[256,256], index: 7, kind: input, shape index: {}]
  %s8 = inlined_call_operand.vmem [shape: f32[1,256], index: 8, kind: input, shape index: {}]
  %s9 = inlined_call_operand.hbm [shape: bf16[256,256], index: 9, kind: input, shape index: {}]
  %s10 = inlined_call_operand.vmem [shape: f32[1,256], index: 10, kind: input, shape index: {}]
  %s11 = inlined_call_operand.vmem [shape: bf16[8,256], index: 11, kind: input, shape index: {}]
  %s12 = inlined_call_operand.vmem [shape: f32[8,1], index: 12, kind: input, shape index: {}]
  %s13 = inlined_call_operand.hbm [shape: f32[8,256], index: 13, kind: output, shape index: {}]
  %s14 = sld [smem:[#allocation0]]
  $region74: #{tpu_custom_call.1} parent=0
    _
  %s16 = ssub.s32 1, %s14
  %s17 = scalar_select 0, %s16, %s14
  $region1: #{tpu_custom_call.1} parent=0
    #allocation2 [shape = 'u8[131072]{0}', space=vmem, size = 0x20000, scoped, tag = 'input window, operand 5, single buffered']
    #allocation3 [shape = 's32[1]{0}', space=sflag, size = 0x4, scoped, tag = 'scoped memory for tpu_custom_call.1']
    #allocation4 [shape = 's32[1]{0}', space=sflag, size = 0x4, scoped, tag = 'scoped memory for tpu_custom_call.1']
    #allocation5 [shape = 'u8[131072]{0}', space=vmem, size = 0x20000, scoped, tag = 'input window, operand 7, single buffered']
    #allocation6 [shape = 's32[1]{0}', space=sflag, size = 0x4, scoped, tag = 'scoped memory for tpu_custom_call.1']
    #allocation7 [shape = 'u8[131072]{0}', space=vmem, size = 0x20000, scoped, tag = 'input window, operand 9, single buffered']
    #allocation8 [shape = 'u8[8192]{0}', space=vmem, size = 0x2000, scoped, tag = 'output window, operand 0, single buffered']
    %18 = vsyncpa [#allocation3], 0
    %19 = vsyncpa [#allocation6], 0
    %20 = vsyncpa [#allocation4], 0
    // Predicated region
    $region2: #{tpu_custom_call.1} parent=1 // pred_check
      _
    $region3: #{tpu_custom_call.1} parent=1 // pred_check_branch
      %22 = sbr.rel (0) target = $region5
    $region4: #{tpu_custom_call.1} parent=1 // pred_region
      _
    $region5: #{tpu_custom_call.1} parent=1 // pred_fallthru
      _
    // Predicated region
    $region6: #{tpu_custom_call.1} parent=1 // pred_check
      _
    $region7: #{tpu_custom_call.1} parent=1 // pred_check_branch
      %24 = sbr.rel (0) target = $region9
    $region8: #{tpu_custom_call.1} parent=1 // pred_region
      _
    $region9: #{tpu_custom_call.1} parent=1 // pred_fallthru
      _
    // Predicated region
    $region10: #{tpu_custom_call.1} parent=1 // pred_check
      _
    $region11: #{tpu_custom_call.1} parent=1 // pred_check_branch
      %26 = sbr.rel (0) target = $region13
    $region12: #{tpu_custom_call.1} parent=1 // pred_region
      _
    $region13: #{tpu_custom_call.1} parent=1 // pred_fallthru
      _
    // Predicated region
    $region14: #{tpu_custom_call.1} parent=1 // pred_check
      _
    $region15: #{tpu_custom_call.1} parent=1 // pred_check_branch
      %28 = sbr.rel (0) target = $region17
    $region16: #{tpu_custom_call.1} parent=1 // pred_region
      _
    $region17: #{tpu_custom_call.1} parent=1 // pred_fallthru
      _
    // Predicated region
    $region18: #{tpu_custom_call.1} parent=1 // pred_check
      _
    $region19: #{tpu_custom_call.1} parent=1 // pred_check_branch
      %30 = sbr.rel (0) target = $region21
    $region20: #{tpu_custom_call.1} parent=1 // pred_region
      _
    $region21: #{tpu_custom_call.1} parent=1 // pred_fallthru
      _
    // Predicated region
    $region22: #{tpu_custom_call.1} parent=1 // pred_check
      _
    $region23: #{tpu_custom_call.1} parent=1 // pred_check_branch
      %32 = sbr.rel (0) target = $region25
    $region24: #{tpu_custom_call.1} parent=1 // pred_region
      %s34 = ssub.s32 4096, 4096
      %35 = vsyncadd [#allocation3], %s34
      %s36 = sshll.u32 [#allocation2], 4
      %s37 = int_to_ptr.vmem [resolvable:$true] %s36
      %42 = dma.hbm_to_vmem [thread:$0]  %s5, 4096, %s37, [#allocation3], 128, 128, 8
    $region25: #{tpu_custom_call.1} parent=1 // pred_fallthru
      _
    // Predicated region
    $region26: #{tpu_custom_call.1} parent=1 // pred_check
      _
    $region27: #{tpu_custom_call.1} parent=1 // pred_check_branch
      %44 = sbr.rel (0) target = $region29
    $region28: #{tpu_custom_call.1} parent=1 // pred_region
      _
    $region29: #{tpu_custom_call.1} parent=1 // pred_fallthru
      _
    // Predicated region
    $region30: #{tpu_custom_call.1} parent=1 // pred_check
      _
    $region31: #{tpu_custom_call.1} parent=1 // pred_check_branch
      %46 = sbr.rel (0) target = $region33
    $region32: #{tpu_custom_call.1} parent=1 // pred_region
      %s48 = ssub.s32 4096, 4096
      %49 = vsyncadd [#allocation6], %s48
      %s50 = sshll.u32 [#allocation5], 4
      %s51 = int_to_ptr.vmem [resolvable:$true] %s50
      %56 = dma.hbm_to_vmem [thread:$0]  %s7, 4096, %s51, [#allocation6], 128, 128, 8
    $region33: #{tpu_custom_call.1} parent=1 // pred_fallthru
      _
    // Predicated region
    $region34: #{tpu_custom_call.1} parent=1 // pred_check
      _
    $region35: #{tpu_custom_call.1} parent=1 // pred_check_branch
      %58 = sbr.rel (0) target = $region37
    $region36: #{tpu_custom_call.1} parent=1 // pred_region
      _
    $region37: #{tpu_custom_call.1} parent=1 // pred_fallthru
      _
    // Predicated region
    $region38: #{tpu_custom_call.1} parent=1 // pred_check
      _
    $region39: #{tpu_custom_call.1} parent=1 // pred_check_branch
      %60 = sbr.rel (0) target = $region41
    $region40: #{tpu_custom_call.1} parent=1 // pred_region
      %s62 = ssub.s32 4096, 4096
      %63 = vsyncadd [#allocation6], %s62
      %s64 = sshll.u32 [#allocation7], 4
      %s65 = int_to_ptr.vmem [resolvable:$true] %s64
      %70 = dma.hbm_to_vmem [thread:$0]  %s9, 4096, %s65, [#allocation6], 128, 128, 8
    $region41: #{tpu_custom_call.1} parent=1 // pred_fallthru
      _
    // Predicated region
    $region42: #{tpu_custom_call.1} parent=1 // pred_check
      _
    $region43: #{tpu_custom_call.1} parent=1 // pred_check_branch
      %72 = sbr.rel (0) target = $region45
    $region44: #{tpu_custom_call.1} parent=1 // pred_region
      _
    $region45: #{tpu_custom_call.1} parent=1 // pred_fallthru
      _
    // Predicated region
    $region46: #{tpu_custom_call.1} parent=1 // pred_check
      _
    $region47: #{tpu_custom_call.1} parent=1 // pred_check_branch
      %74 = sbr.rel (0) target = $region49
    $region48: #{tpu_custom_call.1} parent=1 // pred_region
      _
    $region49: #{tpu_custom_call.1} parent=1 // pred_fallthru
      _
    // Predicated region
    $region50: #{tpu_custom_call.1} parent=1 // pred_check
      _
    $region51: #{tpu_custom_call.1} parent=1 // pred_check_branch
      %76 = sbr.rel (0) target = $region53
    $region52: #{tpu_custom_call.1} parent=1 // pred_region
      _
    $region53: #{tpu_custom_call.1} parent=1 // pred_fallthru
      _
    // Predicated region
    $region54: #{tpu_custom_call.1} parent=1 // pred_check
      _
    $region55: #{tpu_custom_call.1} parent=1 // pred_check_branch
      %78 = sbr.rel (0) target = $region57
    $region56: #{tpu_custom_call.1} parent=1 // pred_region
      %79 = dma.done [#allocation3], 4096
    $region57: #{tpu_custom_call.1} parent=1 // pred_fallthru
      _
    // Predicated region
    $region58: #{tpu_custom_call.1} parent=1 // pred_check
      _
    $region59: #{tpu_custom_call.1} parent=1 // pred_check_branch
      %81 = sbr.rel (0) target = $region61
    $region60: #{tpu_custom_call.1} parent=1 // pred_region
      %82 = dma.done [#allocation6], 4096
    $region61: #{tpu_custom_call.1} parent=1 // pred_fallthru
      _
    // Predicated region
    $region62: #{tpu_custom_call.1} parent=1 // pred_check
      _
    $region63: #{tpu_custom_call.1} parent=1 // pred_check_branch
      %84 = sbr.rel (0) target = $region65
    $region64: #{tpu_custom_call.1} parent=1 // pred_region
      %85 = dma.done [#allocation6], 4096
    $region65: #{tpu_custom_call.1} parent=1 // pred_fallthru
      _
    %v87 = vld [vmem:[%s0] sm:$0xff]
    %v88 = vld [vmem:[%s0 + $0x8] sm:$0xff]
    %v89 = vld [vmem:[%s0 + $0x10] sm:$0xff]
    %v90 = vld [vmem:[%s0 + $0x18] sm:$0xff]
    %v91 = vld [vmem:[%s0 + $0x20] sm:$0xff]
    %v92 = vld [vmem:[%s0 + $0x28] sm:$0xff]
    %v93 = vld [vmem:[%s0 + $0x30] sm:$0xff]
    %v94 = vld [vmem:[%s0 + $0x38] sm:$0xff]
    %v95 = vld [vmem:[%s0 + $0x40] sm:$0xff]
    %v96 = vld [vmem:[%s0 + $0x48] sm:$0xff]
    %v97 = vld [vmem:[%s0 + $0x50] sm:$0xff]
    %v98 = vld [vmem:[%s0 + $0x58] sm:$0xff]
    %v99 = vld [vmem:[%s0 + $0x60] sm:$0xff]
    %v100 = vld [vmem:[%s0 + $0x68] sm:$0xff]
    %v101 = vld [vmem:[%s0 + $0x70] sm:$0xff]
    %v102 = vld [vmem:[%s0 + $0x78] sm:$0xff]
    %v103 = vld [vmem:[%s0 + $0x80] sm:$0xff]
    %v104 = vld [vmem:[%s0 + $0x88] sm:$0xff]
    %v105 = vld [vmem:[%s0 + $0x90] sm:$0xff]
    %v106 = vld [vmem:[%s0 + $0x98] sm:$0xff]
    %v107 = vld [vmem:[%s0 + $0xa0] sm:$0xff]
    %v108 = vld [vmem:[%s0 + $0xa8] sm:$0xff]
    %v109 = vld [vmem:[%s0 + $0xb0] sm:$0xff]
    %v110 = vld [vmem:[%s0 + $0xb8] sm:$0xff]
    %v111 = vld [vmem:[%s0 + $0xc0] sm:$0xff]
    %v112 = vld [vmem:[%s0 + $0xc8] sm:$0xff]
    %v113 = vld [vmem:[%s0 + $0xd0] sm:$0xff]
    %v114 = vld [vmem:[%s0 + $0xd8] sm:$0xff]
    %v115 = vld [vmem:[%s0 + $0xe0] sm:$0xff]
    %v116 = vld [vmem:[%s0 + $0xe8] sm:$0xff]
    %v117 = vld [vmem:[%s0 + $0xf0] sm:$0xff]
    %v118 = vld [vmem:[%s0 + $0xf8] sm:$0xff]
    %v119 = vld [vmem:[%s1] sm:$0xff]
    %v120 = vld [vmem:[%s1 + $0x8] sm:$0xff]
    %v121 = vld [vmem:[%s1 + $0x10] sm:$0x7]
    %v122 = vld [vmem:[%s1 + $0x18] sm:$0x7]
    %v123 = vld [vmem:[%s2] sm:$0x3]
    %v125 = vlaneseq
    %v126 = vshrl.u32 %v125, 7
    %v127 = vsub.s32 0, %v126
    %v128 = vrot.slane %v123, %v127
    %v129 = vlaneseq
    %v130 = vshrl.u32 %v129, 7
    %v131 = vsub.s32 1, %v130
    %v132 = vrot.slane %v123, %v131
    %vm135 = vcmask 89088
    %v137 = vsel %vm135, %v87, 0
    %v140 = vsel %vm135, %v88, 0
    %v143 = vsel %vm135, %v89, 0
    %v146 = vsel %vm135, %v90, 0
    %v149 = vsel %vm135, %v91, 0
    %v152 = vsel %vm135, %v92, 0
    %v155 = vsel %vm135, %v93, 0
    %v158 = vsel %vm135, %v94, 0
    %v161 = vsel %vm135, %v95, 0
    %v164 = vsel %vm135, %v96, 0
    %v167 = vsel %vm135, %v97, 0
    %v170 = vsel %vm135, %v98, 0
    %v173 = vsel %vm135, %v99, 0
    %v176 = vsel %vm135, %v100, 0
    %v179 = vsel %vm135, %v101, 0
    %v182 = vsel %vm135, %v102, 0
    %v185 = vsel %vm135, %v103, 0
    %v188 = vsel %vm135, %v104, 0
    %v191 = vsel %vm135, %v105, 0
    %v194 = vsel %vm135, %v106, 0
    %v197 = vsel %vm135, %v107, 0
    %v200 = vsel %vm135, %v108, 0
    %v203 = vsel %vm135, %v109, 0
    %v206 = vsel %vm135, %v110, 0
    %v209 = vsel %vm135, %v111, 0
    %v212 = vsel %vm135, %v112, 0
    %v215 = vsel %vm135, %v113, 0
    %v218 = vsel %vm135, %v114, 0
    %v221 = vsel %vm135, %v115, 0
    %v224 = vsel %vm135, %v116, 0
    %v227 = vsel %vm135, %v117, 0
    %v230 = vsel %vm135, %v118, 0
    %vm232 = vcmask 1042432
    %v234 = vsel %vm232, %v121, 0
    %v237 = vsel %vm232, %v122, 0
    %239 = vmatprep.subr.mxu0 0.0
    %240 = vmatpush1.msra.mxu0 0.0
    %241 = vmatprep.subr.mxu0 0.0
    %242 = vmatpush1.msra.mxu0 0.0
    %243 = vmatprep.subr.mxu0 0.0
    %244 = vmatpush1.msra.mxu0 0.0
    %245 = vmatprep.subr.mxu0 0.0
    %246 = vmatpush1.msra.mxu0 0.0
    %247 = vmatprep.subr.mxu0 0.0
    %248 = vmatpush1.msra.mxu0 0.0
    %249 = vmatprep.subr.mxu0 0.0
    %250 = vmatpush1.msra.mxu0 0.0
    %251 = vmatprep.subr.mxu0 0.0
    %252 = vmatpush1.msra.mxu0 0.0
    %253 = vmatprep.subr.mxu0 0.0
    %254 = vmatpush1.msra.mxu0 0.0
    %255 = vmatprep.subr.mxu0 0.0
    %256 = vmatpush1.msra.mxu0 0.0
    %257 = vmatprep.subr.mxu0 0.0
    %258 = vmatpush1.msra.mxu0 0.0
    %259 = vmatprep.subr.mxu0 0.0
    %260 = vmatpush1.msra.mxu0 0.0
    %261 = vmatprep.subr.mxu0 0.0
    %262 = vmatpush1.msra.mxu0 0.0
    %263 = vmatprep.subr.mxu0 0.0
    %264 = vmatpush1.msra.mxu0 0.0
    %265 = vmatprep.subr.mxu0 0.0
    %266 = vmatpush1.msra.mxu0 0.0
    %267 = vmatprep.subr.mxu0 %v237
    %268 = vmatpush1.msra.mxu0 %v234
    %269 = vmatprep.subr.mxu0 %v120
    %270 = vmatpush1.msra.mxu0 %v119
    %271 = vmatprep.subr.mxu0 0.0
    %272 = vmatpush2.msra.mxu0 0.0
    %273 = vmatprep.subr.mxu0 0.0
    %274 = vmatpush2.msra.mxu0 0.0
    %275 = vmatprep.subr.mxu0 0.0
    %276 = vmatpush2.msra.mxu0 0.0
    %277 = vmatprep.subr.mxu0 0.0
    %278 = vmatpush2.msra.mxu0 0.0
    %279 = vmatprep.subr.mxu0 0.0
    %280 = vmatpush2.msra.mxu0 0.0
    %281 = vmatprep.subr.mxu0 0.0
    %282 = vmatpush2.msra.mxu0 0.0
    %283 = vmatprep.subr.mxu0 0.0
    %284 = vmatpush2.msra.mxu0 0.0
    %285 = vmatprep.subr.mxu0 0.0
    %286 = vmatpush2.msra.mxu0 0.0
    %287 = vmatprep.subr.mxu0 0.0
    %288 = vmatpush2.msra.mxu0 0.0
    %289 = vmatprep.subr.mxu0 0.0
    %290 = vmatpush2.msra.mxu0 0.0
    %291 = vmatprep.subr.mxu0 0.0
    %292 = vmatpush2.msra.mxu0 0.0
    %293 = vmatprep.subr.mxu0 0.0
    %294 = vmatpush2.msra.mxu0 0.0
    %295 = vmatprep.subr.mxu0 0.0
    %296 = vmatpush2.msra.mxu0 0.0
    %297 = vmatprep.subr.mxu0 0.0
    %298 = vmatpush2.msra.mxu0 0.0
    %299 = vmatprep.subr.mxu0 0.0
    %300 = vmatpush2.msra.mxu0 0.0
    %301 = vmatprep.subr.mxu0 0.0
    %302 = vmatpush2.msra.mxu0 0.0
    %303 = vmatprep.mubr.f32.mxu0 0.0
    %304 = vmatmul.mubr.f32.gmra.mxu0 %v137
    %v305 = vpop.f32.mrf.mxu0
    %v306 = vadd.f32 %v128, %v305
    %v307 = vpop.f32.mrf.mxu0
    %v308 = vadd.f32 %v132, %v307
    %309 = vmatprep.mubr.f32.mxu0 0.0
    %310 = vmatmul.mubr.f32.gmra.mxu0 %v140
    %v311 = vpop.f32.mrf.mxu0
    %v312 = vadd.f32 %v128, %v311
    %v313 = vpop.f32.mrf.mxu0
    %v314 = vadd.f32 %v132, %v313
    %315 = vmatprep.mubr.f32.mxu0 0.0
    %316 = vmatmul.mubr.f32.gmra.mxu0 %v143
    %v317 = vpop.f32.mrf.mxu0
    %v318 = vadd.f32 %v128, %v317
    %v319 = vpop.f32.mrf.mxu0
    %v320 = vadd.f32 %v132, %v319
    %321 = vmatprep.mubr.f32.mxu0 0.0
    %322 = vmatmul.mubr.f32.gmra.mxu0 %v146
    %v323 = vpop.f32.mrf.mxu0
    %v324 = vadd.f32 %v128, %v323
    %v325 = vpop.f32.mrf.mxu0
    %v326 = vadd.f32 %v132, %v325
    %327 = vmatprep.mubr.f32.mxu0 0.0
    %328 = vmatmul.mubr.f32.gmra.mxu0 %v149
    %v329 = vpop.f32.mrf.mxu0
    %v330 = vadd.f32 %v128, %v329
    %v331 = vpop.f32.mrf.mxu0
    %v332 = vadd.f32 %v132, %v331
    %333 = vmatprep.mubr.f32.mxu0 0.0
    %334 = vmatmul.mubr.f32.gmra.mxu0 %v152
    %v335 = vpop.f32.mrf.mxu0
    %v336 = vadd.f32 %v128, %v335
    %v337 = vpop.f32.mrf.mxu0
    %v338 = vadd.f32 %v132, %v337
    %339 = vmatprep.mubr.f32.mxu0 0.0
    %340 = vmatmul.mubr.f32.gmra.mxu0 %v155
    %v341 = vpop.f32.mrf.mxu0
    %v342 = vadd.f32 %v128, %v341
    %v343 = vpop.f32.mrf.mxu0
    %v344 = vadd.f32 %v132, %v343
    %345 = vmatprep.mubr.f32.mxu0 0.0
    %346 = vmatmul.mubr.f32.gmra.mxu0 %v158
    %v347 = vpop.f32.mrf.mxu0
    %v348 = vadd.f32 %v128, %v347
    %v349 = vpop.f32.mrf.mxu0
    %v350 = vadd.f32 %v132, %v349
    %351 = vmatprep.mubr.f32.mxu0 0.0
    %352 = vmatmul.mubr.f32.gmra.mxu0 %v161
    %v353 = vpop.f32.mrf.mxu0
    %v354 = vadd.f32 %v128, %v353
    %v355 = vpop.f32.mrf.mxu0
    %v356 = vadd.f32 %v132, %v355
    %357 = vmatprep.mubr.f32.mxu0 0.0
    %358 = vmatmul.mubr.f32.gmra.mxu0 %v164
    %v359 = vpop.f32.mrf.mxu0
    %v360 = vadd.f32 %v128, %v359
    %v361 = vpop.f32.mrf.mxu0
    %v362 = vadd.f32 %v132, %v361
    %363 = vmatprep.mubr.f32.mxu0 0.0
    %364 = vmatmul.mubr.f32.gmra.mxu0 %v167
    %v365 = vpop.f32.mrf.mxu0
    %v366 = vadd.f32 %v128, %v365
    %v367 = vpop.f32.mrf.mxu0
    %v368 = vadd.f32 %v132, %v367
    %369 = vmatprep.mubr.f32.mxu0 0.0
    %370 = vmatmul.mubr.f32.gmra.mxu0 %v170
    %v371 = vpop.f32.mrf.mxu0
    %v372 = vadd.f32 %v128, %v371
    %v373 = vpop.f32.mrf.mxu0
    %v374 = vadd.f32 %v132, %v373
    %375 = vmatprep.mubr.f32.mxu0 0.0
    %376 = vmatmul.mubr.f32.gmra.mxu0 %v173
    %v377 = vpop.f32.mrf.mxu0
    %v378 = vadd.f32 %v128, %v377
    %v379 = vpop.f32.mrf.mxu0
    %v380 = vadd.f32 %v132, %v379
    %381 = vmatprep.mubr.f32.mxu0 0.0
    %382 = vmatmul.mubr.f32.gmra.mxu0 %v176
    %v383 = vpop.f32.mrf.mxu0
    %v384 = vadd.f32 %v128, %v383
    %v385 = vpop.f32.mrf.mxu0
    %v386 = vadd.f32 %v132, %v385
    %387 = vmatprep.mubr.f32.mxu0 0.0
    %388 = vmatmul.mubr.f32.gmra.mxu0 %v179
    %v389 = vpop.f32.mrf.mxu0
    %v390 = vadd.f32 %v128, %v389
    %v391 = vpop.f32.mrf.mxu0
    %v392 = vadd.f32 %v132, %v391
    %393 = vmatprep.mubr.f32.mxu0 0.0
    %394 = vmatmul.mubr.f32.gmra.mxu0 %v182
    %v395 = vpop.f32.mrf.mxu0
    %v396 = vadd.f32 %v128, %v395
    %v397 = vpop.f32.mrf.mxu0
    %v398 = vadd.f32 %v132, %v397
    %399 = vmatprep.mubr.f32.mxu0 0.0
    %400 = vmatmul.mubr.f32.gmra.mxu0 %v185
    %v401 = vpop.f32.mrf.mxu0
    %v402 = vadd.f32 %v128, %v401
    %v403 = vpop.f32.mrf.mxu0
    %v404 = vadd.f32 %v132, %v403
    %405 = vmatprep.mubr.f32.mxu0 0.0
    %406 = vmatmul.mubr.f32.gmra.mxu0 %v188
    %v407 = vpop.f32.mrf.mxu0
    %v408 = vadd.f32 %v128, %v407
    %v409 = vpop.f32.mrf.mxu0
    %v410 = vadd.f32 %v132, %v409
    %411 = vmatprep.mubr.f32.mxu0 0.0
    %412 = vmatmul.mubr.f32.gmra.mxu0 %v191
    %v413 = vpop.f32.mrf.mxu0
    %v414 = vadd.f32 %v128, %v413
    %v415 = vpop.f32.mrf.mxu0
    %v416 = vadd.f32 %v132, %v415
    %417 = vmatprep.mubr.f32.mxu0 0.0
    %418 = vmatmul.mubr.f32.gmra.mxu0 %v194
    %v419 = vpop.f32.mrf.mxu0
    %v420 = vadd.f32 %v128, %v419
    %v421 = vpop.f32.mrf.mxu0
    %v422 = vadd.f32 %v132, %v421
    %423 = vmatprep.mubr.f32.mxu0 0.0
    %424 = vmatmul.mubr.f32.gmra.mxu0 %v197
    %v425 = vpop.f32.mrf.mxu0
    %v426 = vadd.f32 %v128, %v425
    %v427 = vpop.f32.mrf.mxu0
    %v428 = vadd.f32 %v132, %v427
    %429 = vmatprep.mubr.f32.mxu0 0.0
    %430 = vmatmul.mubr.f32.gmra.mxu0 %v200
    %v431 = vpop.f32.mrf.mxu0
    %v432 = vadd.f32 %v128, %v431
    %v433 = vpop.f32.mrf.mxu0
    %v434 = vadd.f32 %v132, %v433
    %435 = vmatprep.mubr.f32.mxu0 0.0
    %436 = vmatmul.mubr.f32.gmra.mxu0 %v203
    %v437 = vpop.f32.mrf.mxu0
    %v438 = vadd.f32 %v128, %v437
    %v439 = vpop.f32.mrf.mxu0
    %v440 = vadd.f32 %v132, %v439
    %441 = vmatprep.mubr.f32.mxu0 0.0
    %442 = vmatmul.mubr.f32.gmra.mxu0 %v206
    %v443 = vpop.f32.mrf.mxu0
    %v444 = vadd.f32 %v128, %v443
    %v445 = vpop.f32.mrf.mxu0
    %v446 = vadd.f32 %v132, %v445
    %447 = vmatprep.mubr.f32.mxu0 0.0
    %448 = vmatmul.mubr.f32.gmra.mxu0 %v209
    %v449 = vpop.f32.mrf.mxu0
    %v450 = vadd.f32 %v128, %v449
    %v451 = vpop.f32.mrf.mxu0
    %v452 = vadd.f32 %v132, %v451
    %453 = vmatprep.mubr.f32.mxu0 0.0
    %454 = vmatmul.mubr.f32.gmra.mxu0 %v212
    %v455 = vpop.f32.mrf.mxu0
    %v456 = vadd.f32 %v128, %v455
    %v457 = vpop.f32.mrf.mxu0
    %v458 = vadd.f32 %v132, %v457
    %459 = vmatprep.mubr.f32.mxu0 0.0
    %460 = vmatmul.mubr.f32.gmra.mxu0 %v215
    %v461 = vpop.f32.mrf.mxu0
    %v462 = vadd.f32 %v128, %v461
    %v463 = vpop.f32.mrf.mxu0
    %v464 = vadd.f32 %v132, %v463
    %465 = vmatprep.mubr.f32.mxu0 0.0
    %466 = vmatmul.mubr.f32.gmra.mxu0 %v218
    %v467 = vpop.f32.mrf.mxu0
    %v468 = vadd.f32 %v128, %v467
    %v469 = vpop.f32.mrf.mxu0
    %v470 = vadd.f32 %v132, %v469
    %471 = vmatprep.mubr.f32.mxu0 0.0
    %472 = vmatmul.mubr.f32.gmra.mxu0 %v221
    %v473 = vpop.f32.mrf.mxu0
    %v474 = vadd.f32 %v128, %v473
    %v475 = vpop.f32.mrf.mxu0
    %v476 = vadd.f32 %v132, %v475
    %477 = vmatprep.mubr.f32.mxu0 0.0
    %478 = vmatmul.mubr.f32.gmra.mxu0 %v224
    %v479 = vpop.f32.mrf.mxu0
    %v480 = vadd.f32 %v128, %v479
    %v481 = vpop.f32.mrf.mxu0
    %v482 = vadd.f32 %v132, %v481
    %483 = vmatprep.mubr.f32.mxu0 0.0
    %484 = vmatmul.mubr.f32.gmra.mxu0 %v227
    %v485 = vpop.f32.mrf.mxu0
    %v486 = vadd.f32 %v128, %v485
    %v487 = vpop.f32.mrf.mxu0
    %v488 = vadd.f32 %v132, %v487
    %489 = vmatprep.mubr.f32.mxu0 0.0
    %490 = vmatmul.mubr.f32.gmra.mxu0 %v230
    %v491 = vpop.f32.mrf.mxu0
    %v492 = vadd.f32 %v128, %v491
    %v493 = vpop.f32.mrf.mxu0
    %v494 = vadd.f32 %v132, %v493
    %495 = vdwg.mxu0
    %v496 = vpack.c.bf16 %v312, %v306
    %v497 = vpack.c.bf16 %v314, %v308
    %v498 = vpack.c.bf16 %v324, %v318
    %v499 = vpack.c.bf16 %v326, %v320
    %v500 = vpack.c.bf16 %v336, %v330
    %v501 = vpack.c.bf16 %v338, %v332
    %v502 = vpack.c.bf16 %v348, %v342
    %v503 = vpack.c.bf16 %v350, %v344
    %v504 = vpack.c.bf16 %v360, %v354
    %v505 = vpack.c.bf16 %v362, %v356
    %v506 = vpack.c.bf16 %v372, %v366
    %v507 = vpack.c.bf16 %v374, %v368
    %v508 = vpack.c.bf16 %v384, %v378
    %v509 = vpack.c.bf16 %v386, %v380
    %v510 = vpack.c.bf16 %v396, %v390
    %v511 = vpack.c.bf16 %v398, %v392
    %v512 = vpack.c.bf16 %v408, %v402
    %v513 = vpack.c.bf16 %v410, %v404
    %v514 = vpack.c.bf16 %v420, %v414
    %v515 = vpack.c.bf16 %v422, %v416
    %v516 = vpack.c.bf16 %v432, %v426
    %v517 = vpack.c.bf16 %v434, %v428
    %v518 = vpack.c.bf16 %v444, %v438
    %v519 = vpack.c.bf16 %v446, %v440
    %v520 = vpack.c.bf16 %v456, %v450
    %v521 = vpack.c.bf16 %v458, %v452
    %v522 = vpack.c.bf16 %v468, %v462
    %v523 = vpack.c.bf16 %v470, %v464
    %v524 = vpack.c.bf16 %v480, %v474
    %v525 = vpack.c.bf16 %v482, %v476
    %v526 = vpack.c.bf16 %v492, %v486
    %v527 = vpack.c.bf16 %v494, %v488
    %v528 = vxor.u32 %v496, 2147516416
    %v529 = vxor.u32 %v497, 2147516416
    %v530 = vxor.u32 %v498, 2147516416
    %v531 = vxor.u32 %v499, 2147516416
    %v532 = vxor.u32 %v500, 2147516416
    %v533 = vxor.u32 %v501, 2147516416
    %v534 = vxor.u32 %v502, 2147516416
    %v535 = vxor.u32 %v503, 2147516416
    %v536 = vxor.u32 %v504, 2147516416
    %v537 = vxor.u32 %v505, 2147516416
    %v538 = vxor.u32 %v506, 2147516416
    %v539 = vxor.u32 %v507, 2147516416
    %v540 = vxor.u32 %v508, 2147516416
    %v541 = vxor.u32 %v509, 2147516416
    %v542 = vxor.u32 %v510, 2147516416
    %v543 = vxor.u32 %v511, 2147516416
    %v544 = vxor.u32 %v512, 2147516416
    %v545 = vxor.u32 %v513, 2147516416
    %v546 = vxor.u32 %v514, 2147516416
    %v547 = vxor.u32 %v515, 2147516416
    %v548 = vxor.u32 %v516, 2147516416
    %v549 = vxor.u32 %v517, 2147516416
    %v550 = vxor.u32 %v518, 2147516416
    %v551 = vxor.u32 %v519, 2147516416
    %v552 = vxor.u32 %v520, 2147516416
    %v553 = vxor.u32 %v521, 2147516416
    %v554 = vxor.u32 %v522, 2147516416
    %v555 = vxor.u32 %v523, 2147516416
    %v556 = vxor.u32 %v524, 2147516416
    %v557 = vxor.u32 %v525, 2147516416
    %v558 = vxor.u32 %v526, 2147516416
    %v559 = vxor.u32 %v527, 2147516416
    %v561 = vmul.bf16 %v528, 1069105081
    %v562 = vpow.bf16.pop %v561
    %v564 = vmul.bf16 %v529, 1069105081
    %v565 = vpow.bf16.pop %v564
    %v567 = vmul.bf16 %v530, 1069105081
    %v568 = vpow.bf16.pop %v567
    %v570 = vmul.bf16 %v531, 1069105081
    %v571 = vpow.bf16.pop %v570
    %v573 = vmul.bf16 %v532, 1069105081
    %v574 = vpow.bf16.pop %v573
    %v576 = vmul.bf16 %v533, 1069105081
    %v577 = vpow.bf16.pop %v576
    %v579 = vmul.bf16 %v534, 1069105081
    %v580 = vpow.bf16.pop %v579
    %v582 = vmul.bf16 %v535, 1069105081
    %v583 = vpow.bf16.pop %v582
    %v585 = vmul.bf16 %v536, 1069105081
    %v586 = vpow.bf16.pop %v585
    %v588 = vmul.bf16 %v537, 1069105081
    %v589 = vpow.bf16.pop %v588
    %v591 = vmul.bf16 %v538, 1069105081
    %v592 = vpow.bf16.pop %v591
    %v594 = vmul.bf16 %v539, 1069105081
    %v595 = vpow.bf16.pop %v594
    %v597 = vmul.bf16 %v540, 1069105081
    %v598 = vpow.bf16.pop %v597
    %v600 = vmul.bf16 %v541, 1069105081
    %v601 = vpow.bf16.pop %v600
    %v603 = vmul.bf16 %v542, 1069105081
    %v604 = vpow.bf16.pop %v603
    %v606 = vmul.bf16 %v543, 1069105081
    %v607 = vpow.bf16.pop %v606
    %v609 = vmul.bf16 %v544, 1069105081
    %v610 = vpow.bf16.pop %v609
    %v612 = vmul.bf16 %v545, 1069105081
    %v613 = vpow.bf16.pop %v612
    %v615 = vmul.bf16 %v546, 1069105081
    %v616 = vpow.bf16.pop %v615
    %v618 = vmul.bf16 %v547, 1069105081
    %v619 = vpow.bf16.pop %v618
    %v621 = vmul.bf16 %v548, 1069105081
    %v622 = vpow.bf16.pop %v621
    %v624 = vmul.bf16 %v549, 1069105081
    %v625 = vpow.bf16.pop %v624
    %v627 = vmul.bf16 %v550, 1069105081
    %v628 = vpow.bf16.pop %v627
    %v630 = vmul.bf16 %v551, 1069105081
    %v631 = vpow.bf16.pop %v630
    %v633 = vmul.bf16 %v552, 1069105081
    %v634 = vpow.bf16.pop %v633
    %v636 = vmul.bf16 %v553, 1069105081
    %v637 = vpow.bf16.pop %v636
    %v639 = vmul.bf16 %v554, 1069105081
    %v640 = vpow.bf16.pop %v639
    %v642 = vmul.bf16 %v555, 1069105081
    %v643 = vpow.bf16.pop %v642
    %v645 = vmul.bf16 %v556, 1069105081
    %v646 = vpow.bf16.pop %v645
    %v648 = vmul.bf16 %v557, 1069105081
    %v649 = vpow.bf16.pop %v648
    %v651 = vmul.bf16 %v558, 1069105081
    %v652 = vpow.bf16.pop %v651
    %v654 = vmul.bf16 %v559, 1069105081
    %v655 = vpow.bf16.pop %v654
    %v656 = vadd.bf16 %v562, 1065369472
    %v657 = vadd.bf16 %v565, 1065369472
    %v658 = vadd.bf16 %v568, 1065369472
    %v659 = vadd.bf16 %v571, 1065369472
    %v660 = vadd.bf16 %v574, 1065369472
    %v661 = vadd.bf16 %v577, 1065369472
    %v662 = vadd.bf16 %v580, 1065369472
    %v663 = vadd.bf16 %v583, 1065369472
    %v664 = vadd.bf16 %v586, 1065369472
    %v665 = vadd.bf16 %v589, 1065369472
    %v666 = vadd.bf16 %v592, 1065369472
    %v667 = vadd.bf16 %v595, 1065369472
    %v668 = vadd.bf16 %v598, 1065369472
    %v669 = vadd.bf16 %v601, 1065369472
    %v670 = vadd.bf16 %v604, 1065369472
    %v671 = vadd.bf16 %v607, 1065369472
    %v672 = vadd.bf16 %v610, 1065369472
    %v673 = vadd.bf16 %v613, 1065369472
    %v674 = vadd.bf16 %v616, 1065369472
    %v675 = vadd.bf16 %v619, 1065369472
    %v676 = vadd.bf16 %v622, 1065369472
    %v677 = vadd.bf16 %v625, 1065369472
    %v678 = vadd.bf16 %v628, 1065369472
    %v679 = vadd.bf16 %v631, 1065369472
    %v680 = vadd.bf16 %v634, 1065369472
    %v681 = vadd.bf16 %v637, 1065369472
    %v682 = vadd.bf16 %v640, 1065369472
    %v683 = vadd.bf16 %v643, 1065369472
    %v684 = vadd.bf16 %v646, 1065369472
    %v685 = vadd.bf16 %v649, 1065369472
    %v686 = vadd.bf16 %v652, 1065369472
    %v687 = vadd.bf16 %v655, 1065369472
    %v688 = vrcp.bf16.pop %v656
    %v689 = vmul.bf16 1065369472, %v688
    %v690 = vrcp.bf16.pop %v657
    %v691 = vmul.bf16 1065369472, %v690
    %v692 = vrcp.bf16.pop %v658
    %v693 = vmul.bf16 1065369472, %v692
    %v694 = vrcp.bf16.pop %v659
    %v695 = vmul.bf16 1065369472, %v694
    %v696 = vrcp.bf16.pop %v660
    %v697 = vmul.bf16 1065369472, %v696
    %v698 = vrcp.bf16.pop %v661
    %v699 = vmul.bf16 1065369472, %v698
    %v700 = vrcp.bf16.pop %v662
    %v701 = vmul.bf16 1065369472, %v700
    %v702 = vrcp.bf16.pop %v663
    %v703 = vmul.bf16 1065369472, %v702
    %v704 = vrcp.bf16.pop %v664
    %v705 = vmul.bf16 1065369472, %v704
    %v706 = vrcp.bf16.pop %v665
    %v707 = vmul.bf16 1065369472, %v706
    %v708 = vrcp.bf16.pop %v666
    %v709 = vmul.bf16 1065369472, %v708
    %v710 = vrcp.bf16.pop %v667
    %v711 = vmul.bf16 1065369472, %v710
    %v712 = vrcp.bf16.pop %v668
    %v713 = vmul.bf16 1065369472, %v712
    %v714 = vrcp.bf16.pop %v669
    %v715 = vmul.bf16 1065369472, %v714
    %v716 = vrcp.bf16.pop %v670
    %v717 = vmul.bf16 1065369472, %v716
    %v718 = vrcp.bf16.pop %v671
    %v719 = vmul.bf16 1065369472, %v718
    %v720 = vrcp.bf16.pop %v672
    %v721 = vmul.bf16 1065369472, %v720
    %v722 = vrcp.bf16.pop %v673
    %v723 = vmul.bf16 1065369472, %v722
    %v724 = vrcp.bf16.pop %v674
    %v725 = vmul.bf16 1065369472, %v724
    %v726 = vrcp.bf16.pop %v675
    %v727 = vmul.bf16 1065369472, %v726
    %v728 = vrcp.bf16.pop %v676
    %v729 = vmul.bf16 1065369472, %v728
    %v730 = vrcp.bf16.pop %v677
    %v731 = vmul.bf16 1065369472, %v730
    %v732 = vrcp.bf16.pop %v678
    %v733 = vmul.bf16 1065369472, %v732
    %v734 = vrcp.bf16.pop %v679
    %v735 = vmul.bf16 1065369472, %v734
    %v736 = vrcp.bf16.pop %v680
    %v737 = vmul.bf16 1065369472, %v736
    %v738 = vrcp.bf16.pop %v681
    %v739 = vmul.bf16 1065369472, %v738
    %v740 = vrcp.bf16.pop %v682
    %v741 = vmul.bf16 1065369472, %v740
    %v742 = vrcp.bf16.pop %v683
    %v743 = vmul.bf16 1065369472, %v742
    %v744 = vrcp.bf16.pop %v684
    %v745 = vmul.bf16 1065369472, %v744
    %v746 = vrcp.bf16.pop %v685
    %v747 = vmul.bf16 1065369472, %v746
    %v748 = vrcp.bf16.pop %v686
    %v749 = vmul.bf16 1065369472, %v748
    %v750 = vrcp.bf16.pop %v687
    %v751 = vmul.bf16 1065369472, %v750
    %v752 = vmul.bf16 %v496, %v689
    %v753 = vmul.bf16 %v497, %v691
    %v754 = vmul.bf16 %v498, %v693
    %v755 = vmul.bf16 %v499, %v695
    %v756 = vmul.bf16 %v500, %v697
    %v757 = vmul.bf16 %v501, %v699
    %v758 = vmul.bf16 %v502, %v701
    %v759 = vmul.bf16 %v503, %v703
    %v760 = vmul.bf16 %v504, %v705
    %v761 = vmul.bf16 %v505, %v707
    %v762 = vmul.bf16 %v506, %v709
    %v763 = vmul.bf16 %v507, %v711
    %v764 = vmul.bf16 %v508, %v713
    %v765 = vmul.bf16 %v509, %v715
    %v766 = vmul.bf16 %v510, %v717
    %v767 = vmul.bf16 %v511, %v719
    %v768 = vmul.bf16 %v512, %v721
    %v769 = vmul.bf16 %v513, %v723
    %v770 = vmul.bf16 %v514, %v725
    %v771 = vmul.bf16 %v515, %v727
    %v772 = vmul.bf16 %v516, %v729
    %v773 = vmul.bf16 %v517, %v731
    %v774 = vmul.bf16 %v518, %v733
    %v775 = vmul.bf16 %v519, %v735
    %v776 = vmul.bf16 %v520, %v737
    %v777 = vmul.bf16 %v521, %v739
    %v778 = vmul.bf16 %v522, %v741
    %v779 = vmul.bf16 %v523, %v743
    %v780 = vmul.bf16 %v524, %v745
    %v781 = vmul.bf16 %v525, %v747
    %v782 = vmul.bf16 %v526, %v749
    %v783 = vmul.bf16 %v527, %v751
    %v784 = vld [vmem:[%s3] sm:$0xff]
    %v785 = vld [vmem:[%s3 + $0x8] sm:$0xff]
    %v786 = vld [vmem:[%s3 + $0x10] sm:$0xff]
    %v787 = vld [vmem:[%s3 + $0x18] sm:$0xff]
    %v788 = vld [vmem:[%s3 + $0x20] sm:$0xff]
    %v789 = vld [vmem:[%s3 + $0x28] sm:$0xff]
    %v790 = vld [vmem:[%s3 + $0x30] sm:$0xff]
    %v791 = vld [vmem:[%s3 + $0x38] sm:$0xff]
    %v792 = vld [vmem:[%s3 + $0x40] sm:$0xff]
    %v793 = vld [vmem:[%s3 + $0x48] sm:$0xff]
    %v794 = vld [vmem:[%s3 + $0x50] sm:$0xff]
    %v795 = vld [vmem:[%s3 + $0x58] sm:$0xff]
    %v796 = vld [vmem:[%s3 + $0x60] sm:$0xff]
    %v797 = vld [vmem:[%s3 + $0x68] sm:$0xff]
    %v798 = vld [vmem:[%s3 + $0x70] sm:$0xff]
    %v799 = vld [vmem:[%s3 + $0x78] sm:$0xff]
    %v800 = vld [vmem:[%s3 + $0x80] sm:$0xff]
    %v801 = vld [vmem:[%s3 + $0x88] sm:$0xff]
    %v802 = vld [vmem:[%s3 + $0x90] sm:$0xff]
    %v803 = vld [vmem:[%s3 + $0x98] sm:$0xff]
    %v804 = vld [vmem:[%s3 + $0xa0] sm:$0xff]
    %v805 = vld [vmem:[%s3 + $0xa8] sm:$0xff]
    %v806 = vld [vmem:[%s3 + $0xb0] sm:$0xff]
    %v807 = vld [vmem:[%s3 + $0xb8] sm:$0xff]
    %v808 = vld [vmem:[%s3 + $0xc0] sm:$0xff]
    %v809 = vld [vmem:[%s3 + $0xc8] sm:$0xff]
    %v810 = vld [vmem:[%s3 + $0xd0] sm:$0xff]
    %v811 = vld [vmem:[%s3 + $0xd8] sm:$0xff]
    %v812 = vld [vmem:[%s3 + $0xe0] sm:$0xff]
    %v813 = vld [vmem:[%s3 + $0xe8] sm:$0xff]
    %v814 = vld [vmem:[%s3 + $0xf0] sm:$0xff]
    %v815 = vld [vmem:[%s3 + $0xf8] sm:$0xff]
    %v816 = vld [vmem:[%s4] sm:$0x3]
    %v818 = vlaneseq
    %v819 = vshrl.u32 %v818, 7
    %v820 = vsub.s32 0, %v819
    %v821 = vrot.slane %v816, %v820
    %v822 = vlaneseq
    %v823 = vshrl.u32 %v822, 7
    %v824 = vsub.s32 1, %v823
    %v825 = vrot.slane %v816, %v824
    %v860 = vunpack.c.l.b16 %v784
    %v861 = vunpack.c.h.b16 %v784
    %v862 = vunpack.c.l.b16 %v785
    %v863 = vunpack.c.h.b16 %v785
    %v864 = vunpack.c.l.b16 %v786
    %v865 = vunpack.c.h.b16 %v786
    %v866 = vunpack.c.l.b16 %v787
    %v867 = vunpack.c.h.b16 %v787
    %v868 = vunpack.c.l.b16 %v788
    %v869 = vunpack.c.h.b16 %v788
    %v870 = vunpack.c.l.b16 %v789
    %v871 = vunpack.c.h.b16 %v789
    %v872 = vunpack.c.l.b16 %v790
    %v873 = vunpack.c.h.b16 %v790
    %v874 = vunpack.c.l.b16 %v791
    %v875 = vunpack.c.h.b16 %v791
    %v876 = vunpack.c.l.b16 %v792
    %v877 = vunpack.c.h.b16 %v792
    %v878 = vunpack.c.l.b16 %v793
    %v879 = vunpack.c.h.b16 %v793
    %v880 = vunpack.c.l.b16 %v794
    %v881 = vunpack.c.h.b16 %v794
    %v882 = vunpack.c.l.b16 %v795
    %v883 = vunpack.c.h.b16 %v795
    %v884 = vunpack.c.l.b16 %v796
    %v885 = vunpack.c.h.b16 %v796
    %v886 = vunpack.c.l.b16 %v797
    %v887 = vunpack.c.h.b16 %v797
    %v888 = vunpack.c.l.b16 %v798
    %v889 = vunpack.c.h.b16 %v798
    %v890 = vunpack.c.l.b16 %v799
    %v891 = vunpack.c.h.b16 %v799
    %v892 = vunpack.c.l.b16 %v800
    %v893 = vunpack.c.h.b16 %v800
    %v894 = vunpack.c.l.b16 %v801
    %v895 = vunpack.c.h.b16 %v801
    %v896 = vunpack.c.l.b16 %v802
    %v897 = vunpack.c.h.b16 %v802
    %v898 = vunpack.c.l.b16 %v803
    %v899 = vunpack.c.h.b16 %v803
    %v900 = vunpack.c.l.b16 %v804
    %v901 = vunpack.c.h.b16 %v804
    %v902 = vunpack.c.l.b16 %v805
    %v903 = vunpack.c.h.b16 %v805
    %v904 = vunpack.c.l.b16 %v806
    %v905 = vunpack.c.h.b16 %v806
    %v906 = vunpack.c.l.b16 %v807
    %v907 = vunpack.c.h.b16 %v807
    %v908 = vunpack.c.l.b16 %v808
    %v909 = vunpack.c.h.b16 %v808
    %v910 = vunpack.c.l.b16 %v809
    %v911 = vunpack.c.h.b16 %v809
    %v912 = vunpack.c.l.b16 %v810
    %v913 = vunpack.c.h.b16 %v810
    %v914 = vunpack.c.l.b16 %v811
    %v915 = vunpack.c.h.b16 %v811
    %v916 = vunpack.c.l.b16 %v812
    %v917 = vunpack.c.h.b16 %v812
    %v918 = vunpack.c.l.b16 %v813
    %v919 = vunpack.c.h.b16 %v813
    %v920 = vunpack.c.l.b16 %v814
    %v921 = vunpack.c.h.b16 %v814
    %v922 = vunpack.c.l.b16 %v815
    %v923 = vunpack.c.h.b16 %v815
    %v924 = vpack.c.b16 %v862, %v860
    %v925 = vpack.c.b16 %v863, %v861
    %v926 = vpack.c.b16 %v866, %v864
    %v927 = vpack.c.b16 %v867, %v865
    %v928 = vpack.c.b16 %v870, %v868
    %v929 = vpack.c.b16 %v871, %v869
    %v930 = vpack.c.b16 %v874, %v872
    %v931 = vpack.c.b16 %v875, %v873
    %v932 = vpack.c.b16 %v878, %v876
    %v933 = vpack.c.b16 %v879, %v877
    %v934 = vpack.c.b16 %v882, %v880
    %v935 = vpack.c.b16 %v883, %v881
    %v936 = vpack.c.b16 %v886, %v884
    %v937 = vpack.c.b16 %v887, %v885
    %v938 = vpack.c.b16 %v890, %v888
    %v939 = vpack.c.b16 %v891, %v889
    %v940 = vpack.c.b16 %v894, %v892
    %v941 = vpack.c.b16 %v895, %v893
    %v942 = vpack.c.b16 %v898, %v896
    %v943 = vpack.c.b16 %v899, %v897
    %v944 = vpack.c.b16 %v902, %v900
    %v945 = vpack.c.b16 %v903, %v901
    %v946 = vpack.c.b16 %v906, %v904
    %v947 = vpack.c.b16 %v907, %v905
    %v948 = vpack.c.b16 %v910, %v908
    %v949 = vpack.c.b16 %v911, %v909
    %v950 = vpack.c.b16 %v914, %v912
    %v951 = vpack.c.b16 %v915, %v913
    %v952 = vpack.c.b16 %v918, %v916
    %v953 = vpack.c.b16 %v919, %v917
    %v954 = vpack.c.b16 %v922, %v920
    %v955 = vpack.c.b16 %v923, %v921
    %988 = vmatprep.subr.bf16.mxu0 %v939
    %989 = vmatpush1.bf16.msra.mxu0 %v938
    %990 = vmatprep.subr.bf16.mxu0 %v937
    %991 = vmatpush1.bf16.msra.mxu0 %v936
    %992 = vmatprep.subr.bf16.mxu0 %v935
    %993 = vmatpush1.bf16.msra.mxu0 %v934
    %994 = vmatprep.subr.bf16.mxu0 %v933
    %995 = vmatpush1.bf16.msra.mxu0 %v932
    %996 = vmatprep.subr.bf16.mxu0 %v931
    %997 = vmatpush1.bf16.msra.mxu0 %v930
    %998 = vmatprep.subr.bf16.mxu0 %v929
    %999 = vmatpush1.bf16.msra.mxu0 %v928
    %1000 = vmatprep.subr.bf16.mxu0 %v927
    %1001 = vmatpush1.bf16.msra.mxu0 %v926
    %1002 = vmatprep.subr.bf16.mxu0 %v925
    %1003 = vmatpush1.bf16.msra.mxu0 %v924
    %1004 = vmatprep.subr.bf16.mxu0 %v955
    %1005 = vmatpush2.bf16.msra.mxu0 %v954
    %1006 = vmatprep.subr.bf16.mxu0 %v953
    %1007 = vmatpush2.bf16.msra.mxu0 %v952
    %1008 = vmatprep.subr.bf16.mxu0 %v951
    %1009 = vmatpush2.bf16.msra.mxu0 %v950
    %1010 = vmatprep.subr.bf16.mxu0 %v949
    %1011 = vmatpush2.bf16.msra.mxu0 %v948
    %1012 = vmatprep.subr.bf16.mxu0 %v947
    %1013 = vmatpush2.bf16.msra.mxu0 %v946
    %1014 = vmatprep.subr.bf16.mxu0 %v945
    %1015 = vmatpush2.bf16.msra.mxu0 %v944
    %1016 = vmatprep.subr.bf16.mxu0 %v943
    %1017 = vmatpush2.bf16.msra.mxu0 %v942
    %1018 = vmatprep.subr.bf16.mxu0 %v941
    %1019 = vmatpush2.bf16.msra.mxu0 %v940
    %1020 = vmatprep.mubr.bf16.mxu0 %v753
    %1021 = vmatmul.mubr.bf16.gmra.mxu0 %v752
    %v1022 = vpop.f32.mrf.mxu0
    %v1023 = vadd.f32 %v821, %v1022
    %v1024 = vpop.f32.mrf.mxu0
    %v1025 = vadd.f32 %v825, %v1024
    %v1026 = vpop.f32.mrf.mxu0
    %v1027 = vadd.f32 %v821, %v1026
    %v1028 = vpop.f32.mrf.mxu0
    %v1029 = vadd.f32 %v825, %v1028
    %1030 = vmatprep.mubr.bf16.mxu0 %v755
    %1031 = vmatmul.mubr.bf16.gmra.mxu0 %v754
    %v1032 = vpop.f32.mrf.mxu0
    %v1033 = vadd.f32 %v821, %v1032
    %v1034 = vpop.f32.mrf.mxu0
    %v1035 = vadd.f32 %v825, %v1034
    %v1036 = vpop.f32.mrf.mxu0
    %v1037 = vadd.f32 %v821, %v1036
    %v1038 = vpop.f32.mrf.mxu0
    %v1039 = vadd.f32 %v825, %v1038
    %1040 = vmatprep.mubr.bf16.mxu0 %v757
    %1041 = vmatmul.mubr.bf16.gmra.mxu0 %v756
    %v1042 = vpop.f32.mrf.mxu0
    %v1043 = vadd.f32 %v821, %v1042
    %v1044 = vpop.f32.mrf.mxu0
    %v1045 = vadd.f32 %v825, %v1044
    %v1046 = vpop.f32.mrf.mxu0
    %v1047 = vadd.f32 %v821, %v1046
    %v1048 = vpop.f32.mrf.mxu0
    %v1049 = vadd.f32 %v825, %v1048
    %1050 = vmatprep.mubr.bf16.mxu0 %v759
    %1051 = vmatmul.mubr.bf16.gmra.mxu0 %v758
    %v1052 = vpop.f32.mrf.mxu0
    %v1053 = vadd.f32 %v821, %v1052
    %v1054 = vpop.f32.mrf.mxu0
    %v1055 = vadd.f32 %v825, %v1054
    %v1056 = vpop.f32.mrf.mxu0
    %v1057 = vadd.f32 %v821, %v1056
    %v1058 = vpop.f32.mrf.mxu0
    %v1059 = vadd.f32 %v825, %v1058
    %1060 = vmatprep.mubr.bf16.mxu0 %v761
    %1061 = vmatmul.mubr.bf16.gmra.mxu0 %v760
    %v1062 = vpop.f32.mrf.mxu0
    %v1063 = vadd.f32 %v821, %v1062
    %v1064 = vpop.f32.mrf.mxu0
    %v1065 = vadd.f32 %v825, %v1064
    %v1066 = vpop.f32.mrf.mxu0
    %v1067 = vadd.f32 %v821, %v1066
    %v1068 = vpop.f32.mrf.mxu0
    %v1069 = vadd.f32 %v825, %v1068
    %1070 = vmatprep.mubr.bf16.mxu0 %v763
    %1071 = vmatmul.mubr.bf16.gmra.mxu0 %v762
    %v1072 = vpop.f32.mrf.mxu0
    %v1073 = vadd.f32 %v821, %v1072
    %v1074 = vpop.f32.mrf.mxu0
    %v1075 = vadd.f32 %v825, %v1074
    %v1076 = vpop.f32.mrf.mxu0
    %v1077 = vadd.f32 %v821, %v1076
    %v1078 = vpop.f32.mrf.mxu0
    %v1079 = vadd.f32 %v825, %v1078
    %1080 = vmatprep.mubr.bf16.mxu0 %v765
    %1081 = vmatmul.mubr.bf16.gmra.mxu0 %v764
    %v1082 = vpop.f32.mrf.mxu0
    %v1083 = vadd.f32 %v821, %v1082
    %v1084 = vpop.f32.mrf.mxu0
    %v1085 = vadd.f32 %v825, %v1084
    %v1086 = vpop.f32.mrf.mxu0
    %v1087 = vadd.f32 %v821, %v1086
    %v1088 = vpop.f32.mrf.mxu0
    %v1089 = vadd.f32 %v825, %v1088
    %1090 = vmatprep.mubr.bf16.mxu0 %v767
    %1091 = vmatmul.mubr.bf16.gmra.mxu0 %v766
    %v1092 = vpop.f32.mrf.mxu0
    %v1093 = vadd.f32 %v821, %v1092
    %v1094 = vpop.f32.mrf.mxu0
    %v1095 = vadd.f32 %v825, %v1094
    %v1096 = vpop.f32.mrf.mxu0
    %v1097 = vadd.f32 %v821, %v1096
    %v1098 = vpop.f32.mrf.mxu0
    %v1099 = vadd.f32 %v825, %v1098
    %1100 = vmatprep.mubr.bf16.mxu0 %v769
    %1101 = vmatmul.mubr.bf16.gmra.mxu0 %v768
    %v1102 = vpop.f32.mrf.mxu0
    %v1103 = vadd.f32 %v821, %v1102
    %v1104 = vpop.f32.mrf.mxu0
    %v1105 = vadd.f32 %v825, %v1104
    %v1106 = vpop.f32.mrf.mxu0
    %v1107 = vadd.f32 %v821, %v1106
    %v1108 = vpop.f32.mrf.mxu0
    %v1109 = vadd.f32 %v825, %v1108
    %1110 = vmatprep.mubr.bf16.mxu0 %v771
    %1111 = vmatmul.mubr.bf16.gmra.mxu0 %v770
    %v1112 = vpop.f32.mrf.mxu0
    %v1113 = vadd.f32 %v821, %v1112
    %v1114 = vpop.f32.mrf.mxu0
    %v1115 = vadd.f32 %v825, %v1114
    %v1116 = vpop.f32.mrf.mxu0
    %v1117 = vadd.f32 %v821, %v1116
    %v1118 = vpop.f32.mrf.mxu0
    %v1119 = vadd.f32 %v825, %v1118
    %1120 = vmatprep.mubr.bf16.mxu0 %v773
    %1121 = vmatmul.mubr.bf16.gmra.mxu0 %v772
    %v1122 = vpop.f32.mrf.mxu0
    %v1123 = vadd.f32 %v821, %v1122
    %v1124 = vpop.f32.mrf.mxu0
    %v1125 = vadd.f32 %v825, %v1124
    %v1126 = vpop.f32.mrf.mxu0
    %v1127 = vadd.f32 %v821, %v1126
    %v1128 = vpop.f32.mrf.mxu0
    %v1129 = vadd.f32 %v825, %v1128
    %1130 = vmatprep.mubr.bf16.mxu0 %v775
    %1131 = vmatmul.mubr.bf16.gmra.mxu0 %v774
    %v1132 = vpop.f32.mrf.mxu0
    %v1133 = vadd.f32 %v821, %v1132
    %v1134 = vpop.f32.mrf.mxu0
    %v1135 = vadd.f32 %v825, %v1134
    %v1136 = vpop.f32.mrf.mxu0
    %v1137 = vadd.f32 %v821, %v1136
    %v1138 = vpop.f32.mrf.mxu0
    %v1139 = vadd.f32 %v825, %v1138
    %1140 = vmatprep.mubr.bf16.mxu0 %v777
    %1141 = vmatmul.mubr.bf16.gmra.mxu0 %v776
    %v1142 = vpop.f32.mrf.mxu0
    %v1143 = vadd.f32 %v821, %v1142
    %v1144 = vpop.f32.mrf.mxu0
    %v1145 = vadd.f32 %v825, %v1144
    %v1146 = vpop.f32.mrf.mxu0
    %v1147 = vadd.f32 %v821, %v1146
    %v1148 = vpop.f32.mrf.mxu0
    %v1149 = vadd.f32 %v825, %v1148
    %1150 = vmatprep.mubr.bf16.mxu0 %v779
    %1151 = vmatmul.mubr.bf16.gmra.mxu0 %v778
    %v1152 = vpop.f32.mrf.mxu0
    %v1153 = vadd.f32 %v821, %v1152
    %v1154 = vpop.f32.mrf.mxu0
    %v1155 = vadd.f32 %v825, %v1154
    %v1156 = vpop.f32.mrf.mxu0
    %v1157 = vadd.f32 %v821, %v1156
    %v1158 = vpop.f32.mrf.mxu0
    %v1159 = vadd.f32 %v825, %v1158
    %1160 = vmatprep.mubr.bf16.mxu0 %v781
    %1161 = vmatmul.mubr.bf16.gmra.mxu0 %v780
    %v1162 = vpop.f32.mrf.mxu0
    %v1163 = vadd.f32 %v821, %v1162
    %v1164 = vpop.f32.mrf.mxu0
    %v1165 = vadd.f32 %v825, %v1164
    %v1166 = vpop.f32.mrf.mxu0
    %v1167 = vadd.f32 %v821, %v1166
    %v1168 = vpop.f32.mrf.mxu0
    %v1169 = vadd.f32 %v825, %v1168
    %1170 = vmatprep.mubr.bf16.mxu0 %v783
    %1171 = vmatmul.mubr.bf16.gmra.mxu0 %v782
    %v1172 = vpop.f32.mrf.mxu0
    %v1173 = vadd.f32 %v821, %v1172
    %v1174 = vpop.f32.mrf.mxu0
    %v1175 = vadd.f32 %v825, %v1174
    %v1176 = vpop.f32.mrf.mxu0
    %v1177 = vadd.f32 %v821, %v1176
    %v1178 = vpop.f32.mrf.mxu0
    %v1179 = vadd.f32 %v825, %v1178
    %1180 = vdwg.mxu0
    %v1181 = vpack.c.bf16 %v1027, %v1023
    %v1182 = vpack.c.bf16 %v1029, %v1025
    %v1183 = vpack.c.bf16 %v1037, %v1033
    %v1184 = vpack.c.bf16 %v1039, %v1035
    %v1185 = vpack.c.bf16 %v1047, %v1043
    %v1186 = vpack.c.bf16 %v1049, %v1045
    %v1187 = vpack.c.bf16 %v1057, %v1053
    %v1188 = vpack.c.bf16 %v1059, %v1055
    %v1189 = vpack.c.bf16 %v1067, %v1063
    %v1190 = vpack.c.bf16 %v1069, %v1065
    %v1191 = vpack.c.bf16 %v1077, %v1073
    %v1192 = vpack.c.bf16 %v1079, %v1075
    %v1193 = vpack.c.bf16 %v1087, %v1083
    %v1194 = vpack.c.bf16 %v1089, %v1085
    %v1195 = vpack.c.bf16 %v1097, %v1093
    %v1196 = vpack.c.bf16 %v1099, %v1095
    %v1197 = vpack.c.bf16 %v1107, %v1103
    %v1198 = vpack.c.bf16 %v1109, %v1105
    %v1199 = vpack.c.bf16 %v1117, %v1113
    %v1200 = vpack.c.bf16 %v1119, %v1115
    %v1201 = vpack.c.bf16 %v1127, %v1123
    %v1202 = vpack.c.bf16 %v1129, %v1125
    %v1203 = vpack.c.bf16 %v1137, %v1133
    %v1204 = vpack.c.bf16 %v1139, %v1135
    %v1205 = vpack.c.bf16 %v1147, %v1143
    %v1206 = vpack.c.bf16 %v1149, %v1145
    %v1207 = vpack.c.bf16 %v1157, %v1153
    %v1208 = vpack.c.bf16 %v1159, %v1155
    %v1209 = vpack.c.bf16 %v1167, %v1163
    %v1210 = vpack.c.bf16 %v1169, %v1165
    %v1211 = vpack.c.bf16 %v1177, %v1173
    %v1212 = vpack.c.bf16 %v1179, %v1175
    %v1213 = vxor.u32 %v1181, 2147516416
    %v1214 = vxor.u32 %v1182, 2147516416
    %v1215 = vxor.u32 %v1183, 2147516416
    %v1216 = vxor.u32 %v1184, 2147516416
    %v1217 = vxor.u32 %v1185, 2147516416
    %v1218 = vxor.u32 %v1186, 2147516416
    %v1219 = vxor.u32 %v1187, 2147516416
    %v1220 = vxor.u32 %v1188, 2147516416
    %v1221 = vxor.u32 %v1189, 2147516416
    %v1222 = vxor.u32 %v1190, 2147516416
    %v1223 = vxor.u32 %v1191, 2147516416
    %v1224 = vxor.u32 %v1192, 2147516416
    %v1225 = vxor.u32 %v1193, 2147516416
    %v1226 = vxor.u32 %v1194, 2147516416
    %v1227 = vxor.u32 %v1195, 2147516416
    %v1228 = vxor.u32 %v1196, 2147516416
    %v1229 = vxor.u32 %v1197, 2147516416
    %v1230 = vxor.u32 %v1198, 2147516416
    %v1231 = vxor.u32 %v1199, 2147516416
    %v1232 = vxor.u32 %v1200, 2147516416
    %v1233 = vxor.u32 %v1201, 2147516416
    %v1234 = vxor.u32 %v1202, 2147516416
    %v1235 = vxor.u32 %v1203, 2147516416
    %v1236 = vxor.u32 %v1204, 2147516416
    %v1237 = vxor.u32 %v1205, 2147516416
    %v1238 = vxor.u32 %v1206, 2147516416
    %v1239 = vxor.u32 %v1207, 2147516416
    %v1240 = vxor.u32 %v1208, 2147516416
    %v1241 = vxor.u32 %v1209, 2147516416
    %v1242 = vxor.u32 %v1210, 2147516416
    %v1243 = vxor.u32 %v1211, 2147516416
    %v1244 = vxor.u32 %v1212, 2147516416
    %v1246 = vmul.bf16 %v1213, 1069105081
    %v1247 = vpow.bf16.pop %v1246
    %v1249 = vmul.bf16 %v1214, 1069105081
    %v1250 = vpow.bf16.pop %v1249
    %v1252 = vmul.bf16 %v1215, 1069105081
    %v1253 = vpow.bf16.pop %v1252
    %v1255 = vmul.bf16 %v1216, 1069105081
    %v1256 = vpow.bf16.pop %v1255
    %v1258 = vmul.bf16 %v1217, 1069105081
    %v1259 = vpow.bf16.pop %v1258
    %v1261 = vmul.bf16 %v1218, 1069105081
    %v1262 = vpow.bf16.pop %v1261
    %v1264 = vmul.bf16 %v1219, 1069105081
    %v1265 = vpow.bf16.pop %v1264
    %v1267 = vmul.bf16 %v1220, 1069105081
    %v1268 = vpow.bf16.pop %v1267
    %v1270 = vmul.bf16 %v1221, 1069105081
    %v1271 = vpow.bf16.pop %v1270
    %v1273 = vmul.bf16 %v1222, 1069105081
    %v1274 = vpow.bf16.pop %v1273
    %v1276 = vmul.bf16 %v1223, 1069105081
    %v1277 = vpow.bf16.pop %v1276
    %v1279 = vmul.bf16 %v1224, 1069105081
    %v1280 = vpow.bf16.pop %v1279
    %v1282 = vmul.bf16 %v1225, 1069105081
    %v1283 = vpow.bf16.pop %v1282
    %v1285 = vmul.bf16 %v1226, 1069105081
    %v1286 = vpow.bf16.pop %v1285
    %v1288 = vmul.bf16 %v1227, 1069105081
    %v1289 = vpow.bf16.pop %v1288
    %v1291 = vmul.bf16 %v1228, 1069105081
    %v1292 = vpow.bf16.pop %v1291
    %v1294 = vmul.bf16 %v1229, 1069105081
    %v1295 = vpow.bf16.pop %v1294
    %v1297 = vmul.bf16 %v1230, 1069105081
    %v1298 = vpow.bf16.pop %v1297
    %v1300 = vmul.bf16 %v1231, 1069105081
    %v1301 = vpow.bf16.pop %v1300
    %v1303 = vmul.bf16 %v1232, 1069105081
    %v1304 = vpow.bf16.pop %v1303
    %v1306 = vmul.bf16 %v1233, 1069105081
    %v1307 = vpow.bf16.pop %v1306
    %v1309 = vmul.bf16 %v1234, 1069105081
    %v1310 = vpow.bf16.pop %v1309
    %v1312 = vmul.bf16 %v1235, 1069105081
    %v1313 = vpow.bf16.pop %v1312
    %v1315 = vmul.bf16 %v1236, 1069105081
    %v1316 = vpow.bf16.pop %v1315
    %v1318 = vmul.bf16 %v1237, 1069105081
    %v1319 = vpow.bf16.pop %v1318
    %v1321 = vmul.bf16 %v1238, 1069105081
    %v1322 = vpow.bf16.pop %v1321
    %v1324 = vmul.bf16 %v1239, 1069105081
    %v1325 = vpow.bf16.pop %v1324
    %v1327 = vmul.bf16 %v1240, 1069105081
    %v1328 = vpow.bf16.pop %v1327
    %v1330 = vmul.bf16 %v1241, 1069105081
    %v1331 = vpow.bf16.pop %v1330
    %v1333 = vmul.bf16 %v1242, 1069105081
    %v1334 = vpow.bf16.pop %v1333
    %v1336 = vmul.bf16 %v1243, 1069105081
    %v1337 = vpow.bf16.pop %v1336
    %v1339 = vmul.bf16 %v1244, 1069105081
    %v1340 = vpow.bf16.pop %v1339
    %v1341 = vadd.bf16 %v1247, 1065369472
    %v1342 = vadd.bf16 %v1250, 1065369472
    %v1343 = vadd.bf16 %v1253, 1065369472
    %v1344 = vadd.bf16 %v1256, 1065369472
    %v1345 = vadd.bf16 %v1259, 1065369472
    %v1346 = vadd.bf16 %v1262, 1065369472
    %v1347 = vadd.bf16 %v1265, 1065369472
    %v1348 = vadd.bf16 %v1268, 1065369472
    %v1349 = vadd.bf16 %v1271, 1065369472
    %v1350 = vadd.bf16 %v1274, 1065369472
    %v1351 = vadd.bf16 %v1277, 1065369472
    %v1352 = vadd.bf16 %v1280, 1065369472
    %v1353 = vadd.bf16 %v1283, 1065369472
    %v1354 = vadd.bf16 %v1286, 1065369472
    %v1355 = vadd.bf16 %v1289, 1065369472
    %v1356 = vadd.bf16 %v1292, 1065369472
    %v1357 = vadd.bf16 %v1295, 1065369472
    %v1358 = vadd.bf16 %v1298, 1065369472
    %v1359 = vadd.bf16 %v1301, 1065369472
    %v1360 = vadd.bf16 %v1304, 1065369472
    %v1361 = vadd.bf16 %v1307, 1065369472
    %v1362 = vadd.bf16 %v1310, 1065369472
    %v1363 = vadd.bf16 %v1313, 1065369472
    %v1364 = vadd.bf16 %v1316, 1065369472
    %v1365 = vadd.bf16 %v1319, 1065369472
    %v1366 = vadd.bf16 %v1322, 1065369472
    %v1367 = vadd.bf16 %v1325, 1065369472
    %v1368 = vadd.bf16 %v1328, 1065369472
    %v1369 = vadd.bf16 %v1331, 1065369472
    %v1370 = vadd.bf16 %v1334, 1065369472
    %v1371 = vadd.bf16 %v1337, 1065369472
    %v1372 = vadd.bf16 %v1340, 1065369472
    %v1373 = vrcp.bf16.pop %v1341
    %v1374 = vmul.bf16 1065369472, %v1373
    %v1375 = vrcp.bf16.pop %v1342
    %v1376 = vmul.bf16 1065369472, %v1375
    %v1377 = vrcp.bf16.pop %v1343
    %v1378 = vmul.bf16 1065369472, %v1377
    %v1379 = vrcp.bf16.pop %v1344
    %v1380 = vmul.bf16 1065369472, %v1379
    %v1381 = vrcp.bf16.pop %v1345
    %v1382 = vmul.bf16 1065369472, %v1381
    %v1383 = vrcp.bf16.pop %v1346
    %v1384 = vmul.bf16 1065369472, %v1383
    %v1385 = vrcp.bf16.pop %v1347
    %v1386 = vmul.bf16 1065369472, %v1385
    %v1387 = vrcp.bf16.pop %v1348
    %v1388 = vmul.bf16 1065369472, %v1387
    %v1389 = vrcp.bf16.pop %v1349
    %v1390 = vmul.bf16 1065369472, %v1389
    %v1391 = vrcp.bf16.pop %v1350
    %v1392 = vmul.bf16 1065369472, %v1391
    %v1393 = vrcp.bf16.pop %v1351
    %v1394 = vmul.bf16 1065369472, %v1393
    %v1395 = vrcp.bf16.pop %v1352
    %v1396 = vmul.bf16 1065369472, %v1395
    %v1397 = vrcp.bf16.pop %v1353
    %v1398 = vmul.bf16 1065369472, %v1397
    %v1399 = vrcp.bf16.pop %v1354
    %v1400 = vmul.bf16 1065369472, %v1399
    %v1401 = vrcp.bf16.pop %v1355
    %v1402 = vmul.bf16 1065369472, %v1401
    %v1403 = vrcp.bf16.pop %v1356
    %v1404 = vmul.bf16 1065369472, %v1403
    %v1405 = vrcp.bf16.pop %v1357
    %v1406 = vmul.bf16 1065369472, %v1405
    %v1407 = vrcp.bf16.pop %v1358
    %v1408 = vmul.bf16 1065369472, %v1407
    %v1409 = vrcp.bf16.pop %v1359
    %v1410 = vmul.bf16 1065369472, %v1409
    %v1411 = vrcp.bf16.pop %v1360
    %v1412 = vmul.bf16 1065369472, %v1411
    %v1413 = vrcp.bf16.pop %v1361
    %v1414 = vmul.bf16 1065369472, %v1413
    %v1415 = vrcp.bf16.pop %v1362
    %v1416 = vmul.bf16 1065369472, %v1415
    %v1417 = vrcp.bf16.pop %v1363
    %v1418 = vmul.bf16 1065369472, %v1417
    %v1419 = vrcp.bf16.pop %v1364
    %v1420 = vmul.bf16 1065369472, %v1419
    %v1421 = vrcp.bf16.pop %v1365
    %v1422 = vmul.bf16 1065369472, %v1421
    %v1423 = vrcp.bf16.pop %v1366
    %v1424 = vmul.bf16 1065369472, %v1423
    %v1425 = vrcp.bf16.pop %v1367
    %v1426 = vmul.bf16 1065369472, %v1425
    %v1427 = vrcp.bf16.pop %v1368
    %v1428 = vmul.bf16 1065369472, %v1427
    %v1429 = vrcp.bf16.pop %v1369
    %v1430 = vmul.bf16 1065369472, %v1429
    %v1431 = vrcp.bf16.pop %v1370
    %v1432 = vmul.bf16 1065369472, %v1431
    %v1433 = vrcp.bf16.pop %v1371
    %v1434 = vmul.bf16 1065369472, %v1433
    %v1435 = vrcp.bf16.pop %v1372
    %v1436 = vmul.bf16 1065369472, %v1435
    %v1437 = vmul.bf16 %v1181, %v1374
    %v1438 = vmul.bf16 %v1182, %v1376
    %v1439 = vmul.bf16 %v1183, %v1378
    %v1440 = vmul.bf16 %v1184, %v1380
    %v1441 = vmul.bf16 %v1185, %v1382
    %v1442 = vmul.bf16 %v1186, %v1384
    %v1443 = vmul.bf16 %v1187, %v1386
    %v1444 = vmul.bf16 %v1188, %v1388
    %v1445 = vmul.bf16 %v1189, %v1390
    %v1446 = vmul.bf16 %v1190, %v1392
    %v1447 = vmul.bf16 %v1191, %v1394
    %v1448 = vmul.bf16 %v1192, %v1396
    %v1449 = vmul.bf16 %v1193, %v1398
    %v1450 = vmul.bf16 %v1194, %v1400
    %v1451 = vmul.bf16 %v1195, %v1402
    %v1452 = vmul.bf16 %v1196, %v1404
    %v1453 = vmul.bf16 %v1197, %v1406
    %v1454 = vmul.bf16 %v1198, %v1408
    %v1455 = vmul.bf16 %v1199, %v1410
    %v1456 = vmul.bf16 %v1200, %v1412
    %v1457 = vmul.bf16 %v1201, %v1414
    %v1458 = vmul.bf16 %v1202, %v1416
    %v1459 = vmul.bf16 %v1203, %v1418
    %v1460 = vmul.bf16 %v1204, %v1420
    %v1461 = vmul.bf16 %v1205, %v1422
    %v1462 = vmul.bf16 %v1206, %v1424
    %v1463 = vmul.bf16 %v1207, %v1426
    %v1464 = vmul.bf16 %v1208, %v1428
    %v1465 = vmul.bf16 %v1209, %v1430
    %v1466 = vmul.bf16 %v1210, %v1432
    %v1467 = vmul.bf16 %v1211, %v1434
    %v1468 = vmul.bf16 %v1212, %v1436
    %v1469 = vld [vmem:[#allocation2] sm:$0xff]
    %v1470 = vld [vmem:[#allocation2 + $0x8] sm:$0xff]
    %v1471 = vld [vmem:[#allocation2 + $0x10] sm:$0xff]
    %v1472 = vld [vmem:[#allocation2 + $0x18] sm:$0xff]
    %v1473 = vld [vmem:[#allocation2 + $0x20] sm:$0xff]
    %v1474 = vld [vmem:[#allocation2 + $0x28] sm:$0xff]
    %v1475 = vld [vmem:[#allocation2 + $0x30] sm:$0xff]
    %v1476 = vld [vmem:[#allocation2 + $0x38] sm:$0xff]
    %v1477 = vld [vmem:[#allocation2 + $0x40] sm:$0xff]
    %v1478 = vld [vmem:[#allocation2 + $0x48] sm:$0xff]
    %v1479 = vld [vmem:[#allocation2 + $0x50] sm:$0xff]
    %v1480 = vld [vmem:[#allocation2 + $0x58] sm:$0xff]
    %v1481 = vld [vmem:[#allocation2 + $0x60] sm:$0xff]
    %v1482 = vld [vmem:[#allocation2 + $0x68] sm:$0xff]
    %v1483 = vld [vmem:[#allocation2 + $0x70] sm:$0xff]
    %v1484 = vld [vmem:[#allocation2 + $0x78] sm:$0xff]
    %v1485 = vld [vmem:[#allocation2 + $0x80] sm:$0xff]
    %v1486 = vld [vmem:[#allocation2 + $0x88] sm:$0xff]
    %v1487 = vld [vmem:[#allocation2 + $0x90] sm:$0xff]
    %v1488 = vld [vmem:[#allocation2 + $0x98] sm:$0xff]
    %v1489 = vld [vmem:[#allocation2 + $0xa0] sm:$0xff]
    %v1490 = vld [vmem:[#allocation2 + $0xa8] sm:$0xff]
    %v1491 = vld [vmem:[#allocation2 + $0xb0] sm:$0xff]
    %v1492 = vld [vmem:[#allocation2 + $0xb8] sm:$0xff]
    %v1493 = vld [vmem:[#allocation2 + $0xc0] sm:$0xff]
    %v1494 = vld [vmem:[#allocation2 + $0xc8] sm:$0xff]
    %v1495 = vld [vmem:[#allocation2 + $0xd0] sm:$0xff]
    %v1496 = vld [vmem:[#allocation2 + $0xd8] sm:$0xff]
    %v1497 = vld [vmem:[#allocation2 + $0xe0] sm:$0xff]
    %v1498 = vld [vmem:[#allocation2 + $0xe8] sm:$0xff]
    %v1499 = vld [vmem:[#allocation2 + $0xf0] sm:$0xff]
    %v1500 = vld [vmem:[#allocation2 + $0xf8] sm:$0xff]
    %v1501 = vld [vmem:[%s6] sm:$0x3]
    %v1503 = vlaneseq
    %v1504 = vshrl.u32 %v1503, 7
    %v1505 = vsub.s32 0, %v1504
    %v1506 = vrot.slane %v1501, %v1505
    %v1507 = vlaneseq
    %v1508 = vshrl.u32 %v1507, 7
    %v1509 = vsub.s32 1, %v1508
    %v1510 = vrot.slane %v1501, %v1509
    %v1545 = vunpack.c.l.b16 %v1469
    %v1546 = vunpack.c.h.b16 %v1469
    %v1547 = vunpack.c.l.b16 %v1470
    %v1548 = vunpack.c.h.b16 %v1470
    %v1549 = vunpack.c.l.b16 %v1471
    %v1550 = vunpack.c.h.b16 %v1471
    %v1551 = vunpack.c.l.b16 %v1472
    %v1552 = vunpack.c.h.b16 %v1472
    %v1553 = vunpack.c.l.b16 %v1473
    %v1554 = vunpack.c.h.b16 %v1473
    %v1555 = vunpack.c.l.b16 %v1474
    %v1556 = vunpack.c.h.b16 %v1474
    %v1557 = vunpack.c.l.b16 %v1475
    %v1558 = vunpack.c.h.b16 %v1475
    %v1559 = vunpack.c.l.b16 %v1476
    %v1560 = vunpack.c.h.b16 %v1476
    %v1561 = vunpack.c.l.b16 %v1477
    %v1562 = vunpack.c.h.b16 %v1477
    %v1563 = vunpack.c.l.b16 %v1478
    %v1564 = vunpack.c.h.b16 %v1478
    %v1565 = vunpack.c.l.b16 %v1479
    %v1566 = vunpack.c.h.b16 %v1479
    %v1567 = vunpack.c.l.b16 %v1480
    %v1568 = vunpack.c.h.b16 %v1480
    %v1569 = vunpack.c.l.b16 %v1481
    %v1570 = vunpack.c.h.b16 %v1481
    %v1571 = vunpack.c.l.b16 %v1482
    %v1572 = vunpack.c.h.b16 %v1482
    %v1573 = vunpack.c.l.b16 %v1483
    %v1574 = vunpack.c.h.b16 %v1483
    %v1575 = vunpack.c.l.b16 %v1484
    %v1576 = vunpack.c.h.b16 %v1484
    %v1577 = vunpack.c.l.b16 %v1485
    %v1578 = vunpack.c.h.b16 %v1485
    %v1579 = vunpack.c.l.b16 %v1486
    %v1580 = vunpack.c.h.b16 %v1486
    %v1581 = vunpack.c.l.b16 %v1487
    %v1582 = vunpack.c.h.b16 %v1487
    %v1583 = vunpack.c.l.b16 %v1488
    %v1584 = vunpack.c.h.b16 %v1488
    %v1585 = vunpack.c.l.b16 %v1489
    %v1586 = vunpack.c.h.b16 %v1489
    %v1587 = vunpack.c.l.b16 %v1490
    %v1588 = vunpack.c.h.b16 %v1490
    %v1589 = vunpack.c.l.b16 %v1491
    %v1590 = vunpack.c.h.b16 %v1491
    %v1591 = vunpack.c.l.b16 %v1492
    %v1592 = vunpack.c.h.b16 %v1492
    %v1593 = vunpack.c.l.b16 %v1493
    %v1594 = vunpack.c.h.b16 %v1493
    %v1595 = vunpack.c.l.b16 %v1494
    %v1596 = vunpack.c.h.b16 %v1494
    %v1597 = vunpack.c.l.b16 %v1495
    %v1598 = vunpack.c.h.b16 %v1495
    %v1599 = vunpack.c.l.b16 %v1496
    %v1600 = vunpack.c.h.b16 %v1496
    %v1601 = vunpack.c.l.b16 %v1497
    %v1602 = vunpack.c.h.b16 %v1497
    %v1603 = vunpack.c.l.b16 %v1498
    %v1604 = vunpack.c.h.b16 %v1498
    %v1605 = vunpack.c.l.b16 %v1499
    %v1606 = vunpack.c.h.b16 %v1499
    %v1607 = vunpack.c.l.b16 %v1500
    %v1608 = vunpack.c.h.b16 %v1500
    %v1609 = vpack.c.b16 %v1547, %v1545
    %v1610 = vpack.c.b16 %v1548, %v1546
    %v1611 = vpack.c.b16 %v1551, %v1549
    %v1612 = vpack.c.b16 %v1552, %v1550
    %v1613 = vpack.c.b16 %v1555, %v1553
    %v1614 = vpack.c.b16 %v1556, %v1554
    %v1615 = vpack.c.b16 %v1559, %v1557
    %v1616 = vpack.c.b16 %v1560, %v1558
    %v1617 = vpack.c.b16 %v1563, %v1561
    %v1618 = vpack.c.b16 %v1564, %v1562
    %v1619 = vpack.c.b16 %v1567, %v1565
    %v1620 = vpack.c.b16 %v1568, %v1566
    %v1621 = vpack.c.b16 %v1571, %v1569
    %v1622 = vpack.c.b16 %v1572, %v1570
    %v1623 = vpack.c.b16 %v1575, %v1573
    %v1624 = vpack.c.b16 %v1576, %v1574
    %v1625 = vpack.c.b16 %v1579, %v1577
    %v1626 = vpack.c.b16 %v1580, %v1578
    %v1627 = vpack.c.b16 %v1583, %v1581
    %v1628 = vpack.c.b16 %v1584, %v1582
    %v1629 = vpack.c.b16 %v1587, %v1585
    %v1630 = vpack.c.b16 %v1588, %v1586
    %v1631 = vpack.c.b16 %v1591, %v1589
    %v1632 = vpack.c.b16 %v1592, %v1590
    %v1633 = vpack.c.b16 %v1595, %v1593
    %v1634 = vpack.c.b16 %v1596, %v1594
    %v1635 = vpack.c.b16 %v1599, %v1597
    %v1636 = vpack.c.b16 %v1600, %v1598
    %v1637 = vpack.c.b16 %v1603, %v1601
    %v1638 = vpack.c.b16 %v1604, %v1602
    %v1639 = vpack.c.b16 %v1607, %v1605
    %v1640 = vpack.c.b16 %v1608, %v1606
    %1673 = vmatprep.subr.bf16.mxu0 %v1624
    %1674 = vmatpush1.bf16.msra.mxu0 %v1623
    %1675 = vmatprep.subr.bf16.mxu0 %v1622
    %1676 = vmatpush1.bf16.msra.mxu0 %v1621
    %1677 = vmatprep.subr.bf16.mxu0 %v1620
    %1678 = vmatpush1.bf16.msra.mxu0 %v1619
    %1679 = vmatprep.subr.bf16.mxu0 %v1618
    %1680 = vmatpush1.bf16.msra.mxu0 %v1617
    %1681 = vmatprep.subr.bf16.mxu0 %v1616
    %1682 = vmatpush1.bf16.msra.mxu0 %v1615
    %1683 = vmatprep.subr.bf16.mxu0 %v1614
    %1684 = vmatpush1.bf16.msra.mxu0 %v1613
    %1685 = vmatprep.subr.bf16.mxu0 %v1612
    %1686 = vmatpush1.bf16.msra.mxu0 %v1611
    %1687 = vmatprep.subr.bf16.mxu0 %v1610
    %1688 = vmatpush1.bf16.msra.mxu0 %v1609
    %1689 = vmatprep.subr.bf16.mxu0 %v1640
    %1690 = vmatpush2.bf16.msra.mxu0 %v1639
    %1691 = vmatprep.subr.bf16.mxu0 %v1638
    %1692 = vmatpush2.bf16.msra.mxu0 %v1637
    %1693 = vmatprep.subr.bf16.mxu0 %v1636
    %1694 = vmatpush2.bf16.msra.mxu0 %v1635
    %1695 = vmatprep.subr.bf16.mxu0 %v1634
    %1696 = vmatpush2.bf16.msra.mxu0 %v1633
    %1697 = vmatprep.subr.bf16.mxu0 %v1632
    %1698 = vmatpush2.bf16.msra.mxu0 %v1631
    %1699 = vmatprep.subr.bf16.mxu0 %v1630
    %1700 = vmatpush2.bf16.msra.mxu0 %v1629
    %1701 = vmatprep.subr.bf16.mxu0 %v1628
    %1702 = vmatpush2.bf16.msra.mxu0 %v1627
    %1703 = vmatprep.subr.bf16.mxu0 %v1626
    %1704 = vmatpush2.bf16.msra.mxu0 %v1625
    %1705 = vmatprep.mubr.bf16.mxu0 %v1438
    %1706 = vmatmul.mubr.bf16.gmra.mxu0 %v1437
    %v1707 = vpop.f32.mrf.mxu0
    %v1708 = vadd.f32 %v1506, %v1707
    %v1709 = vpop.f32.mrf.mxu0
    %v1710 = vadd.f32 %v1510, %v1709
    %v1711 = vpop.f32.mrf.mxu0
    %v1712 = vadd.f32 %v1506, %v1711
    %v1713 = vpop.f32.mrf.mxu0
    %v1714 = vadd.f32 %v1510, %v1713
    %1715 = vmatprep.mubr.bf16.mxu0 %v1440
    %1716 = vmatmul.mubr.bf16.gmra.mxu0 %v1439
    %v1717 = vpop.f32.mrf.mxu0
    %v1718 = vadd.f32 %v1506, %v1717
    %v1719 = vpop.f32.mrf.mxu0
    %v1720 = vadd.f32 %v1510, %v1719
    %v1721 = vpop.f32.mrf.mxu0
    %v1722 = vadd.f32 %v1506, %v1721
    %v1723 = vpop.f32.mrf.mxu0
    %v1724 = vadd.f32 %v1510, %v1723
    %1725 = vmatprep.mubr.bf16.mxu0 %v1442
    %1726 = vmatmul.mubr.bf16.gmra.mxu0 %v1441
    %v1727 = vpop.f32.mrf.mxu0
    %v1728 = vadd.f32 %v1506, %v1727
    %v1729 = vpop.f32.mrf.mxu0
    %v1730 = vadd.f32 %v1510, %v1729
    %v1731 = vpop.f32.mrf.mxu0
    %v1732 = vadd.f32 %v1506, %v1731
    %v1733 = vpop.f32.mrf.mxu0
    %v1734 = vadd.f32 %v1510, %v1733
    %1735 = vmatprep.mubr.bf16.mxu0 %v1444
    %1736 = vmatmul.mubr.bf16.gmra.mxu0 %v1443
    %v1737 = vpop.f32.mrf.mxu0
    %v1738 = vadd.f32 %v1506, %v1737
    %v1739 = vpop.f32.mrf.mxu0
    %v1740 = vadd.f32 %v1510, %v1739
    %v1741 = vpop.f32.mrf.mxu0
    %v1742 = vadd.f32 %v1506, %v1741
    %v1743 = vpop.f32.mrf.mxu0
    %v1744 = vadd.f32 %v1510, %v1743
    %1745 = vmatprep.mubr.bf16.mxu0 %v1446
    %1746 = vmatmul.mubr.bf16.gmra.mxu0 %v1445
    %v1747 = vpop.f32.mrf.mxu0
    %v1748 = vadd.f32 %v1506, %v1747
    %v1749 = vpop.f32.mrf.mxu0
    %v1750 = vadd.f32 %v1510, %v1749
    %v1751 = vpop.f32.mrf.mxu0
    %v1752 = vadd.f32 %v1506, %v1751
    %v1753 = vpop.f32.mrf.mxu0
    %v1754 = vadd.f32 %v1510, %v1753
    %1755 = vmatprep.mubr.bf16.mxu0 %v1448
    %1756 = vmatmul.mubr.bf16.gmra.mxu0 %v1447
    %v1757 = vpop.f32.mrf.mxu0
    %v1758 = vadd.f32 %v1506, %v1757
    %v1759 = vpop.f32.mrf.mxu0
    %v1760 = vadd.f32 %v1510, %v1759
    %v1761 = vpop.f32.mrf.mxu0
    %v1762 = vadd.f32 %v1506, %v1761
    %v1763 = vpop.f32.mrf.mxu0
    %v1764 = vadd.f32 %v1510, %v1763
    %1765 = vmatprep.mubr.bf16.mxu0 %v1450
    %1766 = vmatmul.mubr.bf16.gmra.mxu0 %v1449
    %v1767 = vpop.f32.mrf.mxu0
    %v1768 = vadd.f32 %v1506, %v1767
    %v1769 = vpop.f32.mrf.mxu0
    %v1770 = vadd.f32 %v1510, %v1769
    %v1771 = vpop.f32.mrf.mxu0
    %v1772 = vadd.f32 %v1506, %v1771
    %v1773 = vpop.f32.mrf.mxu0
    %v1774 = vadd.f32 %v1510, %v1773
    %1775 = vmatprep.mubr.bf16.mxu0 %v1452
    %1776 = vmatmul.mubr.bf16.gmra.mxu0 %v1451
    %v1777 = vpop.f32.mrf.mxu0
    %v1778 = vadd.f32 %v1506, %v1777
    %v1779 = vpop.f32.mrf.mxu0
    %v1780 = vadd.f32 %v1510, %v1779
    %v1781 = vpop.f32.mrf.mxu0
    %v1782 = vadd.f32 %v1506, %v1781
    %v1783 = vpop.f32.mrf.mxu0
    %v1784 = vadd.f32 %v1510, %v1783
    %1785 = vmatprep.mubr.bf16.mxu0 %v1454
    %1786 = vmatmul.mubr.bf16.gmra.mxu0 %v1453
    %v1787 = vpop.f32.mrf.mxu0
    %v1788 = vadd.f32 %v1506, %v1787
    %v1789 = vpop.f32.mrf.mxu0
    %v1790 = vadd.f32 %v1510, %v1789
    %v1791 = vpop.f32.mrf.mxu0
    %v1792 = vadd.f32 %v1506, %v1791
    %v1793 = vpop.f32.mrf.mxu0
    %v1794 = vadd.f32 %v1510, %v1793
    %1795 = vmatprep.mubr.bf16.mxu0 %v1456
    %1796 = vmatmul.mubr.bf16.gmra.mxu0 %v1455
    %v1797 = vpop.f32.mrf.mxu0
    %v1798 = vadd.f32 %v1506, %v1797
    %v1799 = vpop.f32.mrf.mxu0
    %v1800 = vadd.f32 %v1510, %v1799
    %v1801 = vpop.f32.mrf.mxu0
    %v1802 = vadd.f32 %v1506, %v1801
    %v1803 = vpop.f32.mrf.mxu0
    %v1804 = vadd.f32 %v1510, %v1803
    %1805 = vmatprep.mubr.bf16.mxu0 %v1458
    %1806 = vmatmul.mubr.bf16.gmra.mxu0 %v1457
    %v1807 = vpop.f32.mrf.mxu0
    %v1808 = vadd.f32 %v1506, %v1807
    %v1809 = vpop.f32.mrf.mxu0
    %v1810 = vadd.f32 %v1510, %v1809
    %v1811 = vpop.f32.mrf.mxu0
    %v1812 = vadd.f32 %v1506, %v1811
    %v1813 = vpop.f32.mrf.mxu0
    %v1814 = vadd.f32 %v1510, %v1813
    %1815 = vmatprep.mubr.bf16.mxu0 %v1460
    %1816 = vmatmul.mubr.bf16.gmra.mxu0 %v1459
    %v1817 = vpop.f32.mrf.mxu0
    %v1818 = vadd.f32 %v1506, %v1817
    %v1819 = vpop.f32.mrf.mxu0
    %v1820 = vadd.f32 %v1510, %v1819
    %v1821 = vpop.f32.mrf.mxu0
    %v1822 = vadd.f32 %v1506, %v1821
    %v1823 = vpop.f32.mrf.mxu0
    %v1824 = vadd.f32 %v1510, %v1823
    %1825 = vmatprep.mubr.bf16.mxu0 %v1462
    %1826 = vmatmul.mubr.bf16.gmra.mxu0 %v1461
    %v1827 = vpop.f32.mrf.mxu0
    %v1828 = vadd.f32 %v1506, %v1827
    %v1829 = vpop.f32.mrf.mxu0
    %v1830 = vadd.f32 %v1510, %v1829
    %v1831 = vpop.f32.mrf.mxu0
    %v1832 = vadd.f32 %v1506, %v1831
    %v1833 = vpop.f32.mrf.mxu0
    %v1834 = vadd.f32 %v1510, %v1833
    %1835 = vmatprep.mubr.bf16.mxu0 %v1464
    %1836 = vmatmul.mubr.bf16.gmra.mxu0 %v1463
    %v1837 = vpop.f32.mrf.mxu0
    %v1838 = vadd.f32 %v1506, %v1837
    %v1839 = vpop.f32.mrf.mxu0
    %v1840 = vadd.f32 %v1510, %v1839
    %v1841 = vpop.f32.mrf.mxu0
    %v1842 = vadd.f32 %v1506, %v1841
    %v1843 = vpop.f32.mrf.mxu0
    %v1844 = vadd.f32 %v1510, %v1843
    %1845 = vmatprep.mubr.bf16.mxu0 %v1466
    %1846 = vmatmul.mubr.bf16.gmra.mxu0 %v1465
    %v1847 = vpop.f32.mrf.mxu0
    %v1848 = vadd.f32 %v1506, %v1847
    %v1849 = vpop.f32.mrf.mxu0
    %v1850 = vadd.f32 %v1510, %v1849
    %v1851 = vpop.f32.mrf.mxu0
    %v1852 = vadd.f32 %v1506, %v1851
    %v1853 = vpop.f32.mrf.mxu0
    %v1854 = vadd.f32 %v1510, %v1853
    %1855 = vmatprep.mubr.bf16.mxu0 %v1468
    %1856 = vmatmul.mubr.bf16.gmra.mxu0 %v1467
    %v1857 = vpop.f32.mrf.mxu0
    %v1858 = vadd.f32 %v1506, %v1857
    %v1859 = vpop.f32.mrf.mxu0
    %v1860 = vadd.f32 %v1510, %v1859
    %v1861 = vpop.f32.mrf.mxu0
    %v1862 = vadd.f32 %v1506, %v1861
    %v1863 = vpop.f32.mrf.mxu0
    %v1864 = vadd.f32 %v1510, %v1863
    %1865 = vdwg.mxu0
    %v1866 = vpack.c.bf16 %v1712, %v1708
    %v1867 = vpack.c.bf16 %v1714, %v1710
    %v1868 = vpack.c.bf16 %v1722, %v1718
    %v1869 = vpack.c.bf16 %v1724, %v1720
    %v1870 = vpack.c.bf16 %v1732, %v1728
    %v1871 = vpack.c.bf16 %v1734, %v1730
    %v1872 = vpack.c.bf16 %v1742, %v1738
    %v1873 = vpack.c.bf16 %v1744, %v1740
    %v1874 = vpack.c.bf16 %v1752, %v1748
    %v1875 = vpack.c.bf16 %v1754, %v1750
    %v1876 = vpack.c.bf16 %v1762, %v1758
    %v1877 = vpack.c.bf16 %v1764, %v1760
    %v1878 = vpack.c.bf16 %v1772, %v1768
    %v1879 = vpack.c.bf16 %v1774, %v1770
    %v1880 = vpack.c.bf16 %v1782, %v1778
    %v1881 = vpack.c.bf16 %v1784, %v1780
    %v1882 = vpack.c.bf16 %v1792, %v1788
    %v1883 = vpack.c.bf16 %v1794, %v1790
    %v1884 = vpack.c.bf16 %v1802, %v1798
    %v1885 = vpack.c.bf16 %v1804, %v1800
    %v1886 = vpack.c.bf16 %v1812, %v1808
    %v1887 = vpack.c.bf16 %v1814, %v1810
    %v1888 = vpack.c.bf16 %v1822, %v1818
    %v1889 = vpack.c.bf16 %v1824, %v1820
    %v1890 = vpack.c.bf16 %v1832, %v1828
    %v1891 = vpack.c.bf16 %v1834, %v1830
    %v1892 = vpack.c.bf16 %v1842, %v1838
    %v1893 = vpack.c.bf16 %v1844, %v1840
    %v1894 = vpack.c.bf16 %v1852, %v1848
    %v1895 = vpack.c.bf16 %v1854, %v1850
    %v1896 = vpack.c.bf16 %v1862, %v1858
    %v1897 = vpack.c.bf16 %v1864, %v1860
    %v1898 = vxor.u32 %v1866, 2147516416
    %v1899 = vxor.u32 %v1867, 2147516416
    %v1900 = vxor.u32 %v1868, 2147516416
    %v1901 = vxor.u32 %v1869, 2147516416
    %v1902 = vxor.u32 %v1870, 2147516416
    %v1903 = vxor.u32 %v1871, 2147516416
    %v1904 = vxor.u32 %v1872, 2147516416
    %v1905 = vxor.u32 %v1873, 2147516416
    %v1906 = vxor.u32 %v1874, 2147516416
    %v1907 = vxor.u32 %v1875, 2147516416
    %v1908 = vxor.u32 %v1876, 2147516416
    %v1909 = vxor.u32 %v1877, 2147516416
    %v1910 = vxor.u32 %v1878, 2147516416
    %v1911 = vxor.u32 %v1879, 2147516416
    %v1912 = vxor.u32 %v1880, 2147516416
    %v1913 = vxor.u32 %v1881, 2147516416
    %v1914 = vxor.u32 %v1882, 2147516416
    %v1915 = vxor.u32 %v1883, 2147516416
    %v1916 = vxor.u32 %v1884, 2147516416
    %v1917 = vxor.u32 %v1885, 2147516416
    %v1918 = vxor.u32 %v1886, 2147516416
    %v1919 = vxor.u32 %v1887, 2147516416
    %v1920 = vxor.u32 %v1888, 2147516416
    %v1921 = vxor.u32 %v1889, 2147516416
    %v1922 = vxor.u32 %v1890, 2147516416
    %v1923 = vxor.u32 %v1891, 2147516416
    %v1924 = vxor.u32 %v1892, 2147516416
    %v1925 = vxor.u32 %v1893, 2147516416
    %v1926 = vxor.u32 %v1894, 2147516416
    %v1927 = vxor.u32 %v1895, 2147516416
    %v1928 = vxor.u32 %v1896, 2147516416
    %v1929 = vxor.u32 %v1897, 2147516416
    %v1931 = vmul.bf16 %v1898, 1069105081
    %v1932 = vpow.bf16.pop %v1931
    %v1934 = vmul.bf16 %v1899, 1069105081
    %v1935 = vpow.bf16.pop %v1934
    %v1937 = vmul.bf16 %v1900, 1069105081
    %v1938 = vpow.bf16.pop %v1937
    %v1940 = vmul.bf16 %v1901, 1069105081
    %v1941 = vpow.bf16.pop %v1940
    %v1943 = vmul.bf16 %v1902, 1069105081
    %v1944 = vpow.bf16.pop %v1943
    %v1946 = vmul.bf16 %v1903, 1069105081
    %v1947 = vpow.bf16.pop %v1946
    %v1949 = vmul.bf16 %v1904, 1069105081
    %v1950 = vpow.bf16.pop %v1949
    %v1952 = vmul.bf16 %v1905, 1069105081
    %v1953 = vpow.bf16.pop %v1952
    %v1955 = vmul.bf16 %v1906, 1069105081
    %v1956 = vpow.bf16.pop %v1955
    %v1958 = vmul.bf16 %v1907, 1069105081
    %v1959 = vpow.bf16.pop %v1958
    %v1961 = vmul.bf16 %v1908, 1069105081
    %v1962 = vpow.bf16.pop %v1961
    %v1964 = vmul.bf16 %v1909, 1069105081
    %v1965 = vpow.bf16.pop %v1964
    %v1967 = vmul.bf16 %v1910, 1069105081
    %v1968 = vpow.bf16.pop %v1967
    %v1970 = vmul.bf16 %v1911, 1069105081
    %v1971 = vpow.bf16.pop %v1970
    %v1973 = vmul.bf16 %v1912, 1069105081
    %v1974 = vpow.bf16.pop %v1973
    %v1976 = vmul.bf16 %v1913, 1069105081
    %v1977 = vpow.bf16.pop %v1976
    %v1979 = vmul.bf16 %v1914, 1069105081
    %v1980 = vpow.bf16.pop %v1979
    %v1982 = vmul.bf16 %v1915, 1069105081
    %v1983 = vpow.bf16.pop %v1982
    %v1985 = vmul.bf16 %v1916, 1069105081
    %v1986 = vpow.bf16.pop %v1985
    %v1988 = vmul.bf16 %v1917, 1069105081
    %v1989 = vpow.bf16.pop %v1988
    %v1991 = vmul.bf16 %v1918, 1069105081
    %v1992 = vpow.bf16.pop %v1991
    %v1994 = vmul.bf16 %v1919, 1069105081
    %v1995 = vpow.bf16.pop %v1994
    %v1997 = vmul.bf16 %v1920, 1069105081
    %v1998 = vpow.bf16.pop %v1997
    %v2000 = vmul.bf16 %v1921, 1069105081
    %v2001 = vpow.bf16.pop %v2000
    %v2003 = vmul.bf16 %v1922, 1069105081
    %v2004 = vpow.bf16.pop %v2003
    %v2006 = vmul.bf16 %v1923, 1069105081
    %v2007 = vpow.bf16.pop %v2006
    %v2009 = vmul.bf16 %v1924, 1069105081
    %v2010 = vpow.bf16.pop %v2009
    %v2012 = vmul.bf16 %v1925, 1069105081
    %v2013 = vpow.bf16.pop %v2012
    %v2015 = vmul.bf16 %v1926, 1069105081
    %v2016 = vpow.bf16.pop %v2015
    %v2018 = vmul.bf16 %v1927, 1069105081
    %v2019 = vpow.bf16.pop %v2018
    %v2021 = vmul.bf16 %v1928, 1069105081
    %v2022 = vpow.bf16.pop %v2021
    %v2024 = vmul.bf16 %v1929, 1069105081
    %v2025 = vpow.bf16.pop %v2024
    %v2026 = vadd.bf16 %v1932, 1065369472
    %v2027 = vadd.bf16 %v1935, 1065369472
    %v2028 = vadd.bf16 %v1938, 1065369472
    %v2029 = vadd.bf16 %v1941, 1065369472
    %v2030 = vadd.bf16 %v1944, 1065369472
    %v2031 = vadd.bf16 %v1947, 1065369472
    %v2032 = vadd.bf16 %v1950, 1065369472
    %v2033 = vadd.bf16 %v1953, 1065369472
    %v2034 = vadd.bf16 %v1956, 1065369472
    %v2035 = vadd.bf16 %v1959, 1065369472
    %v2036 = vadd.bf16 %v1962, 1065369472
    %v2037 = vadd.bf16 %v1965, 1065369472
    %v2038 = vadd.bf16 %v1968, 1065369472
    %v2039 = vadd.bf16 %v1971, 1065369472
    %v2040 = vadd.bf16 %v1974, 1065369472
    %v2041 = vadd.bf16 %v1977, 1065369472
    %v2042 = vadd.bf16 %v1980, 1065369472
    %v2043 = vadd.bf16 %v1983, 1065369472
    %v2044 = vadd.bf16 %v1986, 1065369472
    %v2045 = vadd.bf16 %v1989, 1065369472
    %v2046 = vadd.bf16 %v1992, 1065369472
    %v2047 = vadd.bf16 %v1995, 1065369472
    %v2048 = vadd.bf16 %v1998, 1065369472
    %v2049 = vadd.bf16 %v2001, 1065369472
    %v2050 = vadd.bf16 %v2004, 1065369472
    %v2051 = vadd.bf16 %v2007, 1065369472
    %v2052 = vadd.bf16 %v2010, 1065369472
    %v2053 = vadd.bf16 %v2013, 1065369472
    %v2054 = vadd.bf16 %v2016, 1065369472
    %v2055 = vadd.bf16 %v2019, 1065369472
    %v2056 = vadd.bf16 %v2022, 1065369472
    %v2057 = vadd.bf16 %v2025, 1065369472
    %v2058 = vrcp.bf16.pop %v2026
    %v2059 = vmul.bf16 1065369472, %v2058
    %v2060 = vrcp.bf16.pop %v2027
    %v2061 = vmul.bf16 1065369472, %v2060
    %v2062 = vrcp.bf16.pop %v2028
    %v2063 = vmul.bf16 1065369472, %v2062
    %v2064 = vrcp.bf16.pop %v2029
    %v2065 = vmul.bf16 1065369472, %v2064
    %v2066 = vrcp.bf16.pop %v2030
    %v2067 = vmul.bf16 1065369472, %v2066
    %v2068 = vrcp.bf16.pop %v2031
    %v2069 = vmul.bf16 1065369472, %v2068
    %v2070 = vrcp.bf16.pop %v2032
    %v2071 = vmul.bf16 1065369472, %v2070
    %v2072 = vrcp.bf16.pop %v2033
    %v2073 = vmul.bf16 1065369472, %v2072
    %v2074 = vrcp.bf16.pop %v2034
    %v2075 = vmul.bf16 1065369472, %v2074
    %v2076 = vrcp.bf16.pop %v2035
    %v2077 = vmul.bf16 1065369472, %v2076
    %v2078 = vrcp.bf16.pop %v2036
    %v2079 = vmul.bf16 1065369472, %v2078
    %v2080 = vrcp.bf16.pop %v2037
    %v2081 = vmul.bf16 1065369472, %v2080
    %v2082 = vrcp.bf16.pop %v2038
    %v2083 = vmul.bf16 1065369472, %v2082
    %v2084 = vrcp.bf16.pop %v2039
    %v2085 = vmul.bf16 1065369472, %v2084
    %v2086 = vrcp.bf16.pop %v2040
    %v2087 = vmul.bf16 1065369472, %v2086
    %v2088 = vrcp.bf16.pop %v2041
    %v2089 = vmul.bf16 1065369472, %v2088
    %v2090 = vrcp.bf16.pop %v2042
    %v2091 = vmul.bf16 1065369472, %v2090
    %v2092 = vrcp.bf16.pop %v2043
    %v2093 = vmul.bf16 1065369472, %v2092
    %v2094 = vrcp.bf16.pop %v2044
    %v2095 = vmul.bf16 1065369472, %v2094
    %v2096 = vrcp.bf16.pop %v2045
    %v2097 = vmul.bf16 1065369472, %v2096
    %v2098 = vrcp.bf16.pop %v2046
    %v2099 = vmul.bf16 1065369472, %v2098
    %v2100 = vrcp.bf16.pop %v2047
    %v2101 = vmul.bf16 1065369472, %v2100
    %v2102 = vrcp.bf16.pop %v2048
    %v2103 = vmul.bf16 1065369472, %v2102
    %v2104 = vrcp.bf16.pop %v2049
    %v2105 = vmul.bf16 1065369472, %v2104
    %v2106 = vrcp.bf16.pop %v2050
    %v2107 = vmul.bf16 1065369472, %v2106
    %v2108 = vrcp.bf16.pop %v2051
    %v2109 = vmul.bf16 1065369472, %v2108
    %v2110 = vrcp.bf16.pop %v2052
    %v2111 = vmul.bf16 1065369472, %v2110
    %v2112 = vrcp.bf16.pop %v2053
    %v2113 = vmul.bf16 1065369472, %v2112
    %v2114 = vrcp.bf16.pop %v2054
    %v2115 = vmul.bf16 1065369472, %v2114
    %v2116 = vrcp.bf16.pop %v2055
    %v2117 = vmul.bf16 1065369472, %v2116
    %v2118 = vrcp.bf16.pop %v2056
    %v2119 = vmul.bf16 1065369472, %v2118
    %v2120 = vrcp.bf16.pop %v2057
    %v2121 = vmul.bf16 1065369472, %v2120
    %v2122 = vmul.bf16 %v1866, %v2059
    %v2123 = vmul.bf16 %v1867, %v2061
    %v2124 = vmul.bf16 %v1868, %v2063
    %v2125 = vmul.bf16 %v1869, %v2065
    %v2126 = vmul.bf16 %v1870, %v2067
    %v2127 = vmul.bf16 %v1871, %v2069
    %v2128 = vmul.bf16 %v1872, %v2071
    %v2129 = vmul.bf16 %v1873, %v2073
    %v2130 = vmul.bf16 %v1874, %v2075
    %v2131 = vmul.bf16 %v1875, %v2077
    %v2132 = vmul.bf16 %v1876, %v2079
    %v2133 = vmul.bf16 %v1877, %v2081
    %v2134 = vmul.bf16 %v1878, %v2083
    %v2135 = vmul.bf16 %v1879, %v2085
    %v2136 = vmul.bf16 %v1880, %v2087
    %v2137 = vmul.bf16 %v1881, %v2089
    %v2138 = vmul.bf16 %v1882, %v2091
    %v2139 = vmul.bf16 %v1883, %v2093
    %v2140 = vmul.bf16 %v1884, %v2095
    %v2141 = vmul.bf16 %v1885, %v2097
    %v2142 = vmul.bf16 %v1886, %v2099
    %v2143 = vmul.bf16 %v1887, %v2101
    %v2144 = vmul.bf16 %v1888, %v2103
    %v2145 = vmul.bf16 %v1889, %v2105
    %v2146 = vmul.bf16 %v1890, %v2107
    %v2147 = vmul.bf16 %v1891, %v2109
    %v2148 = vmul.bf16 %v1892, %v2111
    %v2149 = vmul.bf16 %v1893, %v2113
    %v2150 = vmul.bf16 %v1894, %v2115
    %v2151 = vmul.bf16 %v1895, %v2117
    %v2152 = vmul.bf16 %v1896, %v2119
    %v2153 = vmul.bf16 %v1897, %v2121
    %v2154 = vld [vmem:[#allocation5] sm:$0xff]
    %v2155 = vld [vmem:[#allocation5 + $0x8] sm:$0xff]
    %v2156 = vld [vmem:[#allocation5 + $0x10] sm:$0xff]
    %v2157 = vld [vmem:[#allocation5 + $0x18] sm:$0xff]
    %v2158 = vld [vmem:[#allocation5 + $0x20] sm:$0xff]
    %v2159 = vld [vmem:[#allocation5 + $0x28] sm:$0xff]
    %v2160 = vld [vmem:[#allocation5 + $0x30] sm:$0xff]
    %v2161 = vld [vmem:[#allocation5 + $0x38] sm:$0xff]
    %v2162 = vld [vmem:[#allocation5 + $0x40] sm:$0xff]
    %v2163 = vld [vmem:[#allocation5 + $0x48] sm:$0xff]
    %v2164 = vld [vmem:[#allocation5 + $0x50] sm:$0xff]
    %v2165 = vld [vmem:[#allocation5 + $0x58] sm:$0xff]
    %v2166 = vld [vmem:[#allocation5 + $0x60] sm:$0xff]
    %v2167 = vld [vmem:[#allocation5 + $0x68] sm:$0xff]
    %v2168 = vld [vmem:[#allocation5 + $0x70] sm:$0xff]
    %v2169 = vld [vmem:[#allocation5 + $0x78] sm:$0xff]
    %v2170 = vld [vmem:[#allocation5 + $0x80] sm:$0xff]
    %v2171 = vld [vmem:[#allocation5 + $0x88] sm:$0xff]
    %v2172 = vld [vmem:[#allocation5 + $0x90] sm:$0xff]
    %v2173 = vld [vmem:[#allocation5 + $0x98] sm:$0xff]
    %v2174 = vld [vmem:[#allocation5 + $0xa0] sm:$0xff]
    %v2175 = vld [vmem:[#allocation5 + $0xa8] sm:$0xff]
    %v2176 = vld [vmem:[#allocation5 + $0xb0] sm:$0xff]
    %v2177 = vld [vmem:[#allocation5 + $0xb8] sm:$0xff]
    %v2178 = vld [vmem:[#allocation5 + $0xc0] sm:$0xff]
    %v2179 = vld [vmem:[#allocation5 + $0xc8] sm:$0xff]
    %v2180 = vld [vmem:[#allocation5 + $0xd0] sm:$0xff]
    %v2181 = vld [vmem:[#allocation5 + $0xd8] sm:$0xff]
    %v2182 = vld [vmem:[#allocation5 + $0xe0] sm:$0xff]
    %v2183 = vld [vmem:[#allocation5 + $0xe8] sm:$0xff]
    %v2184 = vld [vmem:[#allocation5 + $0xf0] sm:$0xff]
    %v2185 = vld [vmem:[#allocation5 + $0xf8] sm:$0xff]
    %v2186 = vld [vmem:[%s8] sm:$0x3]
    %v2188 = vlaneseq
    %v2189 = vshrl.u32 %v2188, 7
    %v2190 = vsub.s32 0, %v2189
    %v2191 = vrot.slane %v2186, %v2190
    %v2192 = vlaneseq
    %v2193 = vshrl.u32 %v2192, 7
    %v2194 = vsub.s32 1, %v2193
    %v2195 = vrot.slane %v2186, %v2194
    %v2230 = vunpack.c.l.b16 %v2154
    %v2231 = vunpack.c.h.b16 %v2154
    %v2232 = vunpack.c.l.b16 %v2155
    %v2233 = vunpack.c.h.b16 %v2155
    %v2234 = vunpack.c.l.b16 %v2156
    %v2235 = vunpack.c.h.b16 %v2156
    %v2236 = vunpack.c.l.b16 %v2157
    %v2237 = vunpack.c.h.b16 %v2157
    %v2238 = vunpack.c.l.b16 %v2158
    %v2239 = vunpack.c.h.b16 %v2158
    %v2240 = vunpack.c.l.b16 %v2159
    %v2241 = vunpack.c.h.b16 %v2159
    %v2242 = vunpack.c.l.b16 %v2160
    %v2243 = vunpack.c.h.b16 %v2160
    %v2244 = vunpack.c.l.b16 %v2161
    %v2245 = vunpack.c.h.b16 %v2161
    %v2246 = vunpack.c.l.b16 %v2162
    %v2247 = vunpack.c.h.b16 %v2162
    %v2248 = vunpack.c.l.b16 %v2163
    %v2249 = vunpack.c.h.b16 %v2163
    %v2250 = vunpack.c.l.b16 %v2164
    %v2251 = vunpack.c.h.b16 %v2164
    %v2252 = vunpack.c.l.b16 %v2165
    %v2253 = vunpack.c.h.b16 %v2165
    %v2254 = vunpack.c.l.b16 %v2166
    %v2255 = vunpack.c.h.b16 %v2166
    %v2256 = vunpack.c.l.b16 %v2167
    %v2257 = vunpack.c.h.b16 %v2167
    %v2258 = vunpack.c.l.b16 %v2168
    %v2259 = vunpack.c.h.b16 %v2168
    %v2260 = vunpack.c.l.b16 %v2169
    %v2261 = vunpack.c.h.b16 %v2169
    %v2262 = vunpack.c.l.b16 %v2170
    %v2263 = vunpack.c.h.b16 %v2170
    %v2264 = vunpack.c.l.b16 %v2171
    %v2265 = vunpack.c.h.b16 %v2171
    %v2266 = vunpack.c.l.b16 %v2172
    %v2267 = vunpack.c.h.b16 %v2172
    %v2268 = vunpack.c.l.b16 %v2173
    %v2269 = vunpack.c.h.b16 %v2173
    %v2270 = vunpack.c.l.b16 %v2174
    %v2271 = vunpack.c.h.b16 %v2174
    %v2272 = vunpack.c.l.b16 %v2175
    %v2273 = vunpack.c.h.b16 %v2175
    %v2274 = vunpack.c.l.b16 %v2176
    %v2275 = vunpack.c.h.b16 %v2176
    %v2276 = vunpack.c.l.b16 %v2177
    %v2277 = vunpack.c.h.b16 %v2177
    %v2278 = vunpack.c.l.b16 %v2178
    %v2279 = vunpack.c.h.b16 %v2178
    %v2280 = vunpack.c.l.b16 %v2179
    %v2281 = vunpack.c.h.b16 %v2179
    %v2282 = vunpack.c.l.b16 %v2180
    %v2283 = vunpack.c.h.b16 %v2180
    %v2284 = vunpack.c.l.b16 %v2181
    %v2285 = vunpack.c.h.b16 %v2181
    %v2286 = vunpack.c.l.b16 %v2182
    %v2287 = vunpack.c.h.b16 %v2182
    %v2288 = vunpack.c.l.b16 %v2183
    %v2289 = vunpack.c.h.b16 %v2183
    %v2290 = vunpack.c.l.b16 %v2184
    %v2291 = vunpack.c.h.b16 %v2184
    %v2292 = vunpack.c.l.b16 %v2185
    %v2293 = vunpack.c.h.b16 %v2185
    %v2294 = vpack.c.b16 %v2232, %v2230
    %v2295 = vpack.c.b16 %v2233, %v2231
    %v2296 = vpack.c.b16 %v2236, %v2234
    %v2297 = vpack.c.b16 %v2237, %v2235
    %v2298 = vpack.c.b16 %v2240, %v2238
    %v2299 = vpack.c.b16 %v2241, %v2239
    %v2300 = vpack.c.b16 %v2244, %v2242
    %v2301 = vpack.c.b16 %v2245, %v2243
    %v2302 = vpack.c.b16 %v2248, %v2246
    %v2303 = vpack.c.b16 %v2249, %v2247
    %v2304 = vpack.c.b16 %v2252, %v2250
    %v2305 = vpack.c.b16 %v2253, %v2251
    %v2306 = vpack.c.b16 %v2256, %v2254
    %v2307 = vpack.c.b16 %v2257, %v2255
    %v2308 = vpack.c.b16 %v2260, %v2258
    %v2309 = vpack.c.b16 %v2261, %v2259
    %v2310 = vpack.c.b16 %v2264, %v2262
    %v2311 = vpack.c.b16 %v2265, %v2263
    %v2312 = vpack.c.b16 %v2268, %v2266
    %v2313 = vpack.c.b16 %v2269, %v2267
    %v2314 = vpack.c.b16 %v2272, %v2270
    %v2315 = vpack.c.b16 %v2273, %v2271
    %v2316 = vpack.c.b16 %v2276, %v2274
    %v2317 = vpack.c.b16 %v2277, %v2275
    %v2318 = vpack.c.b16 %v2280, %v2278
    %v2319 = vpack.c.b16 %v2281, %v2279
    %v2320 = vpack.c.b16 %v2284, %v2282
    %v2321 = vpack.c.b16 %v2285, %v2283
    %v2322 = vpack.c.b16 %v2288, %v2286
    %v2323 = vpack.c.b16 %v2289, %v2287
    %v2324 = vpack.c.b16 %v2292, %v2290
    %v2325 = vpack.c.b16 %v2293, %v2291
    %2358 = vmatprep.subr.bf16.mxu0 %v2309
    %2359 = vmatpush1.bf16.msra.mxu0 %v2308
    %2360 = vmatprep.subr.bf16.mxu0 %v2307
    %2361 = vmatpush1.bf16.msra.mxu0 %v2306
    %2362 = vmatprep.subr.bf16.mxu0 %v2305
    %2363 = vmatpush1.bf16.msra.mxu0 %v2304
    %2364 = vmatprep.subr.bf16.mxu0 %v2303
    %2365 = vmatpush1.bf16.msra.mxu0 %v2302
    %2366 = vmatprep.subr.bf16.mxu0 %v2301
    %2367 = vmatpush1.bf16.msra.mxu0 %v2300
    %2368 = vmatprep.subr.bf16.mxu0 %v2299
    %2369 = vmatpush1.bf16.msra.mxu0 %v2298
    %2370 = vmatprep.subr.bf16.mxu0 %v2297
    %2371 = vmatpush1.bf16.msra.mxu0 %v2296
    %2372 = vmatprep.subr.bf16.mxu0 %v2295
    %2373 = vmatpush1.bf16.msra.mxu0 %v2294
    %2374 = vmatprep.subr.bf16.mxu0 %v2325
    %2375 = vmatpush2.bf16.msra.mxu0 %v2324
    %2376 = vmatprep.subr.bf16.mxu0 %v2323
    %2377 = vmatpush2.bf16.msra.mxu0 %v2322
    %2378 = vmatprep.subr.bf16.mxu0 %v2321
    %2379 = vmatpush2.bf16.msra.mxu0 %v2320
    %2380 = vmatprep.subr.bf16.mxu0 %v2319
    %2381 = vmatpush2.bf16.msra.mxu0 %v2318
    %2382 = vmatprep.subr.bf16.mxu0 %v2317
    %2383 = vmatpush2.bf16.msra.mxu0 %v2316
    %2384 = vmatprep.subr.bf16.mxu0 %v2315
    %2385 = vmatpush2.bf16.msra.mxu0 %v2314
    %2386 = vmatprep.subr.bf16.mxu0 %v2313
    %2387 = vmatpush2.bf16.msra.mxu0 %v2312
    %2388 = vmatprep.subr.bf16.mxu0 %v2311
    %2389 = vmatpush2.bf16.msra.mxu0 %v2310
    %2390 = vmatprep.mubr.bf16.mxu0 %v2123
    %2391 = vmatmul.mubr.bf16.gmra.mxu0 %v2122
    %v2392 = vpop.f32.mrf.mxu0
    %v2393 = vadd.f32 %v2191, %v2392
    %v2394 = vpop.f32.mrf.mxu0
    %v2395 = vadd.f32 %v2195, %v2394
    %v2396 = vpop.f32.mrf.mxu0
    %v2397 = vadd.f32 %v2191, %v2396
    %v2398 = vpop.f32.mrf.mxu0
    %v2399 = vadd.f32 %v2195, %v2398
    %2400 = vmatprep.mubr.bf16.mxu0 %v2125
    %2401 = vmatmul.mubr.bf16.gmra.mxu0 %v2124
    %v2402 = vpop.f32.mrf.mxu0
    %v2403 = vadd.f32 %v2191, %v2402
    %v2404 = vpop.f32.mrf.mxu0
    %v2405 = vadd.f32 %v2195, %v2404
    %v2406 = vpop.f32.mrf.mxu0
    %v2407 = vadd.f32 %v2191, %v2406
    %v2408 = vpop.f32.mrf.mxu0
    %v2409 = vadd.f32 %v2195, %v2408
    %2410 = vmatprep.mubr.bf16.mxu0 %v2127
    %2411 = vmatmul.mubr.bf16.gmra.mxu0 %v2126
    %v2412 = vpop.f32.mrf.mxu0
    %v2413 = vadd.f32 %v2191, %v2412
    %v2414 = vpop.f32.mrf.mxu0
    %v2415 = vadd.f32 %v2195, %v2414
    %v2416 = vpop.f32.mrf.mxu0
    %v2417 = vadd.f32 %v2191, %v2416
    %v2418 = vpop.f32.mrf.mxu0
    %v2419 = vadd.f32 %v2195, %v2418
    %2420 = vmatprep.mubr.bf16.mxu0 %v2129
    %2421 = vmatmul.mubr.bf16.gmra.mxu0 %v2128
    %v2422 = vpop.f32.mrf.mxu0
    %v2423 = vadd.f32 %v2191, %v2422
    %v2424 = vpop.f32.mrf.mxu0
    %v2425 = vadd.f32 %v2195, %v2424
    %v2426 = vpop.f32.mrf.mxu0
    %v2427 = vadd.f32 %v2191, %v2426
    %v2428 = vpop.f32.mrf.mxu0
    %v2429 = vadd.f32 %v2195, %v2428
    %2430 = vmatprep.mubr.bf16.mxu0 %v2131
    %2431 = vmatmul.mubr.bf16.gmra.mxu0 %v2130
    %v2432 = vpop.f32.mrf.mxu0
    %v2433 = vadd.f32 %v2191, %v2432
    %v2434 = vpop.f32.mrf.mxu0
    %v2435 = vadd.f32 %v2195, %v2434
    %v2436 = vpop.f32.mrf.mxu0
    %v2437 = vadd.f32 %v2191, %v2436
    %v2438 = vpop.f32.mrf.mxu0
    %v2439 = vadd.f32 %v2195, %v2438
    %2440 = vmatprep.mubr.bf16.mxu0 %v2133
    %2441 = vmatmul.mubr.bf16.gmra.mxu0 %v2132
    %v2442 = vpop.f32.mrf.mxu0
    %v2443 = vadd.f32 %v2191, %v2442
    %v2444 = vpop.f32.mrf.mxu0
    %v2445 = vadd.f32 %v2195, %v2444
    %v2446 = vpop.f32.mrf.mxu0
    %v2447 = vadd.f32 %v2191, %v2446
    %v2448 = vpop.f32.mrf.mxu0
    %v2449 = vadd.f32 %v2195, %v2448
    %2450 = vmatprep.mubr.bf16.mxu0 %v2135
    %2451 = vmatmul.mubr.bf16.gmra.mxu0 %v2134
    %v2452 = vpop.f32.mrf.mxu0
    %v2453 = vadd.f32 %v2191, %v2452
    %v2454 = vpop.f32.mrf.mxu0
    %v2455 = vadd.f32 %v2195, %v2454
    %v2456 = vpop.f32.mrf.mxu0
    %v2457 = vadd.f32 %v2191, %v2456
    %v2458 = vpop.f32.mrf.mxu0
    %v2459 = vadd.f32 %v2195, %v2458
    %2460 = vmatprep.mubr.bf16.mxu0 %v2137
    %2461 = vmatmul.mubr.bf16.gmra.mxu0 %v2136
    %v2462 = vpop.f32.mrf.mxu0
    %v2463 = vadd.f32 %v2191, %v2462
    %v2464 = vpop.f32.mrf.mxu0
    %v2465 = vadd.f32 %v2195, %v2464
    %v2466 = vpop.f32.mrf.mxu0
    %v2467 = vadd.f32 %v2191, %v2466
    %v2468 = vpop.f32.mrf.mxu0
    %v2469 = vadd.f32 %v2195, %v2468
    %2470 = vmatprep.mubr.bf16.mxu0 %v2139
    %2471 = vmatmul.mubr.bf16.gmra.mxu0 %v2138
    %v2472 = vpop.f32.mrf.mxu0
    %v2473 = vadd.f32 %v2191, %v2472
    %v2474 = vpop.f32.mrf.mxu0
    %v2475 = vadd.f32 %v2195, %v2474
    %v2476 = vpop.f32.mrf.mxu0
    %v2477 = vadd.f32 %v2191, %v2476
    %v2478 = vpop.f32.mrf.mxu0
    %v2479 = vadd.f32 %v2195, %v2478
    %2480 = vmatprep.mubr.bf16.mxu0 %v2141
    %2481 = vmatmul.mubr.bf16.gmra.mxu0 %v2140
    %v2482 = vpop.f32.mrf.mxu0
    %v2483 = vadd.f32 %v2191, %v2482
    %v2484 = vpop.f32.mrf.mxu0
    %v2485 = vadd.f32 %v2195, %v2484
    %v2486 = vpop.f32.mrf.mxu0
    %v2487 = vadd.f32 %v2191, %v2486
    %v2488 = vpop.f32.mrf.mxu0
    %v2489 = vadd.f32 %v2195, %v2488
    %2490 = vmatprep.mubr.bf16.mxu0 %v2143
    %2491 = vmatmul.mubr.bf16.gmra.mxu0 %v2142
    %v2492 = vpop.f32.mrf.mxu0
    %v2493 = vadd.f32 %v2191, %v2492
    %v2494 = vpop.f32.mrf.mxu0
    %v2495 = vadd.f32 %v2195, %v2494
    %v2496 = vpop.f32.mrf.mxu0
    %v2497 = vadd.f32 %v2191, %v2496
    %v2498 = vpop.f32.mrf.mxu0
    %v2499 = vadd.f32 %v2195, %v2498
    %2500 = vmatprep.mubr.bf16.mxu0 %v2145
    %2501 = vmatmul.mubr.bf16.gmra.mxu0 %v2144
    %v2502 = vpop.f32.mrf.mxu0
    %v2503 = vadd.f32 %v2191, %v2502
    %v2504 = vpop.f32.mrf.mxu0
    %v2505 = vadd.f32 %v2195, %v2504
    %v2506 = vpop.f32.mrf.mxu0
    %v2507 = vadd.f32 %v2191, %v2506
    %v2508 = vpop.f32.mrf.mxu0
    %v2509 = vadd.f32 %v2195, %v2508
    %2510 = vmatprep.mubr.bf16.mxu0 %v2147
    %2511 = vmatmul.mubr.bf16.gmra.mxu0 %v2146
    %v2512 = vpop.f32.mrf.mxu0
    %v2513 = vadd.f32 %v2191, %v2512
    %v2514 = vpop.f32.mrf.mxu0
    %v2515 = vadd.f32 %v2195, %v2514
    %v2516 = vpop.f32.mrf.mxu0
    %v2517 = vadd.f32 %v2191, %v2516
    %v2518 = vpop.f32.mrf.mxu0
    %v2519 = vadd.f32 %v2195, %v2518
    %2520 = vmatprep.mubr.bf16.mxu0 %v2149
    %2521 = vmatmul.mubr.bf16.gmra.mxu0 %v2148
    %v2522 = vpop.f32.mrf.mxu0
    %v2523 = vadd.f32 %v2191, %v2522
    %v2524 = vpop.f32.mrf.mxu0
    %v2525 = vadd.f32 %v2195, %v2524
    %v2526 = vpop.f32.mrf.mxu0
    %v2527 = vadd.f32 %v2191, %v2526
    %v2528 = vpop.f32.mrf.mxu0
    %v2529 = vadd.f32 %v2195, %v2528
    %2530 = vmatprep.mubr.bf16.mxu0 %v2151
    %2531 = vmatmul.mubr.bf16.gmra.mxu0 %v2150
    %v2532 = vpop.f32.mrf.mxu0
    %v2533 = vadd.f32 %v2191, %v2532
    %v2534 = vpop.f32.mrf.mxu0
    %v2535 = vadd.f32 %v2195, %v2534
    %v2536 = vpop.f32.mrf.mxu0
    %v2537 = vadd.f32 %v2191, %v2536
    %v2538 = vpop.f32.mrf.mxu0
    %v2539 = vadd.f32 %v2195, %v2538
    %2540 = vmatprep.mubr.bf16.mxu0 %v2153
    %2541 = vmatmul.mubr.bf16.gmra.mxu0 %v2152
    %v2542 = vpop.f32.mrf.mxu0
    %v2543 = vadd.f32 %v2191, %v2542
    %v2544 = vpop.f32.mrf.mxu0
    %v2545 = vadd.f32 %v2195, %v2544
    %v2546 = vpop.f32.mrf.mxu0
    %v2547 = vadd.f32 %v2191, %v2546
    %v2548 = vpop.f32.mrf.mxu0
    %v2549 = vadd.f32 %v2195, %v2548
    %2550 = vdwg.mxu0
    %v2551 = vpack.c.bf16 %v2397, %v2393
    %v2552 = vpack.c.bf16 %v2399, %v2395
    %v2553 = vpack.c.bf16 %v2407, %v2403
    %v2554 = vpack.c.bf16 %v2409, %v2405
    %v2555 = vpack.c.bf16 %v2417, %v2413
    %v2556 = vpack.c.bf16 %v2419, %v2415
    %v2557 = vpack.c.bf16 %v2427, %v2423
    %v2558 = vpack.c.bf16 %v2429, %v2425
    %v2559 = vpack.c.bf16 %v2437, %v2433
    %v2560 = vpack.c.bf16 %v2439, %v2435
    %v2561 = vpack.c.bf16 %v2447, %v2443
    %v2562 = vpack.c.bf16 %v2449, %v2445
    %v2563 = vpack.c.bf16 %v2457, %v2453
    %v2564 = vpack.c.bf16 %v2459, %v2455
    %v2565 = vpack.c.bf16 %v2467, %v2463
    %v2566 = vpack.c.bf16 %v2469, %v2465
    %v2567 = vpack.c.bf16 %v2477, %v2473
    %v2568 = vpack.c.bf16 %v2479, %v2475
    %v2569 = vpack.c.bf16 %v2487, %v2483
    %v2570 = vpack.c.bf16 %v2489, %v2485
    %v2571 = vpack.c.bf16 %v2497, %v2493
    %v2572 = vpack.c.bf16 %v2499, %v2495
    %v2573 = vpack.c.bf16 %v2507, %v2503
    %v2574 = vpack.c.bf16 %v2509, %v2505
    %v2575 = vpack.c.bf16 %v2517, %v2513
    %v2576 = vpack.c.bf16 %v2519, %v2515
    %v2577 = vpack.c.bf16 %v2527, %v2523
    %v2578 = vpack.c.bf16 %v2529, %v2525
    %v2579 = vpack.c.bf16 %v2537, %v2533
    %v2580 = vpack.c.bf16 %v2539, %v2535
    %v2581 = vpack.c.bf16 %v2547, %v2543
    %v2582 = vpack.c.bf16 %v2549, %v2545
    %v2583 = vxor.u32 %v2551, 2147516416
    %v2584 = vxor.u32 %v2552, 2147516416
    %v2585 = vxor.u32 %v2553, 2147516416
    %v2586 = vxor.u32 %v2554, 2147516416
    %v2587 = vxor.u32 %v2555, 2147516416
    %v2588 = vxor.u32 %v2556, 2147516416
    %v2589 = vxor.u32 %v2557, 2147516416
    %v2590 = vxor.u32 %v2558, 2147516416
    %v2591 = vxor.u32 %v2559, 2147516416
    %v2592 = vxor.u32 %v2560, 2147516416
    %v2593 = vxor.u32 %v2561, 2147516416
    %v2594 = vxor.u32 %v2562, 2147516416
    %v2595 = vxor.u32 %v2563, 2147516416
    %v2596 = vxor.u32 %v2564, 2147516416
    %v2597 = vxor.u32 %v2565, 2147516416
    %v2598 = vxor.u32 %v2566, 2147516416
    %v2599 = vxor.u32 %v2567, 2147516416
    %v2600 = vxor.u32 %v2568, 2147516416
    %v2601 = vxor.u32 %v2569, 2147516416
    %v2602 = vxor.u32 %v2570, 2147516416
    %v2603 = vxor.u32 %v2571, 2147516416
    %v2604 = vxor.u32 %v2572, 2147516416
    %v2605 = vxor.u32 %v2573, 2147516416
    %v2606 = vxor.u32 %v2574, 2147516416
    %v2607 = vxor.u32 %v2575, 2147516416
    %v2608 = vxor.u32 %v2576, 2147516416
    %v2609 = vxor.u32 %v2577, 2147516416
    %v2610 = vxor.u32 %v2578, 2147516416
    %v2611 = vxor.u32 %v2579, 2147516416
    %v2612 = vxor.u32 %v2580, 2147516416
    %v2613 = vxor.u32 %v2581, 2147516416
    %v2614 = vxor.u32 %v2582, 2147516416
    %v2616 = vmul.bf16 %v2583, 1069105081
    %v2617 = vpow.bf16.pop %v2616
    %v2619 = vmul.bf16 %v2584, 1069105081
    %v2620 = vpow.bf16.pop %v2619
    %v2622 = vmul.bf16 %v2585, 1069105081
    %v2623 = vpow.bf16.pop %v2622
    %v2625 = vmul.bf16 %v2586, 1069105081
    %v2626 = vpow.bf16.pop %v2625
    %v2628 = vmul.bf16 %v2587, 1069105081
    %v2629 = vpow.bf16.pop %v2628
    %v2631 = vmul.bf16 %v2588, 1069105081
    %v2632 = vpow.bf16.pop %v2631
    %v2634 = vmul.bf16 %v2589, 1069105081
    %v2635 = vpow.bf16.pop %v2634
    %v2637 = vmul.bf16 %v2590, 1069105081
    %v2638 = vpow.bf16.pop %v2637
    %v2640 = vmul.bf16 %v2591, 1069105081
    %v2641 = vpow.bf16.pop %v2640
    %v2643 = vmul.bf16 %v2592, 1069105081
    %v2644 = vpow.bf16.pop %v2643
    %v2646 = vmul.bf16 %v2593, 1069105081
    %v2647 = vpow.bf16.pop %v2646
    %v2649 = vmul.bf16 %v2594, 1069105081
    %v2650 = vpow.bf16.pop %v2649
    %v2652 = vmul.bf16 %v2595, 1069105081
    %v2653 = vpow.bf16.pop %v2652
    %v2655 = vmul.bf16 %v2596, 1069105081
    %v2656 = vpow.bf16.pop %v2655
    %v2658 = vmul.bf16 %v2597, 1069105081
    %v2659 = vpow.bf16.pop %v2658
    %v2661 = vmul.bf16 %v2598, 1069105081
    %v2662 = vpow.bf16.pop %v2661
    %v2664 = vmul.bf16 %v2599, 1069105081
    %v2665 = vpow.bf16.pop %v2664
    %v2667 = vmul.bf16 %v2600, 1069105081
    %v2668 = vpow.bf16.pop %v2667
    %v2670 = vmul.bf16 %v2601, 1069105081
    %v2671 = vpow.bf16.pop %v2670
    %v2673 = vmul.bf16 %v2602, 1069105081
    %v2674 = vpow.bf16.pop %v2673
    %v2676 = vmul.bf16 %v2603, 1069105081
    %v2677 = vpow.bf16.pop %v2676
    %v2679 = vmul.bf16 %v2604, 1069105081
    %v2680 = vpow.bf16.pop %v2679
    %v2682 = vmul.bf16 %v2605, 1069105081
    %v2683 = vpow.bf16.pop %v2682
    %v2685 = vmul.bf16 %v2606, 1069105081
    %v2686 = vpow.bf16.pop %v2685
    %v2688 = vmul.bf16 %v2607, 1069105081
    %v2689 = vpow.bf16.pop %v2688
    %v2691 = vmul.bf16 %v2608, 1069105081
    %v2692 = vpow.bf16.pop %v2691
    %v2694 = vmul.bf16 %v2609, 1069105081
    %v2695 = vpow.bf16.pop %v2694
    %v2697 = vmul.bf16 %v2610, 1069105081
    %v2698 = vpow.bf16.pop %v2697
    %v2700 = vmul.bf16 %v2611, 1069105081
    %v2701 = vpow.bf16.pop %v2700
    %v2703 = vmul.bf16 %v2612, 1069105081
    %v2704 = vpow.bf16.pop %v2703
    %v2706 = vmul.bf16 %v2613, 1069105081
    %v2707 = vpow.bf16.pop %v2706
    %v2709 = vmul.bf16 %v2614, 1069105081
    %v2710 = vpow.bf16.pop %v2709
    %v2711 = vadd.bf16 %v2617, 1065369472
    %v2712 = vadd.bf16 %v2620, 1065369472
    %v2713 = vadd.bf16 %v2623, 1065369472
    %v2714 = vadd.bf16 %v2626, 1065369472
    %v2715 = vadd.bf16 %v2629, 1065369472
    %v2716 = vadd.bf16 %v2632, 1065369472
    %v2717 = vadd.bf16 %v2635, 1065369472
    %v2718 = vadd.bf16 %v2638, 1065369472
    %v2719 = vadd.bf16 %v2641, 1065369472
    %v2720 = vadd.bf16 %v2644, 1065369472
    %v2721 = vadd.bf16 %v2647, 1065369472
    %v2722 = vadd.bf16 %v2650, 1065369472
    %v2723 = vadd.bf16 %v2653, 1065369472
    %v2724 = vadd.bf16 %v2656, 1065369472
    %v2725 = vadd.bf16 %v2659, 1065369472
    %v2726 = vadd.bf16 %v2662, 1065369472
    %v2727 = vadd.bf16 %v2665, 1065369472
    %v2728 = vadd.bf16 %v2668, 1065369472
    %v2729 = vadd.bf16 %v2671, 1065369472
    %v2730 = vadd.bf16 %v2674, 1065369472
    %v2731 = vadd.bf16 %v2677, 1065369472
    %v2732 = vadd.bf16 %v2680, 1065369472
    %v2733 = vadd.bf16 %v2683, 1065369472
    %v2734 = vadd.bf16 %v2686, 1065369472
    %v2735 = vadd.bf16 %v2689, 1065369472
    %v2736 = vadd.bf16 %v2692, 1065369472
    %v2737 = vadd.bf16 %v2695, 1065369472
    %v2738 = vadd.bf16 %v2698, 1065369472
    %v2739 = vadd.bf16 %v2701, 1065369472
    %v2740 = vadd.bf16 %v2704, 1065369472
    %v2741 = vadd.bf16 %v2707, 1065369472
    %v2742 = vadd.bf16 %v2710, 1065369472
    %v2743 = vrcp.bf16.pop %v2711
    %v2744 = vmul.bf16 1065369472, %v2743
    %v2745 = vrcp.bf16.pop %v2712
    %v2746 = vmul.bf16 1065369472, %v2745
    %v2747 = vrcp.bf16.pop %v2713
    %v2748 = vmul.bf16 1065369472, %v2747
    %v2749 = vrcp.bf16.pop %v2714
    %v2750 = vmul.bf16 1065369472, %v2749
    %v2751 = vrcp.bf16.pop %v2715
    %v2752 = vmul.bf16 1065369472, %v2751
    %v2753 = vrcp.bf16.pop %v2716
    %v2754 = vmul.bf16 1065369472, %v2753
    %v2755 = vrcp.bf16.pop %v2717
    %v2756 = vmul.bf16 1065369472, %v2755
    %v2757 = vrcp.bf16.pop %v2718
    %v2758 = vmul.bf16 1065369472, %v2757
    %v2759 = vrcp.bf16.pop %v2719
    %v2760 = vmul.bf16 1065369472, %v2759
    %v2761 = vrcp.bf16.pop %v2720
    %v2762 = vmul.bf16 1065369472, %v2761
    %v2763 = vrcp.bf16.pop %v2721
    %v2764 = vmul.bf16 1065369472, %v2763
    %v2765 = vrcp.bf16.pop %v2722
    %v2766 = vmul.bf16 1065369472, %v2765
    %v2767 = vrcp.bf16.pop %v2723
    %v2768 = vmul.bf16 1065369472, %v2767
    %v2769 = vrcp.bf16.pop %v2724
    %v2770 = vmul.bf16 1065369472, %v2769
    %v2771 = vrcp.bf16.pop %v2725
    %v2772 = vmul.bf16 1065369472, %v2771
    %v2773 = vrcp.bf16.pop %v2726
    %v2774 = vmul.bf16 1065369472, %v2773
    %v2775 = vrcp.bf16.pop %v2727
    %v2776 = vmul.bf16 1065369472, %v2775
    %v2777 = vrcp.bf16.pop %v2728
    %v2778 = vmul.bf16 1065369472, %v2777
    %v2779 = vrcp.bf16.pop %v2729
    %v2780 = vmul.bf16 1065369472, %v2779
    %v2781 = vrcp.bf16.pop %v2730
    %v2782 = vmul.bf16 1065369472, %v2781
    %v2783 = vrcp.bf16.pop %v2731
    %v2784 = vmul.bf16 1065369472, %v2783
    %v2785 = vrcp.bf16.pop %v2732
    %v2786 = vmul.bf16 1065369472, %v2785
    %v2787 = vrcp.bf16.pop %v2733
    %v2788 = vmul.bf16 1065369472, %v2787
    %v2789 = vrcp.bf16.pop %v2734
    %v2790 = vmul.bf16 1065369472, %v2789
    %v2791 = vrcp.bf16.pop %v2735
    %v2792 = vmul.bf16 1065369472, %v2791
    %v2793 = vrcp.bf16.pop %v2736
    %v2794 = vmul.bf16 1065369472, %v2793
    %v2795 = vrcp.bf16.pop %v2737
    %v2796 = vmul.bf16 1065369472, %v2795
    %v2797 = vrcp.bf16.pop %v2738
    %v2798 = vmul.bf16 1065369472, %v2797
    %v2799 = vrcp.bf16.pop %v2739
    %v2800 = vmul.bf16 1065369472, %v2799
    %v2801 = vrcp.bf16.pop %v2740
    %v2802 = vmul.bf16 1065369472, %v2801
    %v2803 = vrcp.bf16.pop %v2741
    %v2804 = vmul.bf16 1065369472, %v2803
    %v2805 = vrcp.bf16.pop %v2742
    %v2806 = vmul.bf16 1065369472, %v2805
    %v2807 = vmul.bf16 %v2551, %v2744
    %v2808 = vmul.bf16 %v2552, %v2746
    %v2809 = vmul.bf16 %v2553, %v2748
    %v2810 = vmul.bf16 %v2554, %v2750
    %v2811 = vmul.bf16 %v2555, %v2752
    %v2812 = vmul.bf16 %v2556, %v2754
    %v2813 = vmul.bf16 %v2557, %v2756
    %v2814 = vmul.bf16 %v2558, %v2758
    %v2815 = vmul.bf16 %v2559, %v2760
    %v2816 = vmul.bf16 %v2560, %v2762
    %v2817 = vmul.bf16 %v2561, %v2764
    %v2818 = vmul.bf16 %v2562, %v2766
    %v2819 = vmul.bf16 %v2563, %v2768
    %v2820 = vmul.bf16 %v2564, %v2770
    %v2821 = vmul.bf16 %v2565, %v2772
    %v2822 = vmul.bf16 %v2566, %v2774
    %v2823 = vmul.bf16 %v2567, %v2776
    %v2824 = vmul.bf16 %v2568, %v2778
    %v2825 = vmul.bf16 %v2569, %v2780
    %v2826 = vmul.bf16 %v2570, %v2782
    %v2827 = vmul.bf16 %v2571, %v2784
    %v2828 = vmul.bf16 %v2572, %v2786
    %v2829 = vmul.bf16 %v2573, %v2788
    %v2830 = vmul.bf16 %v2574, %v2790
    %v2831 = vmul.bf16 %v2575, %v2792
    %v2832 = vmul.bf16 %v2576, %v2794
    %v2833 = vmul.bf16 %v2577, %v2796
    %v2834 = vmul.bf16 %v2578, %v2798
    %v2835 = vmul.bf16 %v2579, %v2800
    %v2836 = vmul.bf16 %v2580, %v2802
    %v2837 = vmul.bf16 %v2581, %v2804
    %v2838 = vmul.bf16 %v2582, %v2806
    %v2839 = vld [vmem:[#allocation7] sm:$0xff]
    %v2840 = vld [vmem:[#allocation7 + $0x8] sm:$0xff]
    %v2841 = vld [vmem:[#allocation7 + $0x10] sm:$0xff]
    %v2842 = vld [vmem:[#allocation7 + $0x18] sm:$0xff]
    %v2843 = vld [vmem:[#allocation7 + $0x20] sm:$0xff]
    %v2844 = vld [vmem:[#allocation7 + $0x28] sm:$0xff]
    %v2845 = vld [vmem:[#allocation7 + $0x30] sm:$0xff]
    %v2846 = vld [vmem:[#allocation7 + $0x38] sm:$0xff]
    %v2847 = vld [vmem:[#allocation7 + $0x40] sm:$0xff]
    %v2848 = vld [vmem:[#allocation7 + $0x48] sm:$0xff]
    %v2849 = vld [vmem:[#allocation7 + $0x50] sm:$0xff]
    %v2850 = vld [vmem:[#allocation7 + $0x58] sm:$0xff]
    %v2851 = vld [vmem:[#allocation7 + $0x60] sm:$0xff]
    %v2852 = vld [vmem:[#allocation7 + $0x68] sm:$0xff]
    %v2853 = vld [vmem:[#allocation7 + $0x70] sm:$0xff]
    %v2854 = vld [vmem:[#allocation7 + $0x78] sm:$0xff]
    %v2855 = vld [vmem:[#allocation7 + $0x80] sm:$0xff]
    %v2856 = vld [vmem:[#allocation7 + $0x88] sm:$0xff]
    %v2857 = vld [vmem:[#allocation7 + $0x90] sm:$0xff]
    %v2858 = vld [vmem:[#allocation7 + $0x98] sm:$0xff]
    %v2859 = vld [vmem:[#allocation7 + $0xa0] sm:$0xff]
    %v2860 = vld [vmem:[#allocation7 + $0xa8] sm:$0xff]
    %v2861 = vld [vmem:[#allocation7 + $0xb0] sm:$0xff]
    %v2862 = vld [vmem:[#allocation7 + $0xb8] sm:$0xff]
    %v2863 = vld [vmem:[#allocation7 + $0xc0] sm:$0xff]
    %v2864 = vld [vmem:[#allocation7 + $0xc8] sm:$0xff]
    %v2865 = vld [vmem:[#allocation7 + $0xd0] sm:$0xff]
    %v2866 = vld [vmem:[#allocation7 + $0xd8] sm:$0xff]
    %v2867 = vld [vmem:[#allocation7 + $0xe0] sm:$0xff]
    %v2868 = vld [vmem:[#allocation7 + $0xe8] sm:$0xff]
    %v2869 = vld [vmem:[#allocation7 + $0xf0] sm:$0xff]
    %v2870 = vld [vmem:[#allocation7 + $0xf8] sm:$0xff]
    %v2871 = vld [vmem:[%s10] sm:$0x3]
    %v2873 = vlaneseq
    %v2874 = vshrl.u32 %v2873, 7
    %v2875 = vsub.s32 0, %v2874
    %v2876 = vrot.slane %v2871, %v2875
    %v2877 = vlaneseq
    %v2878 = vshrl.u32 %v2877, 7
    %v2879 = vsub.s32 1, %v2878
    %v2880 = vrot.slane %v2871, %v2879
    %v2915 = vunpack.c.l.b16 %v2839
    %v2916 = vunpack.c.h.b16 %v2839
    %v2917 = vunpack.c.l.b16 %v2840
    %v2918 = vunpack.c.h.b16 %v2840
    %v2919 = vunpack.c.l.b16 %v2841
    %v2920 = vunpack.c.h.b16 %v2841
    %v2921 = vunpack.c.l.b16 %v2842
    %v2922 = vunpack.c.h.b16 %v2842
    %v2923 = vunpack.c.l.b16 %v2843
    %v2924 = vunpack.c.h.b16 %v2843
    %v2925 = vunpack.c.l.b16 %v2844
    %v2926 = vunpack.c.h.b16 %v2844
    %v2927 = vunpack.c.l.b16 %v2845
    %v2928 = vunpack.c.h.b16 %v2845
    %v2929 = vunpack.c.l.b16 %v2846
    %v2930 = vunpack.c.h.b16 %v2846
    %v2931 = vunpack.c.l.b16 %v2847
    %v2932 = vunpack.c.h.b16 %v2847
    %v2933 = vunpack.c.l.b16 %v2848
    %v2934 = vunpack.c.h.b16 %v2848
    %v2935 = vunpack.c.l.b16 %v2849
    %v2936 = vunpack.c.h.b16 %v2849
    %v2937 = vunpack.c.l.b16 %v2850
    %v2938 = vunpack.c.h.b16 %v2850
    %v2939 = vunpack.c.l.b16 %v2851
    %v2940 = vunpack.c.h.b16 %v2851
    %v2941 = vunpack.c.l.b16 %v2852
    %v2942 = vunpack.c.h.b16 %v2852
    %v2943 = vunpack.c.l.b16 %v2853
    %v2944 = vunpack.c.h.b16 %v2853
    %v2945 = vunpack.c.l.b16 %v2854
    %v2946 = vunpack.c.h.b16 %v2854
    %v2947 = vunpack.c.l.b16 %v2855
    %v2948 = vunpack.c.h.b16 %v2855
    %v2949 = vunpack.c.l.b16 %v2856
    %v2950 = vunpack.c.h.b16 %v2856
    %v2951 = vunpack.c.l.b16 %v2857
    %v2952 = vunpack.c.h.b16 %v2857
    %v2953 = vunpack.c.l.b16 %v2858
    %v2954 = vunpack.c.h.b16 %v2858
    %v2955 = vunpack.c.l.b16 %v2859
    %v2956 = vunpack.c.h.b16 %v2859
    %v2957 = vunpack.c.l.b16 %v2860
    %v2958 = vunpack.c.h.b16 %v2860
    %v2959 = vunpack.c.l.b16 %v2861
    %v2960 = vunpack.c.h.b16 %v2861
    %v2961 = vunpack.c.l.b16 %v2862
    %v2962 = vunpack.c.h.b16 %v2862
    %v2963 = vunpack.c.l.b16 %v2863
    %v2964 = vunpack.c.h.b16 %v2863
    %v2965 = vunpack.c.l.b16 %v2864
    %v2966 = vunpack.c.h.b16 %v2864
    %v2967 = vunpack.c.l.b16 %v2865
    %v2968 = vunpack.c.h.b16 %v2865
    %v2969 = vunpack.c.l.b16 %v2866
    %v2970 = vunpack.c.h.b16 %v2866
    %v2971 = vunpack.c.l.b16 %v2867
    %v2972 = vunpack.c.h.b16 %v2867
    %v2973 = vunpack.c.l.b16 %v2868
    %v2974 = vunpack.c.h.b16 %v2868
    %v2975 = vunpack.c.l.b16 %v2869
    %v2976 = vunpack.c.h.b16 %v2869
    %v2977 = vunpack.c.l.b16 %v2870
    %v2978 = vunpack.c.h.b16 %v2870
    %v2979 = vpack.c.b16 %v2917, %v2915
    %v2980 = vpack.c.b16 %v2918, %v2916
    %v2981 = vpack.c.b16 %v2921, %v2919
    %v2982 = vpack.c.b16 %v2922, %v2920
    %v2983 = vpack.c.b16 %v2925, %v2923
    %v2984 = vpack.c.b16 %v2926, %v2924
    %v2985 = vpack.c.b16 %v2929, %v2927
    %v2986 = vpack.c.b16 %v2930, %v2928
    %v2987 = vpack.c.b16 %v2933, %v2931
    %v2988 = vpack.c.b16 %v2934, %v2932
    %v2989 = vpack.c.b16 %v2937, %v2935
    %v2990 = vpack.c.b16 %v2938, %v2936
    %v2991 = vpack.c.b16 %v2941, %v2939
    %v2992 = vpack.c.b16 %v2942, %v2940
    %v2993 = vpack.c.b16 %v2945, %v2943
    %v2994 = vpack.c.b16 %v2946, %v2944
    %v2995 = vpack.c.b16 %v2949, %v2947
    %v2996 = vpack.c.b16 %v2950, %v2948
    %v2997 = vpack.c.b16 %v2953, %v2951
    %v2998 = vpack.c.b16 %v2954, %v2952
    %v2999 = vpack.c.b16 %v2957, %v2955
    %v3000 = vpack.c.b16 %v2958, %v2956
    %v3001 = vpack.c.b16 %v2961, %v2959
    %v3002 = vpack.c.b16 %v2962, %v2960
    %v3003 = vpack.c.b16 %v2965, %v2963
    %v3004 = vpack.c.b16 %v2966, %v2964
    %v3005 = vpack.c.b16 %v2969, %v2967
    %v3006 = vpack.c.b16 %v2970, %v2968
    %v3007 = vpack.c.b16 %v2973, %v2971
    %v3008 = vpack.c.b16 %v2974, %v2972
    %v3009 = vpack.c.b16 %v2977, %v2975
    %v3010 = vpack.c.b16 %v2978, %v2976
    %3043 = vmatprep.subr.bf16.mxu0 %v2994
    %3044 = vmatpush1.bf16.msra.mxu0 %v2993
    %3045 = vmatprep.subr.bf16.mxu0 %v2992
    %3046 = vmatpush1.bf16.msra.mxu0 %v2991
    %3047 = vmatprep.subr.bf16.mxu0 %v2990
    %3048 = vmatpush1.bf16.msra.mxu0 %v2989
    %3049 = vmatprep.subr.bf16.mxu0 %v2988
    %3050 = vmatpush1.bf16.msra.mxu0 %v2987
    %3051 = vmatprep.subr.bf16.mxu0 %v2986
    %3052 = vmatpush1.bf16.msra.mxu0 %v2985
    %3053 = vmatprep.subr.bf16.mxu0 %v2984
    %3054 = vmatpush1.bf16.msra.mxu0 %v2983
    %3055 = vmatprep.subr.bf16.mxu0 %v2982
    %3056 = vmatpush1.bf16.msra.mxu0 %v2981
    %3057 = vmatprep.subr.bf16.mxu0 %v2980
    %3058 = vmatpush1.bf16.msra.mxu0 %v2979
    %3059 = vmatprep.subr.bf16.mxu0 %v3010
    %3060 = vmatpush2.bf16.msra.mxu0 %v3009
    %3061 = vmatprep.subr.bf16.mxu0 %v3008
    %3062 = vmatpush2.bf16.msra.mxu0 %v3007
    %3063 = vmatprep.subr.bf16.mxu0 %v3006
    %3064 = vmatpush2.bf16.msra.mxu0 %v3005
    %3065 = vmatprep.subr.bf16.mxu0 %v3004
    %3066 = vmatpush2.bf16.msra.mxu0 %v3003
    %3067 = vmatprep.subr.bf16.mxu0 %v3002
    %3068 = vmatpush2.bf16.msra.mxu0 %v3001
    %3069 = vmatprep.subr.bf16.mxu0 %v3000
    %3070 = vmatpush2.bf16.msra.mxu0 %v2999
    %3071 = vmatprep.subr.bf16.mxu0 %v2998
    %3072 = vmatpush2.bf16.msra.mxu0 %v2997
    %3073 = vmatprep.subr.bf16.mxu0 %v2996
    %3074 = vmatpush2.bf16.msra.mxu0 %v2995
    %3075 = vmatprep.mubr.bf16.mxu0 %v2808
    %3076 = vmatmul.mubr.bf16.gmra.mxu0 %v2807
    %v3077 = vpop.f32.mrf.mxu0
    %v3078 = vadd.f32 %v2876, %v3077
    %v3079 = vpop.f32.mrf.mxu0
    %v3080 = vadd.f32 %v2880, %v3079
    %v3081 = vpop.f32.mrf.mxu0
    %v3082 = vadd.f32 %v2876, %v3081
    %v3083 = vpop.f32.mrf.mxu0
    %v3084 = vadd.f32 %v2880, %v3083
    %3085 = vmatprep.mubr.bf16.mxu0 %v2810
    %3086 = vmatmul.mubr.bf16.gmra.mxu0 %v2809
    %v3087 = vpop.f32.mrf.mxu0
    %v3088 = vadd.f32 %v2876, %v3087
    %v3089 = vpop.f32.mrf.mxu0
    %v3090 = vadd.f32 %v2880, %v3089
    %v3091 = vpop.f32.mrf.mxu0
    %v3092 = vadd.f32 %v2876, %v3091
    %v3093 = vpop.f32.mrf.mxu0
    %v3094 = vadd.f32 %v2880, %v3093
    %3095 = vmatprep.mubr.bf16.mxu0 %v2812
    %3096 = vmatmul.mubr.bf16.gmra.mxu0 %v2811
    %v3097 = vpop.f32.mrf.mxu0
    %v3098 = vadd.f32 %v2876, %v3097
    %v3099 = vpop.f32.mrf.mxu0
    %v3100 = vadd.f32 %v2880, %v3099
    %v3101 = vpop.f32.mrf.mxu0
    %v3102 = vadd.f32 %v2876, %v3101
    %v3103 = vpop.f32.mrf.mxu0
    %v3104 = vadd.f32 %v2880, %v3103
    %3105 = vmatprep.mubr.bf16.mxu0 %v2814
    %3106 = vmatmul.mubr.bf16.gmra.mxu0 %v2813
    %v3107 = vpop.f32.mrf.mxu0
    %v3108 = vadd.f32 %v2876, %v3107
    %v3109 = vpop.f32.mrf.mxu0
    %v3110 = vadd.f32 %v2880, %v3109
    %v3111 = vpop.f32.mrf.mxu0
    %v3112 = vadd.f32 %v2876, %v3111
    %v3113 = vpop.f32.mrf.mxu0
    %v3114 = vadd.f32 %v2880, %v3113
    %3115 = vmatprep.mubr.bf16.mxu0 %v2816
    %3116 = vmatmul.mubr.bf16.gmra.mxu0 %v2815
    %v3117 = vpop.f32.mrf.mxu0
    %v3118 = vadd.f32 %v2876, %v3117
    %v3119 = vpop.f32.mrf.mxu0
    %v3120 = vadd.f32 %v2880, %v3119
    %v3121 = vpop.f32.mrf.mxu0
    %v3122 = vadd.f32 %v2876, %v3121
    %v3123 = vpop.f32.mrf.mxu0
    %v3124 = vadd.f32 %v2880, %v3123
    %3125 = vmatprep.mubr.bf16.mxu0 %v2818
    %3126 = vmatmul.mubr.bf16.gmra.mxu0 %v2817
    %v3127 = vpop.f32.mrf.mxu0
    %v3128 = vadd.f32 %v2876, %v3127
    %v3129 = vpop.f32.mrf.mxu0
    %v3130 = vadd.f32 %v2880, %v3129
    %v3131 = vpop.f32.mrf.mxu0
    %v3132 = vadd.f32 %v2876, %v3131
    %v3133 = vpop.f32.mrf.mxu0
    %v3134 = vadd.f32 %v2880, %v3133
    %3135 = vmatprep.mubr.bf16.mxu0 %v2820
    %3136 = vmatmul.mubr.bf16.gmra.mxu0 %v2819
    %v3137 = vpop.f32.mrf.mxu0
    %v3138 = vadd.f32 %v2876, %v3137
    %v3139 = vpop.f32.mrf.mxu0
    %v3140 = vadd.f32 %v2880, %v3139
    %v3141 = vpop.f32.mrf.mxu0
    %v3142 = vadd.f32 %v2876, %v3141
    %v3143 = vpop.f32.mrf.mxu0
    %v3144 = vadd.f32 %v2880, %v3143
    %3145 = vmatprep.mubr.bf16.mxu0 %v2822
    %3146 = vmatmul.mubr.bf16.gmra.mxu0 %v2821
    %v3147 = vpop.f32.mrf.mxu0
    %v3148 = vadd.f32 %v2876, %v3147
    %v3149 = vpop.f32.mrf.mxu0
    %v3150 = vadd.f32 %v2880, %v3149
    %v3151 = vpop.f32.mrf.mxu0
    %v3152 = vadd.f32 %v2876, %v3151
    %v3153 = vpop.f32.mrf.mxu0
    %v3154 = vadd.f32 %v2880, %v3153
    %3155 = vmatprep.mubr.bf16.mxu0 %v2824
    %3156 = vmatmul.mubr.bf16.gmra.mxu0 %v2823
    %v3157 = vpop.f32.mrf.mxu0
    %v3158 = vadd.f32 %v2876, %v3157
    %v3159 = vpop.f32.mrf.mxu0
    %v3160 = vadd.f32 %v2880, %v3159
    %v3161 = vpop.f32.mrf.mxu0
    %v3162 = vadd.f32 %v2876, %v3161
    %v3163 = vpop.f32.mrf.mxu0
    %v3164 = vadd.f32 %v2880, %v3163
    %3165 = vmatprep.mubr.bf16.mxu0 %v2826
    %3166 = vmatmul.mubr.bf16.gmra.mxu0 %v2825
    %v3167 = vpop.f32.mrf.mxu0
    %v3168 = vadd.f32 %v2876, %v3167
    %v3169 = vpop.f32.mrf.mxu0
    %v3170 = vadd.f32 %v2880, %v3169
    %v3171 = vpop.f32.mrf.mxu0
    %v3172 = vadd.f32 %v2876, %v3171
    %v3173 = vpop.f32.mrf.mxu0
    %v3174 = vadd.f32 %v2880, %v3173
    %3175 = vmatprep.mubr.bf16.mxu0 %v2828
    %3176 = vmatmul.mubr.bf16.gmra.mxu0 %v2827
    %v3177 = vpop.f32.mrf.mxu0
    %v3178 = vadd.f32 %v2876, %v3177
    %v3179 = vpop.f32.mrf.mxu0
    %v3180 = vadd.f32 %v2880, %v3179
    %v3181 = vpop.f32.mrf.mxu0
    %v3182 = vadd.f32 %v2876, %v3181
    %v3183 = vpop.f32.mrf.mxu0
    %v3184 = vadd.f32 %v2880, %v3183
    %3185 = vmatprep.mubr.bf16.mxu0 %v2830
    %3186 = vmatmul.mubr.bf16.gmra.mxu0 %v2829
    %v3187 = vpop.f32.mrf.mxu0
    %v3188 = vadd.f32 %v2876, %v3187
    %v3189 = vpop.f32.mrf.mxu0
    %v3190 = vadd.f32 %v2880, %v3189
    %v3191 = vpop.f32.mrf.mxu0
    %v3192 = vadd.f32 %v2876, %v3191
    %v3193 = vpop.f32.mrf.mxu0
    %v3194 = vadd.f32 %v2880, %v3193
    %3195 = vmatprep.mubr.bf16.mxu0 %v2832
    %3196 = vmatmul.mubr.bf16.gmra.mxu0 %v2831
    %v3197 = vpop.f32.mrf.mxu0
    %v3198 = vadd.f32 %v2876, %v3197
    %v3199 = vpop.f32.mrf.mxu0
    %v3200 = vadd.f32 %v2880, %v3199
    %v3201 = vpop.f32.mrf.mxu0
    %v3202 = vadd.f32 %v2876, %v3201
    %v3203 = vpop.f32.mrf.mxu0
    %v3204 = vadd.f32 %v2880, %v3203
    %3205 = vmatprep.mubr.bf16.mxu0 %v2834
    %3206 = vmatmul.mubr.bf16.gmra.mxu0 %v2833
    %v3207 = vpop.f32.mrf.mxu0
    %v3208 = vadd.f32 %v2876, %v3207
    %v3209 = vpop.f32.mrf.mxu0
    %v3210 = vadd.f32 %v2880, %v3209
    %v3211 = vpop.f32.mrf.mxu0
    %v3212 = vadd.f32 %v2876, %v3211
    %v3213 = vpop.f32.mrf.mxu0
    %v3214 = vadd.f32 %v2880, %v3213
    %3215 = vmatprep.mubr.bf16.mxu0 %v2836
    %3216 = vmatmul.mubr.bf16.gmra.mxu0 %v2835
    %v3217 = vpop.f32.mrf.mxu0
    %v3218 = vadd.f32 %v2876, %v3217
    %v3219 = vpop.f32.mrf.mxu0
    %v3220 = vadd.f32 %v2880, %v3219
    %v3221 = vpop.f32.mrf.mxu0
    %v3222 = vadd.f32 %v2876, %v3221
    %v3223 = vpop.f32.mrf.mxu0
    %v3224 = vadd.f32 %v2880, %v3223
    %3225 = vmatprep.mubr.bf16.mxu0 %v2838
    %3226 = vmatmul.mubr.bf16.gmra.mxu0 %v2837
    %v3227 = vpop.f32.mrf.mxu0
    %v3228 = vadd.f32 %v2876, %v3227
    %v3229 = vpop.f32.mrf.mxu0
    %v3230 = vadd.f32 %v2880, %v3229
    %v3231 = vpop.f32.mrf.mxu0
    %v3232 = vadd.f32 %v2876, %v3231
    %v3233 = vpop.f32.mrf.mxu0
    %v3234 = vadd.f32 %v2880, %v3233
    %3235 = vdwg.mxu0
    %v3236 = vpack.c.bf16 %v3082, %v3078
    %v3237 = vpack.c.bf16 %v3084, %v3080
    %v3238 = vpack.c.bf16 %v3092, %v3088
    %v3239 = vpack.c.bf16 %v3094, %v3090
    %v3240 = vpack.c.bf16 %v3102, %v3098
    %v3241 = vpack.c.bf16 %v3104, %v3100
    %v3242 = vpack.c.bf16 %v3112, %v3108
    %v3243 = vpack.c.bf16 %v3114, %v3110
    %v3244 = vpack.c.bf16 %v3122, %v3118
    %v3245 = vpack.c.bf16 %v3124, %v3120
    %v3246 = vpack.c.bf16 %v3132, %v3128
    %v3247 = vpack.c.bf16 %v3134, %v3130
    %v3248 = vpack.c.bf16 %v3142, %v3138
    %v3249 = vpack.c.bf16 %v3144, %v3140
    %v3250 = vpack.c.bf16 %v3152, %v3148
    %v3251 = vpack.c.bf16 %v3154, %v3150
    %v3252 = vpack.c.bf16 %v3162, %v3158
    %v3253 = vpack.c.bf16 %v3164, %v3160
    %v3254 = vpack.c.bf16 %v3172, %v3168
    %v3255 = vpack.c.bf16 %v3174, %v3170
    %v3256 = vpack.c.bf16 %v3182, %v3178
    %v3257 = vpack.c.bf16 %v3184, %v3180
    %v3258 = vpack.c.bf16 %v3192, %v3188
    %v3259 = vpack.c.bf16 %v3194, %v3190
    %v3260 = vpack.c.bf16 %v3202, %v3198
    %v3261 = vpack.c.bf16 %v3204, %v3200
    %v3262 = vpack.c.bf16 %v3212, %v3208
    %v3263 = vpack.c.bf16 %v3214, %v3210
    %v3264 = vpack.c.bf16 %v3222, %v3218
    %v3265 = vpack.c.bf16 %v3224, %v3220
    %v3266 = vpack.c.bf16 %v3232, %v3228
    %v3267 = vpack.c.bf16 %v3234, %v3230
    %v3268 = vxor.u32 %v3236, 2147516416
    %v3269 = vxor.u32 %v3237, 2147516416
    %v3270 = vxor.u32 %v3238, 2147516416
    %v3271 = vxor.u32 %v3239, 2147516416
    %v3272 = vxor.u32 %v3240, 2147516416
    %v3273 = vxor.u32 %v3241, 2147516416
    %v3274 = vxor.u32 %v3242, 2147516416
    %v3275 = vxor.u32 %v3243, 2147516416
    %v3276 = vxor.u32 %v3244, 2147516416
    %v3277 = vxor.u32 %v3245, 2147516416
    %v3278 = vxor.u32 %v3246, 2147516416
    %v3279 = vxor.u32 %v3247, 2147516416
    %v3280 = vxor.u32 %v3248, 2147516416
    %v3281 = vxor.u32 %v3249, 2147516416
    %v3282 = vxor.u32 %v3250, 2147516416
    %v3283 = vxor.u32 %v3251, 2147516416
    %v3284 = vxor.u32 %v3252, 2147516416
    %v3285 = vxor.u32 %v3253, 2147516416
    %v3286 = vxor.u32 %v3254, 2147516416
    %v3287 = vxor.u32 %v3255, 2147516416
    %v3288 = vxor.u32 %v3256, 2147516416
    %v3289 = vxor.u32 %v3257, 2147516416
    %v3290 = vxor.u32 %v3258, 2147516416
    %v3291 = vxor.u32 %v3259, 2147516416
    %v3292 = vxor.u32 %v3260, 2147516416
    %v3293 = vxor.u32 %v3261, 2147516416
    %v3294 = vxor.u32 %v3262, 2147516416
    %v3295 = vxor.u32 %v3263, 2147516416
    %v3296 = vxor.u32 %v3264, 2147516416
    %v3297 = vxor.u32 %v3265, 2147516416
    %v3298 = vxor.u32 %v3266, 2147516416
    %v3299 = vxor.u32 %v3267, 2147516416
    %v3301 = vmul.bf16 %v3268, 1069105081
    %v3302 = vpow.bf16.pop %v3301
    %v3304 = vmul.bf16 %v3269, 1069105081
    %v3305 = vpow.bf16.pop %v3304
    %v3307 = vmul.bf16 %v3270, 1069105081
    %v3308 = vpow.bf16.pop %v3307
    %v3310 = vmul.bf16 %v3271, 1069105081
    %v3311 = vpow.bf16.pop %v3310
    %v3313 = vmul.bf16 %v3272, 1069105081
    %v3314 = vpow.bf16.pop %v3313
    %v3316 = vmul.bf16 %v3273, 1069105081
    %v3317 = vpow.bf16.pop %v3316
    %v3319 = vmul.bf16 %v3274, 1069105081
    %v3320 = vpow.bf16.pop %v3319
    %v3322 = vmul.bf16 %v3275, 1069105081
    %v3323 = vpow.bf16.pop %v3322
    %v3325 = vmul.bf16 %v3276, 1069105081
    %v3326 = vpow.bf16.pop %v3325
    %v3328 = vmul.bf16 %v3277, 1069105081
    %v3329 = vpow.bf16.pop %v3328
    %v3331 = vmul.bf16 %v3278, 1069105081
    %v3332 = vpow.bf16.pop %v3331
    %v3334 = vmul.bf16 %v3279, 1069105081
    %v3335 = vpow.bf16.pop %v3334
    %v3337 = vmul.bf16 %v3280, 1069105081
    %v3338 = vpow.bf16.pop %v3337
    %v3340 = vmul.bf16 %v3281, 1069105081
    %v3341 = vpow.bf16.pop %v3340
    %v3343 = vmul.bf16 %v3282, 1069105081
    %v3344 = vpow.bf16.pop %v3343
    %v3346 = vmul.bf16 %v3283, 1069105081
    %v3347 = vpow.bf16.pop %v3346
    %v3349 = vmul.bf16 %v3284, 1069105081
    %v3350 = vpow.bf16.pop %v3349
    %v3352 = vmul.bf16 %v3285, 1069105081
    %v3353 = vpow.bf16.pop %v3352
    %v3355 = vmul.bf16 %v3286, 1069105081
    %v3356 = vpow.bf16.pop %v3355
    %v3358 = vmul.bf16 %v3287, 1069105081
    %v3359 = vpow.bf16.pop %v3358
    %v3361 = vmul.bf16 %v3288, 1069105081
    %v3362 = vpow.bf16.pop %v3361
    %v3364 = vmul.bf16 %v3289, 1069105081
    %v3365 = vpow.bf16.pop %v3364
    %v3367 = vmul.bf16 %v3290, 1069105081
    %v3368 = vpow.bf16.pop %v3367
    %v3370 = vmul.bf16 %v3291, 1069105081
    %v3371 = vpow.bf16.pop %v3370
    %v3373 = vmul.bf16 %v3292, 1069105081
    %v3374 = vpow.bf16.pop %v3373
    %v3376 = vmul.bf16 %v3293, 1069105081
    %v3377 = vpow.bf16.pop %v3376
    %v3379 = vmul.bf16 %v3294, 1069105081
    %v3380 = vpow.bf16.pop %v3379
    %v3382 = vmul.bf16 %v3295, 1069105081
    %v3383 = vpow.bf16.pop %v3382
    %v3385 = vmul.bf16 %v3296, 1069105081
    %v3386 = vpow.bf16.pop %v3385
    %v3388 = vmul.bf16 %v3297, 1069105081
    %v3389 = vpow.bf16.pop %v3388
    %v3391 = vmul.bf16 %v3298, 1069105081
    %v3392 = vpow.bf16.pop %v3391
    %v3394 = vmul.bf16 %v3299, 1069105081
    %v3395 = vpow.bf16.pop %v3394
    %v3396 = vadd.bf16 %v3302, 1065369472
    %v3397 = vadd.bf16 %v3305, 1065369472
    %v3398 = vadd.bf16 %v3308, 1065369472
    %v3399 = vadd.bf16 %v3311, 1065369472
    %v3400 = vadd.bf16 %v3314, 1065369472
    %v3401 = vadd.bf16 %v3317, 1065369472
    %v3402 = vadd.bf16 %v3320, 1065369472
    %v3403 = vadd.bf16 %v3323, 1065369472
    %v3404 = vadd.bf16 %v3326, 1065369472
    %v3405 = vadd.bf16 %v3329, 1065369472
    %v3406 = vadd.bf16 %v3332, 1065369472
    %v3407 = vadd.bf16 %v3335, 1065369472
    %v3408 = vadd.bf16 %v3338, 1065369472
    %v3409 = vadd.bf16 %v3341, 1065369472
    %v3410 = vadd.bf16 %v3344, 1065369472
    %v3411 = vadd.bf16 %v3347, 1065369472
    %v3412 = vadd.bf16 %v3350, 1065369472
    %v3413 = vadd.bf16 %v3353, 1065369472
    %v3414 = vadd.bf16 %v3356, 1065369472
    %v3415 = vadd.bf16 %v3359, 1065369472
    %v3416 = vadd.bf16 %v3362, 1065369472
    %v3417 = vadd.bf16 %v3365, 1065369472
    %v3418 = vadd.bf16 %v3368, 1065369472
    %v3419 = vadd.bf16 %v3371, 1065369472
    %v3420 = vadd.bf16 %v3374, 1065369472
    %v3421 = vadd.bf16 %v3377, 1065369472
    %v3422 = vadd.bf16 %v3380, 1065369472
    %v3423 = vadd.bf16 %v3383, 1065369472
    %v3424 = vadd.bf16 %v3386, 1065369472
    %v3425 = vadd.bf16 %v3389, 1065369472
    %v3426 = vadd.bf16 %v3392, 1065369472
    %v3427 = vadd.bf16 %v3395, 1065369472
    %v3428 = vrcp.bf16.pop %v3396
    %v3429 = vmul.bf16 1065369472, %v3428
    %v3430 = vrcp.bf16.pop %v3397
    %v3431 = vmul.bf16 1065369472, %v3430
    %v3432 = vrcp.bf16.pop %v3398
    %v3433 = vmul.bf16 1065369472, %v3432
    %v3434 = vrcp.bf16.pop %v3399
    %v3435 = vmul.bf16 1065369472, %v3434
    %v3436 = vrcp.bf16.pop %v3400
    %v3437 = vmul.bf16 1065369472, %v3436
    %v3438 = vrcp.bf16.pop %v3401
    %v3439 = vmul.bf16 1065369472, %v3438
    %v3440 = vrcp.bf16.pop %v3402
    %v3441 = vmul.bf16 1065369472, %v3440
    %v3442 = vrcp.bf16.pop %v3403
    %v3443 = vmul.bf16 1065369472, %v3442
    %v3444 = vrcp.bf16.pop %v3404
    %v3445 = vmul.bf16 1065369472, %v3444
    %v3446 = vrcp.bf16.pop %v3405
    %v3447 = vmul.bf16 1065369472, %v3446
    %v3448 = vrcp.bf16.pop %v3406
    %v3449 = vmul.bf16 1065369472, %v3448
    %v3450 = vrcp.bf16.pop %v3407
    %v3451 = vmul.bf16 1065369472, %v3450
    %v3452 = vrcp.bf16.pop %v3408
    %v3453 = vmul.bf16 1065369472, %v3452
    %v3454 = vrcp.bf16.pop %v3409
    %v3455 = vmul.bf16 1065369472, %v3454
    %v3456 = vrcp.bf16.pop %v3410
    %v3457 = vmul.bf16 1065369472, %v3456
    %v3458 = vrcp.bf16.pop %v3411
    %v3459 = vmul.bf16 1065369472, %v3458
    %v3460 = vrcp.bf16.pop %v3412
    %v3461 = vmul.bf16 1065369472, %v3460
    %v3462 = vrcp.bf16.pop %v3413
    %v3463 = vmul.bf16 1065369472, %v3462
    %v3464 = vrcp.bf16.pop %v3414
    %v3465 = vmul.bf16 1065369472, %v3464
    %v3466 = vrcp.bf16.pop %v3415
    %v3467 = vmul.bf16 1065369472, %v3466
    %v3468 = vrcp.bf16.pop %v3416
    %v3469 = vmul.bf16 1065369472, %v3468
    %v3470 = vrcp.bf16.pop %v3417
    %v3471 = vmul.bf16 1065369472, %v3470
    %v3472 = vrcp.bf16.pop %v3418
    %v3473 = vmul.bf16 1065369472, %v3472
    %v3474 = vrcp.bf16.pop %v3419
    %v3475 = vmul.bf16 1065369472, %v3474
    %v3476 = vrcp.bf16.pop %v3420
    %v3477 = vmul.bf16 1065369472, %v3476
    %v3478 = vrcp.bf16.pop %v3421
    %v3479 = vmul.bf16 1065369472, %v3478
    %v3480 = vrcp.bf16.pop %v3422
    %v3481 = vmul.bf16 1065369472, %v3480
    %v3482 = vrcp.bf16.pop %v3423
    %v3483 = vmul.bf16 1065369472, %v3482
    %v3484 = vrcp.bf16.pop %v3424
    %v3485 = vmul.bf16 1065369472, %v3484
    %v3486 = vrcp.bf16.pop %v3425
    %v3487 = vmul.bf16 1065369472, %v3486
    %v3488 = vrcp.bf16.pop %v3426
    %v3489 = vmul.bf16 1065369472, %v3488
    %v3490 = vrcp.bf16.pop %v3427
    %v3491 = vmul.bf16 1065369472, %v3490
    %v3492 = vmul.bf16 %v3236, %v3429
    %v3493 = vmul.bf16 %v3237, %v3431
    %v3494 = vmul.bf16 %v3238, %v3433
    %v3495 = vmul.bf16 %v3239, %v3435
    %v3496 = vmul.bf16 %v3240, %v3437
    %v3497 = vmul.bf16 %v3241, %v3439
    %v3498 = vmul.bf16 %v3242, %v3441
    %v3499 = vmul.bf16 %v3243, %v3443
    %v3500 = vmul.bf16 %v3244, %v3445
    %v3501 = vmul.bf16 %v3245, %v3447
    %v3502 = vmul.bf16 %v3246, %v3449
    %v3503 = vmul.bf16 %v3247, %v3451
    %v3504 = vmul.bf16 %v3248, %v3453
    %v3505 = vmul.bf16 %v3249, %v3455
    %v3506 = vmul.bf16 %v3250, %v3457
    %v3507 = vmul.bf16 %v3251, %v3459
    %v3508 = vmul.bf16 %v3252, %v3461
    %v3509 = vmul.bf16 %v3253, %v3463
    %v3510 = vmul.bf16 %v3254, %v3465
    %v3511 = vmul.bf16 %v3255, %v3467
    %v3512 = vmul.bf16 %v3256, %v3469
    %v3513 = vmul.bf16 %v3257, %v3471
    %v3514 = vmul.bf16 %v3258, %v3473
    %v3515 = vmul.bf16 %v3259, %v3475
    %v3516 = vmul.bf16 %v3260, %v3477
    %v3517 = vmul.bf16 %v3261, %v3479
    %v3518 = vmul.bf16 %v3262, %v3481
    %v3519 = vmul.bf16 %v3263, %v3483
    %v3520 = vmul.bf16 %v3264, %v3485
    %v3521 = vmul.bf16 %v3265, %v3487
    %v3522 = vmul.bf16 %v3266, %v3489
    %v3523 = vmul.bf16 %v3267, %v3491
    %v3524 = vld [vmem:[%s11] sm:$0xff]
    %v3525 = vld [vmem:[%s12] sm:$0xff]
    %3527 = vset.pattern.permute.xlu0 0
    %3528 = vperm.xlu0 %3527, %v3525
    %v3529 = vpop.permute.xlu0 %3528
    %v3532 = vunpack.c.l.b16 %v3524
    %v3533 = vunpack.c.h.b16 %v3524
    %v3534 = vpack.c.b16 %v3532, %v3532
    %v3535 = vpack.c.b16 %v3533, %v3533
    %3538 = vmatprep.subr.bf16.mxu0 %v3507
    %3539 = vmatpush1.bf16.xpose.msra.mxu0 %v3506
    %3540 = vmatprep.subr.bf16.mxu0 %v3505
    %3541 = vmatpush1.bf16.xpose.msra.mxu0 %v3504
    %3542 = vmatprep.subr.bf16.mxu0 %v3503
    %3543 = vmatpush1.bf16.xpose.msra.mxu0 %v3502
    %3544 = vmatprep.subr.bf16.mxu0 %v3501
    %3545 = vmatpush1.bf16.xpose.msra.mxu0 %v3500
    %3546 = vmatprep.subr.bf16.mxu0 %v3499
    %3547 = vmatpush1.bf16.xpose.msra.mxu0 %v3498
    %3548 = vmatprep.subr.bf16.mxu0 %v3497
    %3549 = vmatpush1.bf16.xpose.msra.mxu0 %v3496
    %3550 = vmatprep.subr.bf16.mxu0 %v3495
    %3551 = vmatpush1.bf16.xpose.msra.mxu0 %v3494
    %3552 = vmatprep.subr.bf16.mxu0 %v3493
    %3553 = vmatpush1.bf16.xpose.msra.mxu0 %v3492
    %3554 = vmatprep.subr.bf16.mxu0 %v3523
    %3555 = vmatpush2.bf16.xpose.msra.mxu0 %v3522
    %3556 = vmatprep.subr.bf16.mxu0 %v3521
    %3557 = vmatpush2.bf16.xpose.msra.mxu0 %v3520
    %3558 = vmatprep.subr.bf16.mxu0 %v3519
    %3559 = vmatpush2.bf16.xpose.msra.mxu0 %v3518
    %3560 = vmatprep.subr.bf16.mxu0 %v3517
    %3561 = vmatpush2.bf16.xpose.msra.mxu0 %v3516
    %3562 = vmatprep.subr.bf16.mxu0 %v3515
    %3563 = vmatpush2.bf16.xpose.msra.mxu0 %v3514
    %3564 = vmatprep.subr.bf16.mxu0 %v3513
    %3565 = vmatpush2.bf16.xpose.msra.mxu0 %v3512
    %3566 = vmatprep.subr.bf16.mxu0 %v3511
    %3567 = vmatpush2.bf16.xpose.msra.mxu0 %v3510
    %3568 = vmatprep.subr.bf16.mxu0 %v3509
    %3569 = vmatpush2.bf16.xpose.msra.mxu0 %v3508
    %3570 = vmatprep.mubr.bf16.mxu0 %v3535
    %3571 = vmatmul.mubr.bf16.gmra.mxu0 %v3534
    %v3572 = vpop.f32.mrf.mxu0
    %v3573 = vadd.f32 %v3529, %v3572
    %v3574 = vpop.f32.mrf.mxu0
    %v3575 = vadd.f32 %v3529, %v3574
    %v3576 = vpop.f32.mrf.mxu0
    %v3577 = vpop.f32.mrf.mxu0
    %3578 = vdwg.mxu0
    %3579 = vst [vmem:[#allocation8] sm:$0xff] %v3573
    %3580 = vst [vmem:[#allocation8 + $0x8] sm:$0xff] %v3575
    // Predicated region
    $region66: #{tpu_custom_call.1} parent=1 // pred_check
      _
    $region67: #{tpu_custom_call.1} parent=1 // pred_check_branch
      %3582 = sbr.rel (0) target = $region69
    $region68: #{tpu_custom_call.1} parent=1 // pred_region
      %s3584 = ssub.s32 256, 256
      %3585 = vsyncadd [#allocation4], %s3584
      %s3587 = sshll.u32 [#allocation8], 4
      %s3588 = int_to_ptr.vmem [resolvable:$true] %s3587
      %3590 = dma.vmem_to_hbm [thread:$0]  %s3588, 256, %s13, [#allocation4]
    $region69: #{tpu_custom_call.1} parent=1 // pred_fallthru
      _
    // Predicated region
    $region70: #{tpu_custom_call.1} parent=1 // pred_check
      _
    $region71: #{tpu_custom_call.1} parent=1 // pred_check_branch
      %3592 = sbr.rel (0) target = $region73
    $region72: #{tpu_custom_call.1} parent=1 // pred_region
      %3593 = dma.done [#allocation4], 256
    $region73: #{tpu_custom_call.1} parent=1 // pred_fallthru
      _
    %3594 = vsyncpa [#allocation3], 1
    %3595 = vsyncpa [#allocation6], 1
    %3596 = vsyncpa [#allocation4], 1

</llo_original>
